<compile_context>
chip_gen: v5e
topology: v5e:2x2
jax: 0.10.0
libtpu: 0.0.40
codegen_flags: <defaults>
</compile_context>

<pallas_src>
import math
import functools

import jax
import jax.numpy as jnp
from jax import lax
from jax.experimental import pallas as pl
from jax.experimental.pallas import tpu as pltpu

_NEG = -1e30          # large finite negative instead of -inf (avoids NaN)
_LN_EPS = 1e-5


# ---------------------------------------------------------------------------
# In-kernel building blocks
# ---------------------------------------------------------------------------
def _layernorm(x, g, b, eps=_LN_EPS):
    """x: (N, E); g, b: (1, E).  Uses E[x^2]-E[x]^2 so the two lane
    reductions issue independently."""
    mu = jnp.mean(x, axis=-1, keepdims=True)
    ms = jnp.mean(x * x, axis=-1, keepdims=True)
    var = ms - mu * mu
    return (x - mu) * lax.rsqrt(var + eps) * g + b


def _mha(q, k, v, bias_ref, B, Lq, Lk, nhead, Dh):
    """Scaled-dot-product attention on already-projected Q/K/V.

    q: (B*Lq, H*Dh), k/v: (B*Lk, H*Dh)  (heads concatenated along lanes)
    bias_ref: additive bias ref of shape (B, Lq, Lk) or (B, 1, Lk)
    The 1/sqrt(Dh) scale is already folded into the Q projection weights.
    Returns the concatenated per-head context, (B*Lq, H*Dh).
    """
    ctx_rows = []
    for b in range(B):                                  # B is tiny & static
        qb = q[b * Lq:(b + 1) * Lq]
        kb = k[b * Lk:(b + 1) * Lk]
        vb = v[b * Lk:(b + 1) * Lk]
        bias_b = bias_ref[b]                            # (Lq, Lk) or (1, Lk)
        heads = []
        for h in range(nhead):
            qh = qb[:, h * Dh:(h + 1) * Dh]
            kh = kb[:, h * Dh:(h + 1) * Dh]
            vh = vb[:, h * Dh:(h + 1) * Dh]
            s = jnp.einsum("qd,kd->qk", qh, kh,
                           preferred_element_type=jnp.float32) + bias_b
            m = jnp.max(s, axis=-1, keepdims=True)
            p = jnp.exp(s - m)
            inv = pl.reciprocal(jnp.sum(p, axis=-1, keepdims=True))  # exact
            heads.append(jnp.dot(p * inv, vh,
                                 preferred_element_type=jnp.float32))
        ctx_rows.append(jnp.concatenate(heads, axis=-1))             # (Lq, E)
    return jnp.concatenate(ctx_rows, axis=0)                         # (B*Lq, E)


# ---------------------------------------------------------------------------
# Fused transformer kernel: grid = (num_enc_layers + num_dec_layers,)
# ---------------------------------------------------------------------------
def _transformer_kernel(src_ref, tgt_ref, enc_bias_ref, self_bias_ref,
                        cross_bias_ref, norms_ref, gen_ref,
                        enc_wA_ref, enc_w2_ref, enc_small_ref,
                        dec_wA_ref, dec_w2_ref, dec_small_ref,
                        out_ref, mem_scr, x_scr,
                        *, n_enc, n_dec, B, S, T, nhead, dff):
    E = src_ref.shape[-1]
    Dh = E // nhead
    l = pl.program_id(0)

    @pl.when(l == 0)
    def _():
        mem_scr[...] = src_ref[...]                     # (B*S, E)

    # ------------------------- encoder layer ------------------------------
    @pl.when(l < n_enc)
    def _():
        wA = enc_wA_ref[...]                            # (E, 3E + E + dff)
        sm = enc_small_ref[...]                         # (8, SW)
        wqkv = wA[:, :3 * E]
        wo = wA[:, 3 * E:4 * E]
        w1 = wA[:, 4 * E:4 * E + dff]
        w2 = enc_w2_ref[...]                            # (dff, E)
        bqkv = sm[0:1, :3 * E]
        bo = sm[1:2, :E]
        b1 = sm[2:3, :dff]
        b2 = sm[3:4, :E]

        x = mem_scr[...]                                # (B*S, E)
        qkv = jnp.dot(x, wqkv, preferred_element_type=jnp.float32) + bqkv
        a = _mha(qkv[:, :E], qkv[:, E:2 * E], qkv[:, 2 * E:3 * E],
                 enc_bias_ref, B, S, S, nhead, Dh)
        a = jnp.dot(a, wo, preferred_element_type=jnp.float32) + bo
        x = _layernorm(x + a, sm[4:5, :E], sm[5:6, :E])

        h = jnp.maximum(jnp.dot(x, w1, preferred_element_type=jnp.float32) + b1, 0.0)
        f = jnp.dot(h, w2, preferred_element_type=jnp.float32) + b2
        x = _layernorm(x + f, sm[6:7, :E], sm[7:8, :E])
        mem_scr[...] = x

    # --------- encoder -> decoder hand-off (final enc norm, init x) -------
    @pl.when(l == n_enc)
    def _():
        mem_scr[...] = _layernorm(mem_scr[...], norms_ref[0:1, :], norms_ref[1:2, :])
        x_scr[...] = tgt_ref[...]                       # (B*T, E)

    # ------------------------- decoder layer ------------------------------
    @pl.when(l >= n_enc)
    def _():
        wA = dec_wA_ref[...]                            # (E, 8E + dff)
        sm = dec_small_ref[...]                         # (13, SW)
        o = 0
        s_wqkv = wA[:, o:o + 3 * E]; o += 3 * E
        s_wo = wA[:, o:o + E];       o += E
        c_wq = wA[:, o:o + E];       o += E
        c_wkv = wA[:, o:o + 2 * E];  o += 2 * E
        c_wo = wA[:, o:o + E];       o += E
        w1 = wA[:, o:o + dff]
        w2 = dec_w2_ref[...]

        s_bqkv = sm[0:1, :3 * E]
        s_bo = sm[1:2, :E]
        c_bq = sm[2:3, :E]
        c_bkv = sm[3:4, :2 * E]
        c_bo = sm[4:5, :E]
        b1 = sm[5:6, :dff]
        b2 = sm[6:7, :E]

        x = x_scr[...]                                  # (B*T, E)
        mem = mem_scr[...]                              # (B*S, E)

        # self-attention (causal + tgt key-padding bias)
        qkv = jnp.dot(x, s_wqkv, preferred_element_type=jnp.float32) + s_bqkv
        a = _mha(qkv[:, :E], qkv[:, E:2 * E], qkv[:, 2 * E:3 * E],
                 self_bias_ref, B, T, T, nhead, Dh)
        a = jnp.dot(a, s_wo, preferred_element_type=jnp.float32) + s_bo
        x = _layernorm(x + a, sm[7:8, :E], sm[8:9, :E])

        # cross-attention over the encoder memory
        q = jnp.dot(x, c_wq, preferred_element_type=jnp.float32) + c_bq
        kv = jnp.dot(mem, c_wkv, preferred_element_type=jnp.float32) + c_bkv
        c = _mha(q, kv[:, :E], kv[:, E:2 * E],
                 cross_bias_ref, B, T, S, nhead, Dh)
        c = jnp.dot(c, c_wo, preferred_element_type=jnp.float32) + c_bo
        x = _layernorm(x + c, sm[9:10, :E], sm[10:11, :E])

        # FFN
        h = jnp.maximum(jnp.dot(x, w1, preferred_element_type=jnp.float32) + b1, 0.0)
        f = jnp.dot(h, w2, preferred_element_type=jnp.float32) + b2
        x = _layernorm(x + f, sm[11:12, :E], sm[12:13, :E])
        x_scr[...] = x

        # final decoder norm + lane-dense generator at the last layer
        @pl.when(l == n_enc + n_dec - 1)
        def _():
            y = _layernorm(x, norms_ref[2:3, :], norms_ref[3:4, :])
            gen = gen_ref[...]                          # (E+1, Vpad)
            out_ref[...] = (jnp.dot(y, gen[:E, :],
                                    preferred_element_type=jnp.float32)
                            + gen[E:E + 1, :])


# ---------------------------------------------------------------------------
# pallas_call wrapper
# ---------------------------------------------------------------------------
def _run_fused_transformer(params, src_e2, tgt_e2, enc_bias, self_bias,
                           cross_bias, *, B, S, T, nhead):
    E = src_e2.shape[1]
    Vp = params["gen"].shape[1]
    n_enc = params["enc_wA"].shape[0]
    n_dec = params["dec_wA"].shape[0]
    dff = params["enc_w2"].shape[1]
    n_total = n_enc + n_dec

    def const_spec(a):
        nd = a.ndim
        return pl.BlockSpec(a.shape, lambda l, _n=nd: (0,) * _n)

    def enc_spec(a):
        nd = a.ndim
        return pl.BlockSpec(
            (None,) + a.shape[1:],
            lambda l, _n=nd: (jnp.minimum(l, n_enc - 1),) + (0,) * (_n - 1))

    def dec_spec(a):
        nd = a.ndim
        return pl.BlockSpec(
            (None,) + a.shape[1:],
            lambda l, _n=nd: (jnp.maximum(l - n_enc, 0),) + (0,) * (_n - 1))

    inputs = [src_e2, tgt_e2, enc_bias, self_bias, cross_bias,
              params["norms"], params["gen"],
              params["enc_wA"], params["enc_w2"], params["enc_small"],
              params["dec_wA"], params["dec_w2"], params["dec_small"]]
    specs = [const_spec(src_e2), const_spec(tgt_e2), const_spec(enc_bias),
             const_spec(self_bias), const_spec(cross_bias),
             const_spec(params["norms"]), const_spec(params["gen"]),
             enc_spec(params["enc_wA"]), enc_spec(params["enc_w2"]),
             enc_spec(params["enc_small"]),
             dec_spec(params["dec_wA"]), dec_spec(params["dec_w2"]),
             dec_spec(params["dec_small"])]

    kernel = functools.partial(_transformer_kernel, n_enc=n_enc, n_dec=n_dec,
                               B=B, S=S, T=T, nhead=nhead, dff=dff)

    return pl.pallas_call(
        kernel,
        out_shape=jax.ShapeDtypeStruct((B * T, Vp), jnp.float32),
        grid=(n_total,),
        in_specs=specs,
        out_specs=pl.BlockSpec((B * T, Vp), lambda l: (0, 0)),
        scratch_shapes=[pltpu.VMEM((B * S, E), jnp.float32),   # encoder memory
                        pltpu.VMEM((B * T, E), jnp.float32)],  # decoder activation
        compiler_params=pltpu.CompilerParams(
            dimension_semantics=("arbitrary",)),
    )(*inputs)


# ---------------------------------------------------------------------------
# Full forward pass (plain-JAX glue around the single fused kernel)
# ---------------------------------------------------------------------------
def _to_additive(mask):
    """PyTorch mask -> additive float bias (bool True = disallow)."""
    if mask.dtype == jnp.bool_:
        return jnp.where(mask, _NEG, 0.0).astype(jnp.float32)
    return jnp.maximum(mask.astype(jnp.float32), _NEG)   # clamp any -inf


def seq2seq_forward(params, src, trg, src_mask, tgt_mask,
                    src_padding_mask, tgt_padding_mask, memory_key_padding_mask,
                    *, nhead, pos_emb, tgt_vocab):
    E = params["src_emb"].shape[1]
    S, B = src.shape
    T = trg.shape[0]
    emb_scale = math.sqrt(E)

    # TokenEmbedding * sqrt(E) + PositionalEncoding (dropout == identity, eval).
    # TODO(synk): embedding gather stays in plain JAX (no useful tiny-Pallas gather).
    src_e = params["src_emb"][src.T] * emb_scale + pos_emb[None, :S, :]   # (B,S,E)
    tgt_e = params["tgt_emb"][trg.T] * emb_scale + pos_emb[None, :T, :]   # (B,T,E)

    # Combined additive attention biases, once per batch row (tiny arrays).
    enc_bias = (_to_additive(src_mask)[None, :, :]
                + _to_additive(src_padding_mask)[:, None, :])             # (B,S,S)
    self_bias = (_to_additive(tgt_mask)[None, :, :]
                 + _to_additive(tgt_padding_mask)[:, None, :])            # (B,T,T)
    cross_bias = _to_additive(memory_key_padding_mask)[:, None, :]        # (B,1,S)

    logits_pad = _run_fused_transformer(
        params, src_e.reshape(B * S, E), tgt_e.reshape(B * T, E),
        enc_bias, self_bias, cross_bias, B=B, S=S, T=T, nhead=nhead)

    logits = logits_pad.reshape(B, T, -1)[:, :, :tgt_vocab]
    return jnp.transpose(logits, (1, 0, 2))       # (T, B, V), batch_first=False


# ---------------------------------------------------------------------------
# Deterministic synthetic parameters, packed for the fused kernel
# ---------------------------------------------------------------------------
def init_params(key, num_enc, num_dec, emb, nhead, src_vocab, tgt_vocab, dff):
    E = emb
    Dh = E // nhead
    scale = 1.0 / math.sqrt(Dh)                   # folded into Q projections
    SW = max(3 * E, dff, E)
    keys = iter(jax.random.split(key, 4096))

    def w(shape, s=0.02):
        return (s * jax.random.normal(next(keys), shape)).astype(jnp.float32)

    ones = jnp.ones((E,), jnp.float32)
    zeros = jnp.zeros((E,), jnp.float32)

    def pack_rows(rows):
        out = jnp.zeros((len(rows), SW), jnp.float32)
        for i, r in enumerate(rows):
            out = out.at[i, :r.shape[0]].set(r)
        return out

    def attn_params():
        wq, wk, wv, wo = (w((E, E)) for _ in range(4))
        bq, bk, bv, bo = (w((E,)) for _ in range(4))
        return wq * scale, wk, wv, wo, bq * scale, bk, bv, bo

    enc_wA, enc_w2, enc_small = [], [], []
    for _ in range(num_enc):
        wq, wk, wv, wo, bq, bk, bv, bo = attn_params()
        w1, b1 = w((E, dff)), w((dff,))
        w2, b2 = w((dff, E)), w((E,))
        enc_wA.append(jnp.concatenate(
            [jnp.concatenate([wq, wk, wv], axis=1), wo, w1], axis=1))
        enc_w2.append(w2)
        enc_small.append(pack_rows([
            jnp.concatenate([bq, bk, bv]), bo, b1, b2,
            ones, zeros,            # ln1 gamma/beta
            ones, zeros]))          # ln2 gamma/beta

    dec_wA, dec_w2, dec_small = [], [], []
    for _ in range(num_dec):
        swq, swk, swv, swo, sbq, sbk, sbv, sbo = attn_params()
        cwq, cwk, cwv, cwo, cbq, cbk, cbv, cbo = attn_params()
        w1, b1 = w((E, dff)), w((dff,))
        w2, b2 = w((dff, E)), w((E,))
        dec_wA.append(jnp.concatenate(
            [jnp.concatenate([swq, swk, swv], axis=1), swo,
             cwq, jnp.concatenate([cwk, cwv], axis=1), cwo, w1], axis=1))
        dec_w2.append(w2)
        dec_small.append(pack_rows([
            jnp.concatenate([sbq, sbk, sbv]), sbo,
            cbq, jnp.concatenate([cbk, cbv]), cbo,
            b1, b2,
            ones, zeros,            # ln1
            ones, zeros,            # ln2
            ones, zeros]))          # ln3

    # Generator padded to a lane-dense (multiple of 128) vocab; bias is row E.
    vpad = ((tgt_vocab + 127) // 128) * 128
    gen = jnp.zeros((E + 1, vpad), jnp.float32)
    gen = gen.at[:E, :tgt_vocab].set(w((E, tgt_vocab)))
    gen = gen.at[E, :tgt_vocab].set(w((tgt_vocab,)))

    norms = jnp.stack([ones, zeros, ones, zeros], axis=0)   # enc g/b, dec g/b

    return dict(
        src_emb=w((src_vocab, E), s=1.0),
        tgt_emb=w((tgt_vocab, E), s=1.0),
        enc_wA=jnp.stack(enc_wA), enc_w2=jnp.stack(enc_w2),
        enc_small=jnp.stack(enc_small),
        dec_wA=jnp.stack(dec_wA), dec_w2=jnp.stack(dec_w2),
        dec_small=jnp.stack(dec_small),
        norms=norms, gen=gen)


def make_pos_embedding(emb_size, maxlen=64):
    den = jnp.exp(-jnp.arange(0, emb_size, 2, dtype=jnp.float32)
                  * math.log(10000.0) / emb_size)
    pos = jnp.arange(0, maxlen, dtype=jnp.float32).reshape(maxlen, 1)
    pe = jnp.zeros((maxlen, emb_size), jnp.float32)
    pe = pe.at[:, 0::2].set(jnp.sin(pos * den))
    pe = pe.at[:, 1::2].set(jnp.cos(pos * den))
    return pe                       # (maxlen, E)


# ---------------------------------------------------------------------------
if __name__ == "__main__":
    num_encoder_layers = 2
    num_decoder_layers = 2
    emb_size = 32
    nhead = 4
    src_vocab_size = 50
    tgt_vocab_size = 60
    dim_feedforward = 64
    S, T, B = 8, 8, 2

    key = jax.random.PRNGKey(0)
    pkey, skey, tkey = jax.random.split(key, 3)

    params = init_params(pkey, num_encoder_layers, num_decoder_layers,
                         emb_size, nhead, src_vocab_size, tgt_vocab_size,
                         dim_feedforward)
    pos_emb = make_pos_embedding(emb_size, maxlen=64)

    src = jax.random.randint(skey, (S, B), 0, src_vocab_size, dtype=jnp.int32)
    trg = jax.random.randint(tkey, (T, B), 0, tgt_vocab_size, dtype=jnp.int32)

    src_mask = jnp.zeros((S, S), jnp.float32)
    tgt_mask = jnp.where(jnp.triu(jnp.ones((T, T), dtype=bool), k=1),
                         -jnp.inf, 0.0).astype(jnp.float32)          # causal
    src_padding_mask = jnp.zeros((B, S), dtype=bool).at[1, -1].set(True)
    tgt_padding_mask = jnp.zeros((B, T), dtype=bool)
    memory_key_padding_mask = src_padding_mask

    fwd = jax.jit(functools.partial(seq2seq_forward, nhead=nhead,
                                    pos_emb=pos_emb, tgt_vocab=tgt_vocab_size))

    logits = fwd(params, src, trg, src_mask, tgt_mask,
                 src_padding_mask, tgt_padding_mask, memory_key_padding_mask)
    logits = jax.block_until_ready(logits)

    assert logits.shape == (T, B, tgt_vocab_size), logits.shape
    assert bool(jnp.all(jnp.isfinite(logits)))
    print("KERNEL_OK")
</pallas_src>

<mosaic_0001>
module attributes {stable_mosaic.version = 11 : i64} {
  func.func @_transformer_kernel(%arg0: i32, %arg1: memref<16x32xf32, #tpu.memory_space<vmem>>, %arg2: memref<16x32xf32, #tpu.memory_space<vmem>>, %arg3: memref<2x8x8xf32, #tpu.memory_space<vmem>>, %arg4: memref<2x8x8xf32, #tpu.memory_space<vmem>>, %arg5: memref<2x1x8xf32, #tpu.memory_space<vmem>>, %arg6: memref<4x32xf32, #tpu.memory_space<vmem>>, %arg7: memref<33x128xf32, #tpu.memory_space<vmem>>, %arg8: memref<1x32x192xf32, #tpu.memory_space<vmem>>, %arg9: memref<1x64x32xf32, #tpu.memory_space<vmem>>, %arg10: memref<1x8x96xf32, #tpu.memory_space<vmem>>, %arg11: memref<1x32x320xf32, #tpu.memory_space<vmem>>, %arg12: memref<1x64x32xf32, #tpu.memory_space<vmem>>, %arg13: memref<1x13x96xf32, #tpu.memory_space<vmem>>, %arg14: memref<16x128xf32, #tpu.memory_space<vmem>>, %arg15: memref<16x32xf32, #tpu.memory_space<vmem>>, %arg16: memref<16x32xf32, #tpu.memory_space<vmem>>) attributes {dimension_semantics = [#tpu.dimension_semantics<arbitrary>], iteration_bounds = array<i64: 4>, scalar_prefetch = 0 : i64, scratch_operands = 2 : i64, tpu.core_type = #tpu.core_type<tc>, window_params = [{pipeline_mode = #tpu.pipeline_mode<synchronous>, transform_indices = @transform_0, window_bounds = array<i64: 16, 32>}, {pipeline_mode = #tpu.pipeline_mode<synchronous>, transform_indices = @transform_1, window_bounds = array<i64: 16, 32>}, {pipeline_mode = #tpu.pipeline_mode<synchronous>, transform_indices = @transform_2, window_bounds = array<i64: 2, 8, 8>}, {pipeline_mode = #tpu.pipeline_mode<synchronous>, transform_indices = @transform_3, window_bounds = array<i64: 2, 8, 8>}, {pipeline_mode = #tpu.pipeline_mode<synchronous>, transform_indices = @transform_4, window_bounds = array<i64: 2, 1, 8>}, {pipeline_mode = #tpu.pipeline_mode<synchronous>, transform_indices = @transform_5, window_bounds = array<i64: 4, 32>}, {pipeline_mode = #tpu.pipeline_mode<synchronous>, transform_indices = @transform_6, window_bounds = array<i64: 33, 128>}, {transform_indices = @transform_7, window_bounds = array<i64: 1, 32, 192>}, {transform_indices = @transform_8, window_bounds = array<i64: 1, 64, 32>}, {transform_indices = @transform_9, window_bounds = array<i64: 1, 8, 96>}, {transform_indices = @transform_10, window_bounds = array<i64: 1, 32, 320>}, {transform_indices = @transform_11, window_bounds = array<i64: 1, 64, 32>}, {transform_indices = @transform_12, window_bounds = array<i64: 1, 13, 96>}, {pipeline_mode = #tpu.pipeline_mode<synchronous>, transform_indices = @transform_13, window_bounds = array<i64: 16, 128>}]} {
    %c0_i32 = arith.constant 0 : i32
    %0 = arith.cmpi eq, %arg0, %c0_i32 : i32
    %1 = arith.extui %0 : i1 to i32
    %c0_i32_0 = arith.constant 0 : i32
    %2 = arith.cmpi ne, %1, %c0_i32_0 : i32
    scf.if %2 {
      %c0 = arith.constant 0 : index
      %c0_6 = arith.constant 0 : index
      %12 = vector.load %arg1[%c0, %c0_6] : memref<16x32xf32, #tpu.memory_space<vmem>>, vector<16x32xf32>
      %c0_7 = arith.constant 0 : index
      %c0_8 = arith.constant 0 : index
      %13 = vector.load %arg15[%c0_7, %c0_8] : memref<16x32xf32, #tpu.memory_space<vmem>>, vector<16x32xf32>
      tpu.vector_store %arg15[%c0_7, %c0_8], %12 {strides = array<i32>} : memref<16x32xf32, #tpu.memory_space<vmem>>, vector<16x32xf32>,
    } else {
    }
    %c2_i32 = arith.constant 2 : i32
    %3 = arith.cmpi slt, %arg0, %c2_i32 : i32
    %4 = arith.extui %3 : i1 to i32
    %c0_i32_1 = arith.constant 0 : i32
    %5 = arith.cmpi ne, %4, %c0_i32_1 : i32
    scf.if %5 {
      %c0 = arith.constant 0 : index
      %c0_6 = arith.constant 0 : index
      %c0_7 = arith.constant 0 : index
      %12 = vector.load %arg8[%c0, %c0_6, %c0_7] : memref<1x32x192xf32, #tpu.memory_space<vmem>>, vector<1x32x192xf32>
      %13 = vector.shape_cast %12 : vector<1x32x192xf32> to vector<32x192xf32>
      %c0_8 = arith.constant 0 : index
      %c0_9 = arith.constant 0 : index
      %c0_10 = arith.constant 0 : index
      %14 = vector.load %arg10[%c0_8, %c0_9, %c0_10] : memref<1x8x96xf32, #tpu.memory_space<vmem>>, vector<1x8x96xf32>
      %15 = vector.shape_cast %14 : vector<1x8x96xf32> to vector<8x96xf32>
      %16 = vector.extract_strided_slice %13 {offsets = [0, 0], sizes = [32, 96], strides = [1, 1]} : vector<32x192xf32> to vector<32x96xf32>
      %17 = vector.extract_strided_slice %13 {offsets = [0, 96], sizes = [32, 32], strides = [1, 1]} : vector<32x192xf32> to vector<32x32xf32>
      %18 = vector.extract_strided_slice %13 {offsets = [0, 128], sizes = [32, 64], strides = [1, 1]} : vector<32x192xf32> to vector<32x64xf32>
      %c0_11 = arith.constant 0 : index
      %c0_12 = arith.constant 0 : index
      %c0_13 = arith.constant 0 : index
      %19 = vector.load %arg9[%c0_11, %c0_12, %c0_13] : memref<1x64x32xf32, #tpu.memory_space<vmem>>, vector<1x64x32xf32>
      %20 = vector.shape_cast %19 : vector<1x64x32xf32> to vector<64x32xf32>
      %21 = vector.extract_strided_slice %15 {offsets = [0, 0], sizes = [1, 96], strides = [1, 1]} : vector<8x96xf32> to vector<1x96xf32>
      %22 = vector.extract_strided_slice %15 {offsets = [1, 0], sizes = [1, 32], strides = [1, 1]} : vector<8x96xf32> to vector<1x32xf32>
      %23 = vector.extract_strided_slice %15 {offsets = [2, 0], sizes = [1, 64], strides = [1, 1]} : vector<8x96xf32> to vector<1x64xf32>
      %24 = vector.extract_strided_slice %15 {offsets = [3, 0], sizes = [1, 32], strides = [1, 1]} : vector<8x96xf32> to vector<1x32xf32>
      %c0_14 = arith.constant 0 : index
      %c0_15 = arith.constant 0 : index
      %25 = vector.load %arg15[%c0_14, %c0_15] : memref<16x32xf32, #tpu.memory_space<vmem>>, vector<16x32xf32>
      %cst = arith.constant dense<0.000000e+00> : vector<16x96xf32>
      %26 = tpu.matmul %25, %16, %cst {dimension_numbers = #tpu.dot_dimension_numbers<[1], [0], [0], [1], [0, 0, 1, 1], [], []>} : vector<16x32xf32>, vector<32x96xf32>, vector<16x96xf32> -> vector<16x96xf32>
      %27 = vector.broadcast %21 : vector<1x96xf32> to vector<16x96xf32>
      %28 = arith.addf %26, %27 : vector<16x96xf32>
      %29 = vector.extract_strided_slice %28 {offsets = [0, 0], sizes = [16, 32], strides = [1, 1]} : vector<16x96xf32> to vector<16x32xf32>
      %30 = vector.extract_strided_slice %28 {offsets = [0, 32], sizes = [16, 32], strides = [1, 1]} : vector<16x96xf32> to vector<16x32xf32>
      %31 = vector.extract_strided_slice %28 {offsets = [0, 64], sizes = [16, 32], strides = [1, 1]} : vector<16x96xf32> to vector<16x32xf32>
      %32 = vector.extract_strided_slice %29 {offsets = [0, 0], sizes = [8, 32], strides = [1, 1]} : vector<16x32xf32> to vector<8x32xf32>
      %33 = vector.extract_strided_slice %30 {offsets = [0, 0], sizes = [8, 32], strides = [1, 1]} : vector<16x32xf32> to vector<8x32xf32>
      %34 = vector.extract_strided_slice %31 {offsets = [0, 0], sizes = [8, 32], strides = [1, 1]} : vector<16x32xf32> to vector<8x32xf32>
      %c0_16 = arith.constant 0 : index
      %c0_17 = arith.constant 0 : index
      %c0_18 = arith.constant 0 : index
      %35 = vector.load %arg3[%c0_16, %c0_17, %c0_18] : memref<2x8x8xf32, #tpu.memory_space<vmem>>, vector<1x8x8xf32>
      %36 = vector.shape_cast %35 : vector<1x8x8xf32> to vector<8x8xf32>
      %37 = vector.extract_strided_slice %32 {offsets = [0, 0], sizes = [8, 8], strides = [1, 1]} : vector<8x32xf32> to vector<8x8xf32>
      %38 = vector.extract_strided_slice %33 {offsets = [0, 0], sizes = [8, 8], strides = [1, 1]} : vector<8x32xf32> to vector<8x8xf32>
      %39 = vector.extract_strided_slice %34 {offsets = [0, 0], sizes = [8, 8], strides = [1, 1]} : vector<8x32xf32> to vector<8x8xf32>
      "tpu.trace_start"() <{level = 10 : i32, message = "qd,kd->qk"}> : () -> ()
      %cst_19 = arith.constant dense<0.000000e+00> : vector<8x8xf32>
      %40 = tpu.matmul %37, %38, %cst_19 {dimension_numbers = #tpu.dot_dimension_numbers<[1], [1], [0], [0], [0, 0, 1, 0], [], []>} : vector<8x8xf32>, vector<8x8xf32>, vector<8x8xf32> -> vector<8x8xf32>
      "tpu.trace_stop"() : () -> ()
      %41 = arith.addf %40, %36 : vector<8x8xf32>
      %cst_20 = arith.constant dense<0xFF800000> : vector<8xf32>
      %42 = vector.multi_reduction <maximumf>, %41, %cst_20 [1] : vector<8x8xf32> to vector<8xf32>
      %43 = vector.shape_cast %42 : vector<8xf32> to vector<8x1xf32>
      %44 = vector.broadcast %43 : vector<8x1xf32> to vector<8x8xf32>
      %45 = arith.subf %41, %44 : vector<8x8xf32>
      %46 = math.exp %45 : vector<8x8xf32>
      %cst_21 = arith.constant dense<0.000000e+00> : vector<8xf32>
      %47 = vector.multi_reduction <add>, %46, %cst_21 [1] : vector<8x8xf32> to vector<8xf32>
      %48 = vector.shape_cast %47 : vector<8xf32> to vector<8x1xf32>
      %49 = tpu.reciprocal %48 : vector<8x1xf32> -> vector<8x1xf32>
      %50 = vector.broadcast %49 : vector<8x1xf32> to vector<8x8xf32>
      %51 = arith.mulf %46, %50 : vector<8x8xf32>
      %cst_22 = arith.constant dense<0.000000e+00> : vector<8x8xf32>
      %52 = tpu.matmul %51, %39, %cst_22 {dimension_numbers = #tpu.dot_dimension_numbers<[1], [0], [0], [1], [0, 0, 1, 1], [], []>} : vector<8x8xf32>, vector<8x8xf32>, vector<8x8xf32> -> vector<8x8xf32>
      %53 = vector.extract_strided_slice %32 {offsets = [0, 8], sizes = [8, 8], strides = [1, 1]} : vector<8x32xf32> to vector<8x8xf32>
      %54 = vector.extract_strided_slice %33 {offsets = [0, 8], sizes = [8, 8], strides = [1, 1]} : vector<8x32xf32> to vector<8x8xf32>
      %55 = vector.extract_strided_slice %34 {offsets = [0, 8], sizes = [8, 8], strides = [1, 1]} : vector<8x32xf32> to vector<8x8xf32>
      "tpu.trace_start"() <{level = 10 : i32, message = "qd,kd->qk"}> : () -> ()
      %cst_23 = arith.constant dense<0.000000e+00> : vector<8x8xf32>
      %56 = tpu.matmul %53, %54, %cst_23 {dimension_numbers = #tpu.dot_dimension_numbers<[1], [1], [0], [0], [0, 0, 1, 0], [], []>} : vector<8x8xf32>, vector<8x8xf32>, vector<8x8xf32> -> vector<8x8xf32>
      "tpu.trace_stop"() : () -> ()
      %57 = arith.addf %56, %36 : vector<8x8xf32>
      %cst_24 = arith.constant dense<0xFF800000> : vector<8xf32>
      %58 = vector.multi_reduction <maximumf>, %57, %cst_24 [1] : vector<8x8xf32> to vector<8xf32>
      %59 = vector.shape_cast %58 : vector<8xf32> to vector<8x1xf32>
      %60 = vector.broadcast %59 : vector<8x1xf32> to vector<8x8xf32>
      %61 = arith.subf %57, %60 : vector<8x8xf32>
      %62 = math.exp %61 : vector<8x8xf32>
      %cst_25 = arith.constant dense<0.000000e+00> : vector<8xf32>
      %63 = vector.multi_reduction <add>, %62, %cst_25 [1] : vector<8x8xf32> to vector<8xf32>
      %64 = vector.shape_cast %63 : vector<8xf32> to vector<8x1xf32>
      %65 = tpu.reciprocal %64 : vector<8x1xf32> -> vector<8x1xf32>
      %66 = vector.broadcast %65 : vector<8x1xf32> to vector<8x8xf32>
      %67 = arith.mulf %62, %66 : vector<8x8xf32>
      %cst_26 = arith.constant dense<0.000000e+00> : vector<8x8xf32>
      %68 = tpu.matmul %67, %55, %cst_26 {dimension_numbers = #tpu.dot_dimension_numbers<[1], [0], [0], [1], [0, 0, 1, 1], [], []>} : vector<8x8xf32>, vector<8x8xf32>, vector<8x8xf32> -> vector<8x8xf32>
      %69 = vector.extract_strided_slice %32 {offsets = [0, 16], sizes = [8, 8], strides = [1, 1]} : vector<8x32xf32> to vector<8x8xf32>
      %70 = vector.extract_strided_slice %33 {offsets = [0, 16], sizes = [8, 8], strides = [1, 1]} : vector<8x32xf32> to vector<8x8xf32>
      %71 = vector.extract_strided_slice %34 {offsets = [0, 16], sizes = [8, 8], strides = [1, 1]} : vector<8x32xf32> to vector<8x8xf32>
      "tpu.trace_start"() <{level = 10 : i32, message = "qd,kd->qk"}> : () -> ()
      %cst_27 = arith.constant dense<0.000000e+00> : vector<8x8xf32>
      %72 = tpu.matmul %69, %70, %cst_27 {dimension_numbers = #tpu.dot_dimension_numbers<[1], [1], [0], [0], [0, 0, 1, 0], [], []>} : vector<8x8xf32>, vector<8x8xf32>, vector<8x8xf32> -> vector<8x8xf32>
      "tpu.trace_stop"() : () -> ()
      %73 = arith.addf %72, %36 : vector<8x8xf32>
      %cst_28 = arith.constant dense<0xFF800000> : vector<8xf32>
      %74 = vector.multi_reduction <maximumf>, %73, %cst_28 [1] : vector<8x8xf32> to vector<8xf32>
      %75 = vector.shape_cast %74 : vector<8xf32> to vector<8x1xf32>
      %76 = vector.broadcast %75 : vector<8x1xf32> to vector<8x8xf32>
      %77 = arith.subf %73, %76 : vector<8x8xf32>
      %78 = math.exp %77 : vector<8x8xf32>
      %cst_29 = arith.constant dense<0.000000e+00> : vector<8xf32>
      %79 = vector.multi_reduction <add>, %78, %cst_29 [1] : vector<8x8xf32> to vector<8xf32>
      %80 = vector.shape_cast %79 : vector<8xf32> to vector<8x1xf32>
      %81 = tpu.reciprocal %80 : vector<8x1xf32> -> vector<8x1xf32>
      %82 = vector.broadcast %81 : vector<8x1xf32> to vector<8x8xf32>
      %83 = arith.mulf %78, %82 : vector<8x8xf32>
      %cst_30 = arith.constant dense<0.000000e+00> : vector<8x8xf32>
      %84 = tpu.matmul %83, %71, %cst_30 {dimension_numbers = #tpu.dot_dimension_numbers<[1], [0], [0], [1], [0, 0, 1, 1], [], []>} : vector<8x8xf32>, vector<8x8xf32>, vector<8x8xf32> -> vector<8x8xf32>
      %85 = vector.extract_strided_slice %32 {offsets = [0, 24], sizes = [8, 8], strides = [1, 1]} : vector<8x32xf32> to vector<8x8xf32>
      %86 = vector.extract_strided_slice %33 {offsets = [0, 24], sizes = [8, 8], strides = [1, 1]} : vector<8x32xf32> to vector<8x8xf32>
      %87 = vector.extract_strided_slice %34 {offsets = [0, 24], sizes = [8, 8], strides = [1, 1]} : vector<8x32xf32> to vector<8x8xf32>
      "tpu.trace_start"() <{level = 10 : i32, message = "qd,kd->qk"}> : () -> ()
      %cst_31 = arith.constant dense<0.000000e+00> : vector<8x8xf32>
      %88 = tpu.matmul %85, %86, %cst_31 {dimension_numbers = #tpu.dot_dimension_numbers<[1], [1], [0], [0], [0, 0, 1, 0], [], []>} : vector<8x8xf32>, vector<8x8xf32>, vector<8x8xf32> -> vector<8x8xf32>
      "tpu.trace_stop"() : () -> ()
      %89 = arith.addf %88, %36 : vector<8x8xf32>
      %cst_32 = arith.constant dense<0xFF800000> : vector<8xf32>
      %90 = vector.multi_reduction <maximumf>, %89, %cst_32 [1] : vector<8x8xf32> to vector<8xf32>
      %91 = vector.shape_cast %90 : vector<8xf32> to vector<8x1xf32>
      %92 = vector.broadcast %91 : vector<8x1xf32> to vector<8x8xf32>
      %93 = arith.subf %89, %92 : vector<8x8xf32>
      %94 = math.exp %93 : vector<8x8xf32>
      %cst_33 = arith.constant dense<0.000000e+00> : vector<8xf32>
      %95 = vector.multi_reduction <add>, %94, %cst_33 [1] : vector<8x8xf32> to vector<8xf32>
      %96 = vector.shape_cast %95 : vector<8xf32> to vector<8x1xf32>
      %97 = tpu.reciprocal %96 : vector<8x1xf32> -> vector<8x1xf32>
      %98 = vector.broadcast %97 : vector<8x1xf32> to vector<8x8xf32>
      %99 = arith.mulf %94, %98 : vector<8x8xf32>
      %cst_34 = arith.constant dense<0.000000e+00> : vector<8x8xf32>
      %100 = tpu.matmul %99, %87, %cst_34 {dimension_numbers = #tpu.dot_dimension_numbers<[1], [0], [0], [1], [0, 0, 1, 1], [], []>} : vector<8x8xf32>, vector<8x8xf32>, vector<8x8xf32> -> vector<8x8xf32>
      %101 = tpu.concatenate %52, %68, %84, %100 in 1 : vector<8x8xf32>, vector<8x8xf32>, vector<8x8xf32>, vector<8x8xf32> -> vector<8x32xf32>
      %102 = vector.extract_strided_slice %29 {offsets = [8, 0], sizes = [8, 32], strides = [1, 1]} : vector<16x32xf32> to vector<8x32xf32>
      %103 = vector.extract_strided_slice %30 {offsets = [8, 0], sizes = [8, 32], strides = [1, 1]} : vector<16x32xf32> to vector<8x32xf32>
      %104 = vector.extract_strided_slice %31 {offsets = [8, 0], sizes = [8, 32], strides = [1, 1]} : vector<16x32xf32> to vector<8x32xf32>
      %c1 = arith.constant 1 : index
      %c0_35 = arith.constant 0 : index
      %c0_36 = arith.constant 0 : index
      %105 = vector.load %arg3[%c1, %c0_35, %c0_36] : memref<2x8x8xf32, #tpu.memory_space<vmem>>, vector<1x8x8xf32>
      %106 = vector.shape_cast %105 : vector<1x8x8xf32> to vector<8x8xf32>
      %107 = vector.extract_strided_slice %102 {offsets = [0, 0], sizes = [8, 8], strides = [1, 1]} : vector<8x32xf32> to vector<8x8xf32>
      %108 = vector.extract_strided_slice %103 {offsets = [0, 0], sizes = [8, 8], strides = [1, 1]} : vector<8x32xf32> to vector<8x8xf32>
      %109 = vector.extract_strided_slice %104 {offsets = [0, 0], sizes = [8, 8], strides = [1, 1]} : vector<8x32xf32> to vector<8x8xf32>
      "tpu.trace_start"() <{level = 10 : i32, message = "qd,kd->qk"}> : () -> ()
      %cst_37 = arith.constant dense<0.000000e+00> : vector<8x8xf32>
      %110 = tpu.matmul %107, %108, %cst_37 {dimension_numbers = #tpu.dot_dimension_numbers<[1], [1], [0], [0], [0, 0, 1, 0], [], []>} : vector<8x8xf32>, vector<8x8xf32>, vector<8x8xf32> -> vector<8x8xf32>
      "tpu.trace_stop"() : () -> ()
      %111 = arith.addf %110, %106 : vector<8x8xf32>
      %cst_38 = arith.constant dense<0xFF800000> : vector<8xf32>
      %112 = vector.multi_reduction <maximumf>, %111, %cst_38 [1] : vector<8x8xf32> to vector<8xf32>
      %113 = vector.shape_cast %112 : vector<8xf32> to vector<8x1xf32>
      %114 = vector.broadcast %113 : vector<8x1xf32> to vector<8x8xf32>
      %115 = arith.subf %111, %114 : vector<8x8xf32>
      %116 = math.exp %115 : vector<8x8xf32>
      %cst_39 = arith.constant dense<0.000000e+00> : vector<8xf32>
      %117 = vector.multi_reduction <add>, %116, %cst_39 [1] : vector<8x8xf32> to vector<8xf32>
      %118 = vector.shape_cast %117 : vector<8xf32> to vector<8x1xf32>
      %119 = tpu.reciprocal %118 : vector<8x1xf32> -> vector<8x1xf32>
      %120 = vector.broadcast %119 : vector<8x1xf32> to vector<8x8xf32>
      %121 = arith.mulf %116, %120 : vector<8x8xf32>
      %cst_40 = arith.constant dense<0.000000e+00> : vector<8x8xf32>
      %122 = tpu.matmul %121, %109, %cst_40 {dimension_numbers = #tpu.dot_dimension_numbers<[1], [0], [0], [1], [0, 0, 1, 1], [], []>} : vector<8x8xf32>, vector<8x8xf32>, vector<8x8xf32> -> vector<8x8xf32>
      %123 = vector.extract_strided_slice %102 {offsets = [0, 8], sizes = [8, 8], strides = [1, 1]} : vector<8x32xf32> to vector<8x8xf32>
      %124 = vector.extract_strided_slice %103 {offsets = [0, 8], sizes = [8, 8], strides = [1, 1]} : vector<8x32xf32> to vector<8x8xf32>
      %125 = vector.extract_strided_slice %104 {offsets = [0, 8], sizes = [8, 8], strides = [1, 1]} : vector<8x32xf32> to vector<8x8xf32>
      "tpu.trace_start"() <{level = 10 : i32, message = "qd,kd->qk"}> : () -> ()
      %cst_41 = arith.constant dense<0.000000e+00> : vector<8x8xf32>
      %126 = tpu.matmul %123, %124, %cst_41 {dimension_numbers = #tpu.dot_dimension_numbers<[1], [1], [0], [0], [0, 0, 1, 0], [], []>} : vector<8x8xf32>, vector<8x8xf32>, vector<8x8xf32> -> vector<8x8xf32>
      "tpu.trace_stop"() : () -> ()
      %127 = arith.addf %126, %106 : vector<8x8xf32>
      %cst_42 = arith.constant dense<0xFF800000> : vector<8xf32>
      %128 = vector.multi_reduction <maximumf>, %127, %cst_42 [1] : vector<8x8xf32> to vector<8xf32>
      %129 = vector.shape_cast %128 : vector<8xf32> to vector<8x1xf32>
      %130 = vector.broadcast %129 : vector<8x1xf32> to vector<8x8xf32>
      %131 = arith.subf %127, %130 : vector<8x8xf32>
      %132 = math.exp %131 : vector<8x8xf32>
      %cst_43 = arith.constant dense<0.000000e+00> : vector<8xf32>
      %133 = vector.multi_reduction <add>, %132, %cst_43 [1] : vector<8x8xf32> to vector<8xf32>
      %134 = vector.shape_cast %133 : vector<8xf32> to vector<8x1xf32>
      %135 = tpu.reciprocal %134 : vector<8x1xf32> -> vector<8x1xf32>
      %136 = vector.broadcast %135 : vector<8x1xf32> to vector<8x8xf32>
      %137 = arith.mulf %132, %136 : vector<8x8xf32>
      %cst_44 = arith.constant dense<0.000000e+00> : vector<8x8xf32>
      %138 = tpu.matmul %137, %125, %cst_44 {dimension_numbers = #tpu.dot_dimension_numbers<[1], [0], [0], [1], [0, 0, 1, 1], [], []>} : vector<8x8xf32>, vector<8x8xf32>, vector<8x8xf32> -> vector<8x8xf32>
      %139 = vector.extract_strided_slice %102 {offsets = [0, 16], sizes = [8, 8], strides = [1, 1]} : vector<8x32xf32> to vector<8x8xf32>
      %140 = vector.extract_strided_slice %103 {offsets = [0, 16], sizes = [8, 8], strides = [1, 1]} : vector<8x32xf32> to vector<8x8xf32>
      %141 = vector.extract_strided_slice %104 {offsets = [0, 16], sizes = [8, 8], strides = [1, 1]} : vector<8x32xf32> to vector<8x8xf32>
      "tpu.trace_start"() <{level = 10 : i32, message = "qd,kd->qk"}> : () -> ()
      %cst_45 = arith.constant dense<0.000000e+00> : vector<8x8xf32>
      %142 = tpu.matmul %139, %140, %cst_45 {dimension_numbers = #tpu.dot_dimension_numbers<[1], [1], [0], [0], [0, 0, 1, 0], [], []>} : vector<8x8xf32>, vector<8x8xf32>, vector<8x8xf32> -> vector<8x8xf32>
      "tpu.trace_stop"() : () -> ()
      %143 = arith.addf %142, %106 : vector<8x8xf32>
      %cst_46 = arith.constant dense<0xFF800000> : vector<8xf32>
      %144 = vector.multi_reduction <maximumf>, %143, %cst_46 [1] : vector<8x8xf32> to vector<8xf32>
      %145 = vector.shape_cast %144 : vector<8xf32> to vector<8x1xf32>
      %146 = vector.broadcast %145 : vector<8x1xf32> to vector<8x8xf32>
      %147 = arith.subf %143, %146 : vector<8x8xf32>
      %148 = math.exp %147 : vector<8x8xf32>
      %cst_47 = arith.constant dense<0.000000e+00> : vector<8xf32>
      %149 = vector.multi_reduction <add>, %148, %cst_47 [1] : vector<8x8xf32> to vector<8xf32>
      %150 = vector.shape_cast %149 : vector<8xf32> to vector<8x1xf32>
      %151 = tpu.reciprocal %150 : vector<8x1xf32> -> vector<8x1xf32>
      %152 = vector.broadcast %151 : vector<8x1xf32> to vector<8x8xf32>
      %153 = arith.mulf %148, %152 : vector<8x8xf32>
      %cst_48 = arith.constant dense<0.000000e+00> : vector<8x8xf32>
      %154 = tpu.matmul %153, %141, %cst_48 {dimension_numbers = #tpu.dot_dimension_numbers<[1], [0], [0], [1], [0, 0, 1, 1], [], []>} : vector<8x8xf32>, vector<8x8xf32>, vector<8x8xf32> -> vector<8x8xf32>
      %155 = vector.extract_strided_slice %102 {offsets = [0, 24], sizes = [8, 8], strides = [1, 1]} : vector<8x32xf32> to vector<8x8xf32>
      %156 = vector.extract_strided_slice %103 {offsets = [0, 24], sizes = [8, 8], strides = [1, 1]} : vector<8x32xf32> to vector<8x8xf32>
      %157 = vector.extract_strided_slice %104 {offsets = [0, 24], sizes = [8, 8], strides = [1, 1]} : vector<8x32xf32> to vector<8x8xf32>
      "tpu.trace_start"() <{level = 10 : i32, message = "qd,kd->qk"}> : () -> ()
      %cst_49 = arith.constant dense<0.000000e+00> : vector<8x8xf32>
      %158 = tpu.matmul %155, %156, %cst_49 {dimension_numbers = #tpu.dot_dimension_numbers<[1], [1], [0], [0], [0, 0, 1, 0], [], []>} : vector<8x8xf32>, vector<8x8xf32>, vector<8x8xf32> -> vector<8x8xf32>
      "tpu.trace_stop"() : () -> ()
      %159 = arith.addf %158, %106 : vector<8x8xf32>
      %cst_50 = arith.constant dense<0xFF800000> : vector<8xf32>
      %160 = vector.multi_reduction <maximumf>, %159, %cst_50 [1] : vector<8x8xf32> to vector<8xf32>
      %161 = vector.shape_cast %160 : vector<8xf32> to vector<8x1xf32>
      %162 = vector.broadcast %161 : vector<8x1xf32> to vector<8x8xf32>
      %163 = arith.subf %159, %162 : vector<8x8xf32>
      %164 = math.exp %163 : vector<8x8xf32>
      %cst_51 = arith.constant dense<0.000000e+00> : vector<8xf32>
      %165 = vector.multi_reduction <add>, %164, %cst_51 [1] : vector<8x8xf32> to vector<8xf32>
      %166 = vector.shape_cast %165 : vector<8xf32> to vector<8x1xf32>
      %167 = tpu.reciprocal %166 : vector<8x1xf32> -> vector<8x1xf32>
      %168 = vector.broadcast %167 : vector<8x1xf32> to vector<8x8xf32>
      %169 = arith.mulf %164, %168 : vector<8x8xf32>
      %cst_52 = arith.constant dense<0.000000e+00> : vector<8x8xf32>
      %170 = tpu.matmul %169, %157, %cst_52 {dimension_numbers = #tpu.dot_dimension_numbers<[1], [0], [0], [1], [0, 0, 1, 1], [], []>} : vector<8x8xf32>, vector<8x8xf32>, vector<8x8xf32> -> vector<8x8xf32>
      %171 = tpu.concatenate %122, %138, %154, %170 in 1 : vector<8x8xf32>, vector<8x8xf32>, vector<8x8xf32>, vector<8x8xf32> -> vector<8x32xf32>
      %172 = tpu.concatenate %101, %171 in 0 : vector<8x32xf32>, vector<8x32xf32> -> vector<16x32xf32>
      %cst_53 = arith.constant dense<0.000000e+00> : vector<16x32xf32>
      %173 = tpu.matmul %172, %17, %cst_53 {dimension_numbers = #tpu.dot_dimension_numbers<[1], [0], [0], [1], [0, 0, 1, 1], [], []>} : vector<16x32xf32>, vector<32x32xf32>, vector<16x32xf32> -> vector<16x32xf32>
      %174 = vector.broadcast %22 : vector<1x32xf32> to vector<16x32xf32>
      %175 = arith.addf %173, %174 : vector<16x32xf32>
      %176 = arith.addf %25, %175 : vector<16x32xf32>
      %177 = vector.extract_strided_slice %15 {offsets = [4, 0], sizes = [1, 32], strides = [1, 1]} : vector<8x96xf32> to vector<1x32xf32>
      %178 = vector.extract_strided_slice %15 {offsets = [5, 0], sizes = [1, 32], strides = [1, 1]} : vector<8x96xf32> to vector<1x32xf32>
      %cst_54 = arith.constant dense<0.000000e+00> : vector<16xf32>
      %179 = vector.multi_reduction <add>, %176, %cst_54 [1] : vector<16x32xf32> to vector<16xf32>
      %180 = vector.shape_cast %179 : vector<16xf32> to vector<16x1xf32>
      %cst_55 = arith.constant 3.200000e+01 : f32
      %181 = vector.broadcast %cst_55 : f32 to vector<16x1xf32>
      %182 = arith.divf %180, %181 : vector<16x1xf32>
      %183 = arith.mulf %176, %176 : vector<16x32xf32>
      %cst_56 = arith.constant dense<0.000000e+00> : vector<16xf32>
      %184 = vector.multi_reduction <add>, %183, %cst_56 [1] : vector<16x32xf32> to vector<16xf32>
      %185 = vector.shape_cast %184 : vector<16xf32> to vector<16x1xf32>
      %cst_57 = arith.constant 3.200000e+01 : f32
      %186 = vector.broadcast %cst_57 : f32 to vector<16x1xf32>
      %187 = arith.divf %185, %186 : vector<16x1xf32>
      %188 = arith.mulf %182, %182 : vector<16x1xf32>
      %189 = arith.subf %187, %188 : vector<16x1xf32>
      %190 = vector.broadcast %182 : vector<16x1xf32> to vector<16x32xf32>
      %191 = arith.subf %176, %190 : vector<16x32xf32>
      %cst_58 = arith.constant 9.99999974E-6 : f32
      %192 = vector.broadcast %cst_58 : f32 to vector<16x1xf32>
      %193 = arith.addf %189, %192 : vector<16x1xf32>
      %194 = math.rsqrt %193 : vector<16x1xf32>
      %195 = vector.broadcast %194 : vector<16x1xf32> to vector<16x32xf32>
      %196 = arith.mulf %191, %195 : vector<16x32xf32>
      %197 = vector.broadcast %177 : vector<1x32xf32> to vector<16x32xf32>
      %198 = arith.mulf %196, %197 : vector<16x32xf32>
      %199 = vector.broadcast %178 : vector<1x32xf32> to vector<16x32xf32>
      %200 = arith.addf %198, %199 : vector<16x32xf32>
      %cst_59 = arith.constant dense<0.000000e+00> : vector<16x64xf32>
      %201 = tpu.matmul %200, %18, %cst_59 {dimension_numbers = #tpu.dot_dimension_numbers<[1], [0], [0], [1], [0, 0, 1, 1], [], []>} : vector<16x32xf32>, vector<32x64xf32>, vector<16x64xf32> -> vector<16x64xf32>
      %202 = vector.broadcast %23 : vector<1x64xf32> to vector<16x64xf32>
      %203 = arith.addf %201, %202 : vector<16x64xf32>
      %cst_60 = arith.constant 0.000000e+00 : f32
      %204 = vector.broadcast %cst_60 : f32 to vector<16x64xf32>
      %205 = arith.maximumf %203, %204 : vector<16x64xf32>
      %cst_61 = arith.constant dense<0.000000e+00> : vector<16x32xf32>
      %206 = tpu.matmul %205, %20, %cst_61 {dimension_numbers = #tpu.dot_dimension_numbers<[1], [0], [0], [1], [0, 0, 1, 1], [], []>} : vector<16x64xf32>, vector<64x32xf32>, vector<16x32xf32> -> vector<16x32xf32>
      %207 = vector.broadcast %24 : vector<1x32xf32> to vector<16x32xf32>
      %208 = arith.addf %206, %207 : vector<16x32xf32>
      %209 = arith.addf %200, %208 : vector<16x32xf32>
      %210 = vector.extract_strided_slice %15 {offsets = [6, 0], sizes = [1, 32], strides = [1, 1]} : vector<8x96xf32> to vector<1x32xf32>
      %211 = vector.extract_strided_slice %15 {offsets = [7, 0], sizes = [1, 32], strides = [1, 1]} : vector<8x96xf32> to vector<1x32xf32>
      %cst_62 = arith.constant dense<0.000000e+00> : vector<16xf32>
      %212 = vector.multi_reduction <add>, %209, %cst_62 [1] : vector<16x32xf32> to vector<16xf32>
      %213 = vector.shape_cast %212 : vector<16xf32> to vector<16x1xf32>
      %cst_63 = arith.constant 3.200000e+01 : f32
      %214 = vector.broadcast %cst_63 : f32 to vector<16x1xf32>
      %215 = arith.divf %213, %214 : vector<16x1xf32>
      %216 = arith.mulf %209, %209 : vector<16x32xf32>
      %cst_64 = arith.constant dense<0.000000e+00> : vector<16xf32>
      %217 = vector.multi_reduction <add>, %216, %cst_64 [1] : vector<16x32xf32> to vector<16xf32>
      %218 = vector.shape_cast %217 : vector<16xf32> to vector<16x1xf32>
      %cst_65 = arith.constant 3.200000e+01 : f32
      %219 = vector.broadcast %cst_65 : f32 to vector<16x1xf32>
      %220 = arith.divf %218, %219 : vector<16x1xf32>
      %221 = arith.mulf %215, %215 : vector<16x1xf32>
      %222 = arith.subf %220, %221 : vector<16x1xf32>
      %223 = vector.broadcast %215 : vector<16x1xf32> to vector<16x32xf32>
      %224 = arith.subf %209, %223 : vector<16x32xf32>
      %cst_66 = arith.constant 9.99999974E-6 : f32
      %225 = vector.broadcast %cst_66 : f32 to vector<16x1xf32>
      %226 = arith.addf %222, %225 : vector<16x1xf32>
      %227 = math.rsqrt %226 : vector<16x1xf32>
      %228 = vector.broadcast %227 : vector<16x1xf32> to vector<16x32xf32>
      %229 = arith.mulf %224, %228 : vector<16x32xf32>
      %230 = vector.broadcast %210 : vector<1x32xf32> to vector<16x32xf32>
      %231 = arith.mulf %229, %230 : vector<16x32xf32>
      %232 = vector.broadcast %211 : vector<1x32xf32> to vector<16x32xf32>
      %233 = arith.addf %231, %232 : vector<16x32xf32>
      %c0_67 = arith.constant 0 : index
      %c0_68 = arith.constant 0 : index
      %234 = vector.load %arg15[%c0_67, %c0_68] : memref<16x32xf32, #tpu.memory_space<vmem>>, vector<16x32xf32>
      tpu.vector_store %arg15[%c0_67, %c0_68], %233 {strides = array<i32>} : memref<16x32xf32, #tpu.memory_space<vmem>>, vector<16x32xf32>,
    } else {
    }
    %c2_i32_2 = arith.constant 2 : i32
    %6 = arith.cmpi eq, %arg0, %c2_i32_2 : i32
    %7 = arith.extui %6 : i1 to i32
    %c0_i32_3 = arith.constant 0 : i32
    %8 = arith.cmpi ne, %7, %c0_i32_3 : i32
    scf.if %8 {
      %c0 = arith.constant 0 : index
      %c0_6 = arith.constant 0 : index
      %12 = vector.load %arg15[%c0, %c0_6] : memref<16x32xf32, #tpu.memory_space<vmem>>, vector<16x32xf32>
      %c0_7 = arith.constant 0 : index
      %c0_8 = arith.constant 0 : index
      %13 = vector.load %arg6[%c0_7, %c0_8] : memref<4x32xf32, #tpu.memory_space<vmem>>, vector<1x32xf32>
      %c1 = arith.constant 1 : index
      %c0_9 = arith.constant 0 : index
      %14 = vector.load %arg6[%c1, %c0_9] : memref<4x32xf32, #tpu.memory_space<vmem>>, vector<1x32xf32>
      %cst = arith.constant dense<0.000000e+00> : vector<16xf32>
      %15 = vector.multi_reduction <add>, %12, %cst [1] : vector<16x32xf32> to vector<16xf32>
      %16 = vector.shape_cast %15 : vector<16xf32> to vector<16x1xf32>
      %cst_10 = arith.constant 3.200000e+01 : f32
      %17 = vector.broadcast %cst_10 : f32 to vector<16x1xf32>
      %18 = arith.divf %16, %17 : vector<16x1xf32>
      %19 = arith.mulf %12, %12 : vector<16x32xf32>
      %cst_11 = arith.constant dense<0.000000e+00> : vector<16xf32>
      %20 = vector.multi_reduction <add>, %19, %cst_11 [1] : vector<16x32xf32> to vector<16xf32>
      %21 = vector.shape_cast %20 : vector<16xf32> to vector<16x1xf32>
      %cst_12 = arith.constant 3.200000e+01 : f32
      %22 = vector.broadcast %cst_12 : f32 to vector<16x1xf32>
      %23 = arith.divf %21, %22 : vector<16x1xf32>
      %24 = arith.mulf %18, %18 : vector<16x1xf32>
      %25 = arith.subf %23, %24 : vector<16x1xf32>
      %26 = vector.broadcast %18 : vector<16x1xf32> to vector<16x32xf32>
      %27 = arith.subf %12, %26 : vector<16x32xf32>
      %cst_13 = arith.constant 9.99999974E-6 : f32
      %28 = vector.broadcast %cst_13 : f32 to vector<16x1xf32>
      %29 = arith.addf %25, %28 : vector<16x1xf32>
      %30 = math.rsqrt %29 : vector<16x1xf32>
      %31 = vector.broadcast %30 : vector<16x1xf32> to vector<16x32xf32>
      %32 = arith.mulf %27, %31 : vector<16x32xf32>
      %33 = vector.broadcast %13 : vector<1x32xf32> to vector<16x32xf32>
      %34 = arith.mulf %32, %33 : vector<16x32xf32>
      %35 = vector.broadcast %14 : vector<1x32xf32> to vector<16x32xf32>
      %36 = arith.addf %34, %35 : vector<16x32xf32>
      %c0_14 = arith.constant 0 : index
      %c0_15 = arith.constant 0 : index
      %37 = vector.load %arg15[%c0_14, %c0_15] : memref<16x32xf32, #tpu.memory_space<vmem>>, vector<16x32xf32>
      tpu.vector_store %arg15[%c0_14, %c0_15], %36 {strides = array<i32>} : memref<16x32xf32, #tpu.memory_space<vmem>>, vector<16x32xf32>,
      %c0_16 = arith.constant 0 : index
      %c0_17 = arith.constant 0 : index
      %38 = vector.load %arg2[%c0_16, %c0_17] : memref<16x32xf32, #tpu.memory_space<vmem>>, vector<16x32xf32>
      %c0_18 = arith.constant 0 : index
      %c0_19 = arith.constant 0 : index
      %39 = vector.load %arg16[%c0_18, %c0_19] : memref<16x32xf32, #tpu.memory_space<vmem>>, vector<16x32xf32>
      tpu.vector_store %arg16[%c0_18, %c0_19], %38 {strides = array<i32>} : memref<16x32xf32, #tpu.memory_space<vmem>>, vector<16x32xf32>,
    } else {
    }
    %c2_i32_4 = arith.constant 2 : i32
    %9 = arith.cmpi sge, %arg0, %c2_i32_4 : i32
    %10 = arith.extui %9 : i1 to i32
    %c0_i32_5 = arith.constant 0 : i32
    %11 = arith.cmpi ne, %10, %c0_i32_5 : i32
    scf.if %11 {
      %c0 = arith.constant 0 : index
      %c0_6 = arith.constant 0 : index
      %c0_7 = arith.constant 0 : index
      %12 = vector.load %arg11[%c0, %c0_6, %c0_7] : memref<1x32x320xf32, #tpu.memory_space<vmem>>, vector<1x32x320xf32>
      %13 = vector.shape_cast %12 : vector<1x32x320xf32> to vector<32x320xf32>
      %c0_8 = arith.constant 0 : index
      %c0_9 = arith.constant 0 : index
      %c0_10 = arith.constant 0 : index
      %14 = vector.load %arg13[%c0_8, %c0_9, %c0_10] : memref<1x13x96xf32, #tpu.memory_space<vmem>>, vector<1x13x96xf32>
      %15 = vector.shape_cast %14 : vector<1x13x96xf32> to vector<13x96xf32>
      %16 = vector.extract_strided_slice %13 {offsets = [0, 0], sizes = [32, 96], strides = [1, 1]} : vector<32x320xf32> to vector<32x96xf32>
      %17 = vector.extract_strided_slice %13 {offsets = [0, 96], sizes = [32, 32], strides = [1, 1]} : vector<32x320xf32> to vector<32x32xf32>
      %18 = vector.extract_strided_slice %13 {offsets = [0, 128], sizes = [32, 32], strides = [1, 1]} : vector<32x320xf32> to vector<32x32xf32>
      %19 = vector.extract_strided_slice %13 {offsets = [0, 160], sizes = [32, 64], strides = [1, 1]} : vector<32x320xf32> to vector<32x64xf32>
      %20 = vector.extract_strided_slice %13 {offsets = [0, 224], sizes = [32, 32], strides = [1, 1]} : vector<32x320xf32> to vector<32x32xf32>
      %21 = vector.extract_strided_slice %13 {offsets = [0, 256], sizes = [32, 64], strides = [1, 1]} : vector<32x320xf32> to vector<32x64xf32>
      %c0_11 = arith.constant 0 : index
      %c0_12 = arith.constant 0 : index
      %c0_13 = arith.constant 0 : index
      %22 = vector.load %arg12[%c0_11, %c0_12, %c0_13] : memref<1x64x32xf32, #tpu.memory_space<vmem>>, vector<1x64x32xf32>
      %23 = vector.shape_cast %22 : vector<1x64x32xf32> to vector<64x32xf32>
      %24 = vector.extract_strided_slice %15 {offsets = [0, 0], sizes = [1, 96], strides = [1, 1]} : vector<13x96xf32> to vector<1x96xf32>
      %25 = vector.extract_strided_slice %15 {offsets = [1, 0], sizes = [1, 32], strides = [1, 1]} : vector<13x96xf32> to vector<1x32xf32>
      %26 = vector.extract_strided_slice %15 {offsets = [2, 0], sizes = [1, 32], strides = [1, 1]} : vector<13x96xf32> to vector<1x32xf32>
      %27 = vector.extract_strided_slice %15 {offsets = [3, 0], sizes = [1, 64], strides = [1, 1]} : vector<13x96xf32> to vector<1x64xf32>
      %28 = vector.extract_strided_slice %15 {offsets = [4, 0], sizes = [1, 32], strides = [1, 1]} : vector<13x96xf32> to vector<1x32xf32>
      %29 = vector.extract_strided_slice %15 {offsets = [5, 0], sizes = [1, 64], strides = [1, 1]} : vector<13x96xf32> to vector<1x64xf32>
      %30 = vector.extract_strided_slice %15 {offsets = [6, 0], sizes = [1, 32], strides = [1, 1]} : vector<13x96xf32> to vector<1x32xf32>
      %c0_14 = arith.constant 0 : index
      %c0_15 = arith.constant 0 : index
      %31 = vector.load %arg16[%c0_14, %c0_15] : memref<16x32xf32, #tpu.memory_space<vmem>>, vector<16x32xf32>
      %c0_16 = arith.constant 0 : index
      %c0_17 = arith.constant 0 : index
      %32 = vector.load %arg15[%c0_16, %c0_17] : memref<16x32xf32, #tpu.memory_space<vmem>>, vector<16x32xf32>
      %cst = arith.constant dense<0.000000e+00> : vector<16x96xf32>
      %33 = tpu.matmul %31, %16, %cst {dimension_numbers = #tpu.dot_dimension_numbers<[1], [0], [0], [1], [0, 0, 1, 1], [], []>} : vector<16x32xf32>, vector<32x96xf32>, vector<16x96xf32> -> vector<16x96xf32>
      %34 = vector.broadcast %24 : vector<1x96xf32> to vector<16x96xf32>
      %35 = arith.addf %33, %34 : vector<16x96xf32>
      %36 = vector.extract_strided_slice %35 {offsets = [0, 0], sizes = [16, 32], strides = [1, 1]} : vector<16x96xf32> to vector<16x32xf32>
      %37 = vector.extract_strided_slice %35 {offsets = [0, 32], sizes = [16, 32], strides = [1, 1]} : vector<16x96xf32> to vector<16x32xf32>
      %38 = vector.extract_strided_slice %35 {offsets = [0, 64], sizes = [16, 32], strides = [1, 1]} : vector<16x96xf32> to vector<16x32xf32>
      %39 = vector.extract_strided_slice %36 {offsets = [0, 0], sizes = [8, 32], strides = [1, 1]} : vector<16x32xf32> to vector<8x32xf32>
      %40 = vector.extract_strided_slice %37 {offsets = [0, 0], sizes = [8, 32], strides = [1, 1]} : vector<16x32xf32> to vector<8x32xf32>
      %41 = vector.extract_strided_slice %38 {offsets = [0, 0], sizes = [8, 32], strides = [1, 1]} : vector<16x32xf32> to vector<8x32xf32>
      %c0_18 = arith.constant 0 : index
      %c0_19 = arith.constant 0 : index
      %c0_20 = arith.constant 0 : index
      %42 = vector.load %arg4[%c0_18, %c0_19, %c0_20] : memref<2x8x8xf32, #tpu.memory_space<vmem>>, vector<1x8x8xf32>
      %43 = vector.shape_cast %42 : vector<1x8x8xf32> to vector<8x8xf32>
      %44 = vector.extract_strided_slice %39 {offsets = [0, 0], sizes = [8, 8], strides = [1, 1]} : vector<8x32xf32> to vector<8x8xf32>
      %45 = vector.extract_strided_slice %40 {offsets = [0, 0], sizes = [8, 8], strides = [1, 1]} : vector<8x32xf32> to vector<8x8xf32>
      %46 = vector.extract_strided_slice %41 {offsets = [0, 0], sizes = [8, 8], strides = [1, 1]} : vector<8x32xf32> to vector<8x8xf32>
      "tpu.trace_start"() <{level = 10 : i32, message = "qd,kd->qk"}> : () -> ()
      %cst_21 = arith.constant dense<0.000000e+00> : vector<8x8xf32>
      %47 = tpu.matmul %44, %45, %cst_21 {dimension_numbers = #tpu.dot_dimension_numbers<[1], [1], [0], [0], [0, 0, 1, 0], [], []>} : vector<8x8xf32>, vector<8x8xf32>, vector<8x8xf32> -> vector<8x8xf32>
      "tpu.trace_stop"() : () -> ()
      %48 = arith.addf %47, %43 : vector<8x8xf32>
      %cst_22 = arith.constant dense<0xFF800000> : vector<8xf32>
      %49 = vector.multi_reduction <maximumf>, %48, %cst_22 [1] : vector<8x8xf32> to vector<8xf32>
      %50 = vector.shape_cast %49 : vector<8xf32> to vector<8x1xf32>
      %51 = vector.broadcast %50 : vector<8x1xf32> to vector<8x8xf32>
      %52 = arith.subf %48, %51 : vector<8x8xf32>
      %53 = math.exp %52 : vector<8x8xf32>
      %cst_23 = arith.constant dense<0.000000e+00> : vector<8xf32>
      %54 = vector.multi_reduction <add>, %53, %cst_23 [1] : vector<8x8xf32> to vector<8xf32>
      %55 = vector.shape_cast %54 : vector<8xf32> to vector<8x1xf32>
      %56 = tpu.reciprocal %55 : vector<8x1xf32> -> vector<8x1xf32>
      %57 = vector.broadcast %56 : vector<8x1xf32> to vector<8x8xf32>
      %58 = arith.mulf %53, %57 : vector<8x8xf32>
      %cst_24 = arith.constant dense<0.000000e+00> : vector<8x8xf32>
      %59 = tpu.matmul %58, %46, %cst_24 {dimension_numbers = #tpu.dot_dimension_numbers<[1], [0], [0], [1], [0, 0, 1, 1], [], []>} : vector<8x8xf32>, vector<8x8xf32>, vector<8x8xf32> -> vector<8x8xf32>
      %60 = vector.extract_strided_slice %39 {offsets = [0, 8], sizes = [8, 8], strides = [1, 1]} : vector<8x32xf32> to vector<8x8xf32>
      %61 = vector.extract_strided_slice %40 {offsets = [0, 8], sizes = [8, 8], strides = [1, 1]} : vector<8x32xf32> to vector<8x8xf32>
      %62 = vector.extract_strided_slice %41 {offsets = [0, 8], sizes = [8, 8], strides = [1, 1]} : vector<8x32xf32> to vector<8x8xf32>
      "tpu.trace_start"() <{level = 10 : i32, message = "qd,kd->qk"}> : () -> ()
      %cst_25 = arith.constant dense<0.000000e+00> : vector<8x8xf32>
      %63 = tpu.matmul %60, %61, %cst_25 {dimension_numbers = #tpu.dot_dimension_numbers<[1], [1], [0], [0], [0, 0, 1, 0], [], []>} : vector<8x8xf32>, vector<8x8xf32>, vector<8x8xf32> -> vector<8x8xf32>
      "tpu.trace_stop"() : () -> ()
      %64 = arith.addf %63, %43 : vector<8x8xf32>
      %cst_26 = arith.constant dense<0xFF800000> : vector<8xf32>
      %65 = vector.multi_reduction <maximumf>, %64, %cst_26 [1] : vector<8x8xf32> to vector<8xf32>
      %66 = vector.shape_cast %65 : vector<8xf32> to vector<8x1xf32>
      %67 = vector.broadcast %66 : vector<8x1xf32> to vector<8x8xf32>
      %68 = arith.subf %64, %67 : vector<8x8xf32>
      %69 = math.exp %68 : vector<8x8xf32>
      %cst_27 = arith.constant dense<0.000000e+00> : vector<8xf32>
      %70 = vector.multi_reduction <add>, %69, %cst_27 [1] : vector<8x8xf32> to vector<8xf32>
      %71 = vector.shape_cast %70 : vector<8xf32> to vector<8x1xf32>
      %72 = tpu.reciprocal %71 : vector<8x1xf32> -> vector<8x1xf32>
      %73 = vector.broadcast %72 : vector<8x1xf32> to vector<8x8xf32>
      %74 = arith.mulf %69, %73 : vector<8x8xf32>
      %cst_28 = arith.constant dense<0.000000e+00> : vector<8x8xf32>
      %75 = tpu.matmul %74, %62, %cst_28 {dimension_numbers = #tpu.dot_dimension_numbers<[1], [0], [0], [1], [0, 0, 1, 1], [], []>} : vector<8x8xf32>, vector<8x8xf32>, vector<8x8xf32> -> vector<8x8xf32>
      %76 = vector.extract_strided_slice %39 {offsets = [0, 16], sizes = [8, 8], strides = [1, 1]} : vector<8x32xf32> to vector<8x8xf32>
      %77 = vector.extract_strided_slice %40 {offsets = [0, 16], sizes = [8, 8], strides = [1, 1]} : vector<8x32xf32> to vector<8x8xf32>
      %78 = vector.extract_strided_slice %41 {offsets = [0, 16], sizes = [8, 8], strides = [1, 1]} : vector<8x32xf32> to vector<8x8xf32>
      "tpu.trace_start"() <{level = 10 : i32, message = "qd,kd->qk"}> : () -> ()
      %cst_29 = arith.constant dense<0.000000e+00> : vector<8x8xf32>
      %79 = tpu.matmul %76, %77, %cst_29 {dimension_numbers = #tpu.dot_dimension_numbers<[1], [1], [0], [0], [0, 0, 1, 0], [], []>} : vector<8x8xf32>, vector<8x8xf32>, vector<8x8xf32> -> vector<8x8xf32>
      "tpu.trace_stop"() : () -> ()
      %80 = arith.addf %79, %43 : vector<8x8xf32>
      %cst_30 = arith.constant dense<0xFF800000> : vector<8xf32>
      %81 = vector.multi_reduction <maximumf>, %80, %cst_30 [1] : vector<8x8xf32> to vector<8xf32>
      %82 = vector.shape_cast %81 : vector<8xf32> to vector<8x1xf32>
      %83 = vector.broadcast %82 : vector<8x1xf32> to vector<8x8xf32>
      %84 = arith.subf %80, %83 : vector<8x8xf32>
      %85 = math.exp %84 : vector<8x8xf32>
      %cst_31 = arith.constant dense<0.000000e+00> : vector<8xf32>
      %86 = vector.multi_reduction <add>, %85, %cst_31 [1] : vector<8x8xf32> to vector<8xf32>
      %87 = vector.shape_cast %86 : vector<8xf32> to vector<8x1xf32>
      %88 = tpu.reciprocal %87 : vector<8x1xf32> -> vector<8x1xf32>
      %89 = vector.broadcast %88 : vector<8x1xf32> to vector<8x8xf32>
      %90 = arith.mulf %85, %89 : vector<8x8xf32>
      %cst_32 = arith.constant dense<0.000000e+00> : vector<8x8xf32>
      %91 = tpu.matmul %90, %78, %cst_32 {dimension_numbers = #tpu.dot_dimension_numbers<[1], [0], [0], [1], [0, 0, 1, 1], [], []>} : vector<8x8xf32>, vector<8x8xf32>, vector<8x8xf32> -> vector<8x8xf32>
      %92 = vector.extract_strided_slice %39 {offsets = [0, 24], sizes = [8, 8], strides = [1, 1]} : vector<8x32xf32> to vector<8x8xf32>
      %93 = vector.extract_strided_slice %40 {offsets = [0, 24], sizes = [8, 8], strides = [1, 1]} : vector<8x32xf32> to vector<8x8xf32>
      %94 = vector.extract_strided_slice %41 {offsets = [0, 24], sizes = [8, 8], strides = [1, 1]} : vector<8x32xf32> to vector<8x8xf32>
      "tpu.trace_start"() <{level = 10 : i32, message = "qd,kd->qk"}> : () -> ()
      %cst_33 = arith.constant dense<0.000000e+00> : vector<8x8xf32>
      %95 = tpu.matmul %92, %93, %cst_33 {dimension_numbers = #tpu.dot_dimension_numbers<[1], [1], [0], [0], [0, 0, 1, 0], [], []>} : vector<8x8xf32>, vector<8x8xf32>, vector<8x8xf32> -> vector<8x8xf32>
      "tpu.trace_stop"() : () -> ()
      %96 = arith.addf %95, %43 : vector<8x8xf32>
      %cst_34 = arith.constant dense<0xFF800000> : vector<8xf32>
      %97 = vector.multi_reduction <maximumf>, %96, %cst_34 [1] : vector<8x8xf32> to vector<8xf32>
      %98 = vector.shape_cast %97 : vector<8xf32> to vector<8x1xf32>
      %99 = vector.broadcast %98 : vector<8x1xf32> to vector<8x8xf32>
      %100 = arith.subf %96, %99 : vector<8x8xf32>
      %101 = math.exp %100 : vector<8x8xf32>
      %cst_35 = arith.constant dense<0.000000e+00> : vector<8xf32>
      %102 = vector.multi_reduction <add>, %101, %cst_35 [1] : vector<8x8xf32> to vector<8xf32>
      %103 = vector.shape_cast %102 : vector<8xf32> to vector<8x1xf32>
      %104 = tpu.reciprocal %103 : vector<8x1xf32> -> vector<8x1xf32>
      %105 = vector.broadcast %104 : vector<8x1xf32> to vector<8x8xf32>
      %106 = arith.mulf %101, %105 : vector<8x8xf32>
      %cst_36 = arith.constant dense<0.000000e+00> : vector<8x8xf32>
      %107 = tpu.matmul %106, %94, %cst_36 {dimension_numbers = #tpu.dot_dimension_numbers<[1], [0], [0], [1], [0, 0, 1, 1], [], []>} : vector<8x8xf32>, vector<8x8xf32>, vector<8x8xf32> -> vector<8x8xf32>
      %108 = tpu.concatenate %59, %75, %91, %107 in 1 : vector<8x8xf32>, vector<8x8xf32>, vector<8x8xf32>, vector<8x8xf32> -> vector<8x32xf32>
      %109 = vector.extract_strided_slice %36 {offsets = [8, 0], sizes = [8, 32], strides = [1, 1]} : vector<16x32xf32> to vector<8x32xf32>
      %110 = vector.extract_strided_slice %37 {offsets = [8, 0], sizes = [8, 32], strides = [1, 1]} : vector<16x32xf32> to vector<8x32xf32>
      %111 = vector.extract_strided_slice %38 {offsets = [8, 0], sizes = [8, 32], strides = [1, 1]} : vector<16x32xf32> to vector<8x32xf32>
      %c1 = arith.constant 1 : index
      %c0_37 = arith.constant 0 : index
      %c0_38 = arith.constant 0 : index
      %112 = vector.load %arg4[%c1, %c0_37, %c0_38] : memref<2x8x8xf32, #tpu.memory_space<vmem>>, vector<1x8x8xf32>
      %113 = vector.shape_cast %112 : vector<1x8x8xf32> to vector<8x8xf32>
      %114 = vector.extract_strided_slice %109 {offsets = [0, 0], sizes = [8, 8], strides = [1, 1]} : vector<8x32xf32> to vector<8x8xf32>
      %115 = vector.extract_strided_slice %110 {offsets = [0, 0], sizes = [8, 8], strides = [1, 1]} : vector<8x32xf32> to vector<8x8xf32>
      %116 = vector.extract_strided_slice %111 {offsets = [0, 0], sizes = [8, 8], strides = [1, 1]} : vector<8x32xf32> to vector<8x8xf32>
      "tpu.trace_start"() <{level = 10 : i32, message = "qd,kd->qk"}> : () -> ()
      %cst_39 = arith.constant dense<0.000000e+00> : vector<8x8xf32>
      %117 = tpu.matmul %114, %115, %cst_39 {dimension_numbers = #tpu.dot_dimension_numbers<[1], [1], [0], [0], [0, 0, 1, 0], [], []>} : vector<8x8xf32>, vector<8x8xf32>, vector<8x8xf32> -> vector<8x8xf32>
      "tpu.trace_stop"() : () -> ()
      %118 = arith.addf %117, %113 : vector<8x8xf32>
      %cst_40 = arith.constant dense<0xFF800000> : vector<8xf32>
      %119 = vector.multi_reduction <maximumf>, %118, %cst_40 [1] : vector<8x8xf32> to vector<8xf32>
      %120 = vector.shape_cast %119 : vector<8xf32> to vector<8x1xf32>
      %121 = vector.broadcast %120 : vector<8x1xf32> to vector<8x8xf32>
      %122 = arith.subf %118, %121 : vector<8x8xf32>
      %123 = math.exp %122 : vector<8x8xf32>
      %cst_41 = arith.constant dense<0.000000e+00> : vector<8xf32>
      %124 = vector.multi_reduction <add>, %123, %cst_41 [1] : vector<8x8xf32> to vector<8xf32>
      %125 = vector.shape_cast %124 : vector<8xf32> to vector<8x1xf32>
      %126 = tpu.reciprocal %125 : vector<8x1xf32> -> vector<8x1xf32>
      %127 = vector.broadcast %126 : vector<8x1xf32> to vector<8x8xf32>
      %128 = arith.mulf %123, %127 : vector<8x8xf32>
      %cst_42 = arith.constant dense<0.000000e+00> : vector<8x8xf32>
      %129 = tpu.matmul %128, %116, %cst_42 {dimension_numbers = #tpu.dot_dimension_numbers<[1], [0], [0], [1], [0, 0, 1, 1], [], []>} : vector<8x8xf32>, vector<8x8xf32>, vector<8x8xf32> -> vector<8x8xf32>
      %130 = vector.extract_strided_slice %109 {offsets = [0, 8], sizes = [8, 8], strides = [1, 1]} : vector<8x32xf32> to vector<8x8xf32>
      %131 = vector.extract_strided_slice %110 {offsets = [0, 8], sizes = [8, 8], strides = [1, 1]} : vector<8x32xf32> to vector<8x8xf32>
      %132 = vector.extract_strided_slice %111 {offsets = [0, 8], sizes = [8, 8], strides = [1, 1]} : vector<8x32xf32> to vector<8x8xf32>
      "tpu.trace_start"() <{level = 10 : i32, message = "qd,kd->qk"}> : () -> ()
      %cst_43 = arith.constant dense<0.000000e+00> : vector<8x8xf32>
      %133 = tpu.matmul %130, %131, %cst_43 {dimension_numbers = #tpu.dot_dimension_numbers<[1], [1], [0], [0], [0, 0, 1, 0], [], []>} : vector<8x8xf32>, vector<8x8xf32>, vector<8x8xf32> -> vector<8x8xf32>
      "tpu.trace_stop"() : () -> ()
      %134 = arith.addf %133, %113 : vector<8x8xf32>
      %cst_44 = arith.constant dense<0xFF800000> : vector<8xf32>
      %135 = vector.multi_reduction <maximumf>, %134, %cst_44 [1] : vector<8x8xf32> to vector<8xf32>
      %136 = vector.shape_cast %135 : vector<8xf32> to vector<8x1xf32>
      %137 = vector.broadcast %136 : vector<8x1xf32> to vector<8x8xf32>
      %138 = arith.subf %134, %137 : vector<8x8xf32>
      %139 = math.exp %138 : vector<8x8xf32>
      %cst_45 = arith.constant dense<0.000000e+00> : vector<8xf32>
      %140 = vector.multi_reduction <add>, %139, %cst_45 [1] : vector<8x8xf32> to vector<8xf32>
      %141 = vector.shape_cast %140 : vector<8xf32> to vector<8x1xf32>
      %142 = tpu.reciprocal %141 : vector<8x1xf32> -> vector<8x1xf32>
      %143 = vector.broadcast %142 : vector<8x1xf32> to vector<8x8xf32>
      %144 = arith.mulf %139, %143 : vector<8x8xf32>
      %cst_46 = arith.constant dense<0.000000e+00> : vector<8x8xf32>
      %145 = tpu.matmul %144, %132, %cst_46 {dimension_numbers = #tpu.dot_dimension_numbers<[1], [0], [0], [1], [0, 0, 1, 1], [], []>} : vector<8x8xf32>, vector<8x8xf32>, vector<8x8xf32> -> vector<8x8xf32>
      %146 = vector.extract_strided_slice %109 {offsets = [0, 16], sizes = [8, 8], strides = [1, 1]} : vector<8x32xf32> to vector<8x8xf32>
      %147 = vector.extract_strided_slice %110 {offsets = [0, 16], sizes = [8, 8], strides = [1, 1]} : vector<8x32xf32> to vector<8x8xf32>
      %148 = vector.extract_strided_slice %111 {offsets = [0, 16], sizes = [8, 8], strides = [1, 1]} : vector<8x32xf32> to vector<8x8xf32>
      "tpu.trace_start"() <{level = 10 : i32, message = "qd,kd->qk"}> : () -> ()
      %cst_47 = arith.constant dense<0.000000e+00> : vector<8x8xf32>
      %149 = tpu.matmul %146, %147, %cst_47 {dimension_numbers = #tpu.dot_dimension_numbers<[1], [1], [0], [0], [0, 0, 1, 0], [], []>} : vector<8x8xf32>, vector<8x8xf32>, vector<8x8xf32> -> vector<8x8xf32>
      "tpu.trace_stop"() : () -> ()
      %150 = arith.addf %149, %113 : vector<8x8xf32>
      %cst_48 = arith.constant dense<0xFF800000> : vector<8xf32>
      %151 = vector.multi_reduction <maximumf>, %150, %cst_48 [1] : vector<8x8xf32> to vector<8xf32>
      %152 = vector.shape_cast %151 : vector<8xf32> to vector<8x1xf32>
      %153 = vector.broadcast %152 : vector<8x1xf32> to vector<8x8xf32>
      %154 = arith.subf %150, %153 : vector<8x8xf32>
      %155 = math.exp %154 : vector<8x8xf32>
      %cst_49 = arith.constant dense<0.000000e+00> : vector<8xf32>
      %156 = vector.multi_reduction <add>, %155, %cst_49 [1] : vector<8x8xf32> to vector<8xf32>
      %157 = vector.shape_cast %156 : vector<8xf32> to vector<8x1xf32>
      %158 = tpu.reciprocal %157 : vector<8x1xf32> -> vector<8x1xf32>
      %159 = vector.broadcast %158 : vector<8x1xf32> to vector<8x8xf32>
      %160 = arith.mulf %155, %159 : vector<8x8xf32>
      %cst_50 = arith.constant dense<0.000000e+00> : vector<8x8xf32>
      %161 = tpu.matmul %160, %148, %cst_50 {dimension_numbers = #tpu.dot_dimension_numbers<[1], [0], [0], [1], [0, 0, 1, 1], [], []>} : vector<8x8xf32>, vector<8x8xf32>, vector<8x8xf32> -> vector<8x8xf32>
      %162 = vector.extract_strided_slice %109 {offsets = [0, 24], sizes = [8, 8], strides = [1, 1]} : vector<8x32xf32> to vector<8x8xf32>
      %163 = vector.extract_strided_slice %110 {offsets = [0, 24], sizes = [8, 8], strides = [1, 1]} : vector<8x32xf32> to vector<8x8xf32>
      %164 = vector.extract_strided_slice %111 {offsets = [0, 24], sizes = [8, 8], strides = [1, 1]} : vector<8x32xf32> to vector<8x8xf32>
      "tpu.trace_start"() <{level = 10 : i32, message = "qd,kd->qk"}> : () -> ()
      %cst_51 = arith.constant dense<0.000000e+00> : vector<8x8xf32>
      %165 = tpu.matmul %162, %163, %cst_51 {dimension_numbers = #tpu.dot_dimension_numbers<[1], [1], [0], [0], [0, 0, 1, 0], [], []>} : vector<8x8xf32>, vector<8x8xf32>, vector<8x8xf32> -> vector<8x8xf32>
      "tpu.trace_stop"() : () -> ()
      %166 = arith.addf %165, %113 : vector<8x8xf32>
      %cst_52 = arith.constant dense<0xFF800000> : vector<8xf32>
      %167 = vector.multi_reduction <maximumf>, %166, %cst_52 [1] : vector<8x8xf32> to vector<8xf32>
      %168 = vector.shape_cast %167 : vector<8xf32> to vector<8x1xf32>
      %169 = vector.broadcast %168 : vector<8x1xf32> to vector<8x8xf32>
      %170 = arith.subf %166, %169 : vector<8x8xf32>
      %171 = math.exp %170 : vector<8x8xf32>
      %cst_53 = arith.constant dense<0.000000e+00> : vector<8xf32>
      %172 = vector.multi_reduction <add>, %171, %cst_53 [1] : vector<8x8xf32> to vector<8xf32>
      %173 = vector.shape_cast %172 : vector<8xf32> to vector<8x1xf32>
      %174 = tpu.reciprocal %173 : vector<8x1xf32> -> vector<8x1xf32>
      %175 = vector.broadcast %174 : vector<8x1xf32> to vector<8x8xf32>
      %176 = arith.mulf %171, %175 : vector<8x8xf32>
      %cst_54 = arith.constant dense<0.000000e+00> : vector<8x8xf32>
      %177 = tpu.matmul %176, %164, %cst_54 {dimension_numbers = #tpu.dot_dimension_numbers<[1], [0], [0], [1], [0, 0, 1, 1], [], []>} : vector<8x8xf32>, vector<8x8xf32>, vector<8x8xf32> -> vector<8x8xf32>
      %178 = tpu.concatenate %129, %145, %161, %177 in 1 : vector<8x8xf32>, vector<8x8xf32>, vector<8x8xf32>, vector<8x8xf32> -> vector<8x32xf32>
      %179 = tpu.concatenate %108, %178 in 0 : vector<8x32xf32>, vector<8x32xf32> -> vector<16x32xf32>
      %cst_55 = arith.constant dense<0.000000e+00> : vector<16x32xf32>
      %180 = tpu.matmul %179, %17, %cst_55 {dimension_numbers = #tpu.dot_dimension_numbers<[1], [0], [0], [1], [0, 0, 1, 1], [], []>} : vector<16x32xf32>, vector<32x32xf32>, vector<16x32xf32> -> vector<16x32xf32>
      %181 = vector.broadcast %25 : vector<1x32xf32> to vector<16x32xf32>
      %182 = arith.addf %180, %181 : vector<16x32xf32>
      %183 = arith.addf %31, %182 : vector<16x32xf32>
      %184 = vector.extract_strided_slice %15 {offsets = [7, 0], sizes = [1, 32], strides = [1, 1]} : vector<13x96xf32> to vector<1x32xf32>
      %185 = vector.extract_strided_slice %15 {offsets = [8, 0], sizes = [1, 32], strides = [1, 1]} : vector<13x96xf32> to vector<1x32xf32>
      %cst_56 = arith.constant dense<0.000000e+00> : vector<16xf32>
      %186 = vector.multi_reduction <add>, %183, %cst_56 [1] : vector<16x32xf32> to vector<16xf32>
      %187 = vector.shape_cast %186 : vector<16xf32> to vector<16x1xf32>
      %cst_57 = arith.constant 3.200000e+01 : f32
      %188 = vector.broadcast %cst_57 : f32 to vector<16x1xf32>
      %189 = arith.divf %187, %188 : vector<16x1xf32>
      %190 = arith.mulf %183, %183 : vector<16x32xf32>
      %cst_58 = arith.constant dense<0.000000e+00> : vector<16xf32>
      %191 = vector.multi_reduction <add>, %190, %cst_58 [1] : vector<16x32xf32> to vector<16xf32>
      %192 = vector.shape_cast %191 : vector<16xf32> to vector<16x1xf32>
      %cst_59 = arith.constant 3.200000e+01 : f32
      %193 = vector.broadcast %cst_59 : f32 to vector<16x1xf32>
      %194 = arith.divf %192, %193 : vector<16x1xf32>
      %195 = arith.mulf %189, %189 : vector<16x1xf32>
      %196 = arith.subf %194, %195 : vector<16x1xf32>
      %197 = vector.broadcast %189 : vector<16x1xf32> to vector<16x32xf32>
      %198 = arith.subf %183, %197 : vector<16x32xf32>
      %cst_60 = arith.constant 9.99999974E-6 : f32
      %199 = vector.broadcast %cst_60 : f32 to vector<16x1xf32>
      %200 = arith.addf %196, %199 : vector<16x1xf32>
      %201 = math.rsqrt %200 : vector<16x1xf32>
      %202 = vector.broadcast %201 : vector<16x1xf32> to vector<16x32xf32>
      %203 = arith.mulf %198, %202 : vector<16x32xf32>
      %204 = vector.broadcast %184 : vector<1x32xf32> to vector<16x32xf32>
      %205 = arith.mulf %203, %204 : vector<16x32xf32>
      %206 = vector.broadcast %185 : vector<1x32xf32> to vector<16x32xf32>
      %207 = arith.addf %205, %206 : vector<16x32xf32>
      %cst_61 = arith.constant dense<0.000000e+00> : vector<16x32xf32>
      %208 = tpu.matmul %207, %18, %cst_61 {dimension_numbers = #tpu.dot_dimension_numbers<[1], [0], [0], [1], [0, 0, 1, 1], [], []>} : vector<16x32xf32>, vector<32x32xf32>, vector<16x32xf32> -> vector<16x32xf32>
      %209 = vector.broadcast %26 : vector<1x32xf32> to vector<16x32xf32>
      %210 = arith.addf %208, %209 : vector<16x32xf32>
      %cst_62 = arith.constant dense<0.000000e+00> : vector<16x64xf32>
      %211 = tpu.matmul %32, %19, %cst_62 {dimension_numbers = #tpu.dot_dimension_numbers<[1], [0], [0], [1], [0, 0, 1, 1], [], []>} : vector<16x32xf32>, vector<32x64xf32>, vector<16x64xf32> -> vector<16x64xf32>
      %212 = vector.broadcast %27 : vector<1x64xf32> to vector<16x64xf32>
      %213 = arith.addf %211, %212 : vector<16x64xf32>
      %214 = vector.extract_strided_slice %213 {offsets = [0, 0], sizes = [16, 32], strides = [1, 1]} : vector<16x64xf32> to vector<16x32xf32>
      %215 = vector.extract_strided_slice %213 {offsets = [0, 32], sizes = [16, 32], strides = [1, 1]} : vector<16x64xf32> to vector<16x32xf32>
      %216 = vector.extract_strided_slice %210 {offsets = [0, 0], sizes = [8, 32], strides = [1, 1]} : vector<16x32xf32> to vector<8x32xf32>
      %217 = vector.extract_strided_slice %214 {offsets = [0, 0], sizes = [8, 32], strides = [1, 1]} : vector<16x32xf32> to vector<8x32xf32>
      %218 = vector.extract_strided_slice %215 {offsets = [0, 0], sizes = [8, 32], strides = [1, 1]} : vector<16x32xf32> to vector<8x32xf32>
      %c0_63 = arith.constant 0 : index
      %c0_64 = arith.constant 0 : index
      %c0_65 = arith.constant 0 : index
      %219 = vector.load %arg5[%c0_63, %c0_64, %c0_65] : memref<2x1x8xf32, #tpu.memory_space<vmem>>, vector<1x1x8xf32>
      %220 = vector.shape_cast %219 : vector<1x1x8xf32> to vector<1x8xf32>
      %221 = vector.extract_strided_slice %216 {offsets = [0, 0], sizes = [8, 8], strides = [1, 1]} : vector<8x32xf32> to vector<8x8xf32>
      %222 = vector.extract_strided_slice %217 {offsets = [0, 0], sizes = [8, 8], strides = [1, 1]} : vector<8x32xf32> to vector<8x8xf32>
      %223 = vector.extract_strided_slice %218 {offsets = [0, 0], sizes = [8, 8], strides = [1, 1]} : vector<8x32xf32> to vector<8x8xf32>
      "tpu.trace_start"() <{level = 10 : i32, message = "qd,kd->qk"}> : () -> ()
      %cst_66 = arith.constant dense<0.000000e+00> : vector<8x8xf32>
      %224 = tpu.matmul %221, %222, %cst_66 {dimension_numbers = #tpu.dot_dimension_numbers<[1], [1], [0], [0], [0, 0, 1, 0], [], []>} : vector<8x8xf32>, vector<8x8xf32>, vector<8x8xf32> -> vector<8x8xf32>
      "tpu.trace_stop"() : () -> ()
      %225 = vector.broadcast %220 : vector<1x8xf32> to vector<8x8xf32>
      %226 = arith.addf %224, %225 : vector<8x8xf32>
      %cst_67 = arith.constant dense<0xFF800000> : vector<8xf32>
      %227 = vector.multi_reduction <maximumf>, %226, %cst_67 [1] : vector<8x8xf32> to vector<8xf32>
      %228 = vector.shape_cast %227 : vector<8xf32> to vector<8x1xf32>
      %229 = vector.broadcast %228 : vector<8x1xf32> to vector<8x8xf32>
      %230 = arith.subf %226, %229 : vector<8x8xf32>
      %231 = math.exp %230 : vector<8x8xf32>
      %cst_68 = arith.constant dense<0.000000e+00> : vector<8xf32>
      %232 = vector.multi_reduction <add>, %231, %cst_68 [1] : vector<8x8xf32> to vector<8xf32>
      %233 = vector.shape_cast %232 : vector<8xf32> to vector<8x1xf32>
      %234 = tpu.reciprocal %233 : vector<8x1xf32> -> vector<8x1xf32>
      %235 = vector.broadcast %234 : vector<8x1xf32> to vector<8x8xf32>
      %236 = arith.mulf %231, %235 : vector<8x8xf32>
      %cst_69 = arith.constant dense<0.000000e+00> : vector<8x8xf32>
      %237 = tpu.matmul %236, %223, %cst_69 {dimension_numbers = #tpu.dot_dimension_numbers<[1], [0], [0], [1], [0, 0, 1, 1], [], []>} : vector<8x8xf32>, vector<8x8xf32>, vector<8x8xf32> -> vector<8x8xf32>
      %238 = vector.extract_strided_slice %216 {offsets = [0, 8], sizes = [8, 8], strides = [1, 1]} : vector<8x32xf32> to vector<8x8xf32>
      %239 = vector.extract_strided_slice %217 {offsets = [0, 8], sizes = [8, 8], strides = [1, 1]} : vector<8x32xf32> to vector<8x8xf32>
      %240 = vector.extract_strided_slice %218 {offsets = [0, 8], sizes = [8, 8], strides = [1, 1]} : vector<8x32xf32> to vector<8x8xf32>
      "tpu.trace_start"() <{level = 10 : i32, message = "qd,kd->qk"}> : () -> ()
      %cst_70 = arith.constant dense<0.000000e+00> : vector<8x8xf32>
      %241 = tpu.matmul %238, %239, %cst_70 {dimension_numbers = #tpu.dot_dimension_numbers<[1], [1], [0], [0], [0, 0, 1, 0], [], []>} : vector<8x8xf32>, vector<8x8xf32>, vector<8x8xf32> -> vector<8x8xf32>
      "tpu.trace_stop"() : () -> ()
      %242 = vector.broadcast %220 : vector<1x8xf32> to vector<8x8xf32>
      %243 = arith.addf %241, %242 : vector<8x8xf32>
      %cst_71 = arith.constant dense<0xFF800000> : vector<8xf32>
      %244 = vector.multi_reduction <maximumf>, %243, %cst_71 [1] : vector<8x8xf32> to vector<8xf32>
      %245 = vector.shape_cast %244 : vector<8xf32> to vector<8x1xf32>
      %246 = vector.broadcast %245 : vector<8x1xf32> to vector<8x8xf32>
      %247 = arith.subf %243, %246 : vector<8x8xf32>
      %248 = math.exp %247 : vector<8x8xf32>
      %cst_72 = arith.constant dense<0.000000e+00> : vector<8xf32>
      %249 = vector.multi_reduction <add>, %248, %cst_72 [1] : vector<8x8xf32> to vector<8xf32>
      %250 = vector.shape_cast %249 : vector<8xf32> to vector<8x1xf32>
      %251 = tpu.reciprocal %250 : vector<8x1xf32> -> vector<8x1xf32>
      %252 = vector.broadcast %251 : vector<8x1xf32> to vector<8x8xf32>
      %253 = arith.mulf %248, %252 : vector<8x8xf32>
      %cst_73 = arith.constant dense<0.000000e+00> : vector<8x8xf32>
      %254 = tpu.matmul %253, %240, %cst_73 {dimension_numbers = #tpu.dot_dimension_numbers<[1], [0], [0], [1], [0, 0, 1, 1], [], []>} : vector<8x8xf32>, vector<8x8xf32>, vector<8x8xf32> -> vector<8x8xf32>
      %255 = vector.extract_strided_slice %216 {offsets = [0, 16], sizes = [8, 8], strides = [1, 1]} : vector<8x32xf32> to vector<8x8xf32>
      %256 = vector.extract_strided_slice %217 {offsets = [0, 16], sizes = [8, 8], strides = [1, 1]} : vector<8x32xf32> to vector<8x8xf32>
      %257 = vector.extract_strided_slice %218 {offsets = [0, 16], sizes = [8, 8], strides = [1, 1]} : vector<8x32xf32> to vector<8x8xf32>
      "tpu.trace_start"() <{level = 10 : i32, message = "qd,kd->qk"}> : () -> ()
      %cst_74 = arith.constant dense<0.000000e+00> : vector<8x8xf32>
      %258 = tpu.matmul %255, %256, %cst_74 {dimension_numbers = #tpu.dot_dimension_numbers<[1], [1], [0], [0], [0, 0, 1, 0], [], []>} : vector<8x8xf32>, vector<8x8xf32>, vector<8x8xf32> -> vector<8x8xf32>
      "tpu.trace_stop"() : () -> ()
      %259 = vector.broadcast %220 : vector<1x8xf32> to vector<8x8xf32>
      %260 = arith.addf %258, %259 : vector<8x8xf32>
      %cst_75 = arith.constant dense<0xFF800000> : vector<8xf32>
      %261 = vector.multi_reduction <maximumf>, %260, %cst_75 [1] : vector<8x8xf32> to vector<8xf32>
      %262 = vector.shape_cast %261 : vector<8xf32> to vector<8x1xf32>
      %263 = vector.broadcast %262 : vector<8x1xf32> to vector<8x8xf32>
      %264 = arith.subf %260, %263 : vector<8x8xf32>
      %265 = math.exp %264 : vector<8x8xf32>
      %cst_76 = arith.constant dense<0.000000e+00> : vector<8xf32>
      %266 = vector.multi_reduction <add>, %265, %cst_76 [1] : vector<8x8xf32> to vector<8xf32>
      %267 = vector.shape_cast %266 : vector<8xf32> to vector<8x1xf32>
      %268 = tpu.reciprocal %267 : vector<8x1xf32> -> vector<8x1xf32>
      %269 = vector.broadcast %268 : vector<8x1xf32> to vector<8x8xf32>
      %270 = arith.mulf %265, %269 : vector<8x8xf32>
      %cst_77 = arith.constant dense<0.000000e+00> : vector<8x8xf32>
      %271 = tpu.matmul %270, %257, %cst_77 {dimension_numbers = #tpu.dot_dimension_numbers<[1], [0], [0], [1], [0, 0, 1, 1], [], []>} : vector<8x8xf32>, vector<8x8xf32>, vector<8x8xf32> -> vector<8x8xf32>
      %272 = vector.extract_strided_slice %216 {offsets = [0, 24], sizes = [8, 8], strides = [1, 1]} : vector<8x32xf32> to vector<8x8xf32>
      %273 = vector.extract_strided_slice %217 {offsets = [0, 24], sizes = [8, 8], strides = [1, 1]} : vector<8x32xf32> to vector<8x8xf32>
      %274 = vector.extract_strided_slice %218 {offsets = [0, 24], sizes = [8, 8], strides = [1, 1]} : vector<8x32xf32> to vector<8x8xf32>
      "tpu.trace_start"() <{level = 10 : i32, message = "qd,kd->qk"}> : () -> ()
      %cst_78 = arith.constant dense<0.000000e+00> : vector<8x8xf32>
      %275 = tpu.matmul %272, %273, %cst_78 {dimension_numbers = #tpu.dot_dimension_numbers<[1], [1], [0], [0], [0, 0, 1, 0], [], []>} : vector<8x8xf32>, vector<8x8xf32>, vector<8x8xf32> -> vector<8x8xf32>
      "tpu.trace_stop"() : () -> ()
      %276 = vector.broadcast %220 : vector<1x8xf32> to vector<8x8xf32>
      %277 = arith.addf %275, %276 : vector<8x8xf32>
      %cst_79 = arith.constant dense<0xFF800000> : vector<8xf32>
      %278 = vector.multi_reduction <maximumf>, %277, %cst_79 [1] : vector<8x8xf32> to vector<8xf32>
      %279 = vector.shape_cast %278 : vector<8xf32> to vector<8x1xf32>
      %280 = vector.broadcast %279 : vector<8x1xf32> to vector<8x8xf32>
      %281 = arith.subf %277, %280 : vector<8x8xf32>
      %282 = math.exp %281 : vector<8x8xf32>
      %cst_80 = arith.constant dense<0.000000e+00> : vector<8xf32>
      %283 = vector.multi_reduction <add>, %282, %cst_80 [1] : vector<8x8xf32> to vector<8xf32>
      %284 = vector.shape_cast %283 : vector<8xf32> to vector<8x1xf32>
      %285 = tpu.reciprocal %284 : vector<8x1xf32> -> vector<8x1xf32>
      %286 = vector.broadcast %285 : vector<8x1xf32> to vector<8x8xf32>
      %287 = arith.mulf %282, %286 : vector<8x8xf32>
      %cst_81 = arith.constant dense<0.000000e+00> : vector<8x8xf32>
      %288 = tpu.matmul %287, %274, %cst_81 {dimension_numbers = #tpu.dot_dimension_numbers<[1], [0], [0], [1], [0, 0, 1, 1], [], []>} : vector<8x8xf32>, vector<8x8xf32>, vector<8x8xf32> -> vector<8x8xf32>
      %289 = tpu.concatenate %237, %254, %271, %288 in 1 : vector<8x8xf32>, vector<8x8xf32>, vector<8x8xf32>, vector<8x8xf32> -> vector<8x32xf32>
      %290 = vector.extract_strided_slice %210 {offsets = [8, 0], sizes = [8, 32], strides = [1, 1]} : vector<16x32xf32> to vector<8x32xf32>
      %291 = vector.extract_strided_slice %214 {offsets = [8, 0], sizes = [8, 32], strides = [1, 1]} : vector<16x32xf32> to vector<8x32xf32>
      %292 = vector.extract_strided_slice %215 {offsets = [8, 0], sizes = [8, 32], strides = [1, 1]} : vector<16x32xf32> to vector<8x32xf32>
      %c1_82 = arith.constant 1 : index
      %c0_83 = arith.constant 0 : index
      %c0_84 = arith.constant 0 : index
      %293 = vector.load %arg5[%c1_82, %c0_83, %c0_84] : memref<2x1x8xf32, #tpu.memory_space<vmem>>, vector<1x1x8xf32>
      %294 = vector.shape_cast %293 : vector<1x1x8xf32> to vector<1x8xf32>
      %295 = vector.extract_strided_slice %290 {offsets = [0, 0], sizes = [8, 8], strides = [1, 1]} : vector<8x32xf32> to vector<8x8xf32>
      %296 = vector.extract_strided_slice %291 {offsets = [0, 0], sizes = [8, 8], strides = [1, 1]} : vector<8x32xf32> to vector<8x8xf32>
      %297 = vector.extract_strided_slice %292 {offsets = [0, 0], sizes = [8, 8], strides = [1, 1]} : vector<8x32xf32> to vector<8x8xf32>
      "tpu.trace_start"() <{level = 10 : i32, message = "qd,kd->qk"}> : () -> ()
      %cst_85 = arith.constant dense<0.000000e+00> : vector<8x8xf32>
      %298 = tpu.matmul %295, %296, %cst_85 {dimension_numbers = #tpu.dot_dimension_numbers<[1], [1], [0], [0], [0, 0, 1, 0], [], []>} : vector<8x8xf32>, vector<8x8xf32>, vector<8x8xf32> -> vector<8x8xf32>
      "tpu.trace_stop"() : () -> ()
      %299 = vector.broadcast %294 : vector<1x8xf32> to vector<8x8xf32>
      %300 = arith.addf %298, %299 : vector<8x8xf32>
      %cst_86 = arith.constant dense<0xFF800000> : vector<8xf32>
      %301 = vector.multi_reduction <maximumf>, %300, %cst_86 [1] : vector<8x8xf32> to vector<8xf32>
      %302 = vector.shape_cast %301 : vector<8xf32> to vector<8x1xf32>
      %303 = vector.broadcast %302 : vector<8x1xf32> to vector<8x8xf32>
      %304 = arith.subf %300, %303 : vector<8x8xf32>
      %305 = math.exp %304 : vector<8x8xf32>
      %cst_87 = arith.constant dense<0.000000e+00> : vector<8xf32>
      %306 = vector.multi_reduction <add>, %305, %cst_87 [1] : vector<8x8xf32> to vector<8xf32>
      %307 = vector.shape_cast %306 : vector<8xf32> to vector<8x1xf32>
      %308 = tpu.reciprocal %307 : vector<8x1xf32> -> vector<8x1xf32>
      %309 = vector.broadcast %308 : vector<8x1xf32> to vector<8x8xf32>
      %310 = arith.mulf %305, %309 : vector<8x8xf32>
      %cst_88 = arith.constant dense<0.000000e+00> : vector<8x8xf32>
      %311 = tpu.matmul %310, %297, %cst_88 {dimension_numbers = #tpu.dot_dimension_numbers<[1], [0], [0], [1], [0, 0, 1, 1], [], []>} : vector<8x8xf32>, vector<8x8xf32>, vector<8x8xf32> -> vector<8x8xf32>
      %312 = vector.extract_strided_slice %290 {offsets = [0, 8], sizes = [8, 8], strides = [1, 1]} : vector<8x32xf32> to vector<8x8xf32>
      %313 = vector.extract_strided_slice %291 {offsets = [0, 8], sizes = [8, 8], strides = [1, 1]} : vector<8x32xf32> to vector<8x8xf32>
      %314 = vector.extract_strided_slice %292 {offsets = [0, 8], sizes = [8, 8], strides = [1, 1]} : vector<8x32xf32> to vector<8x8xf32>
      "tpu.trace_start"() <{level = 10 : i32, message = "qd,kd->qk"}> : () -> ()
      %cst_89 = arith.constant dense<0.000000e+00> : vector<8x8xf32>
      %315 = tpu.matmul %312, %313, %cst_89 {dimension_numbers = #tpu.dot_dimension_numbers<[1], [1], [0], [0], [0, 0, 1, 0], [], []>} : vector<8x8xf32>, vector<8x8xf32>, vector<8x8xf32> -> vector<8x8xf32>
      "tpu.trace_stop"() : () -> ()
      %316 = vector.broadcast %294 : vector<1x8xf32> to vector<8x8xf32>
      %317 = arith.addf %315, %316 : vector<8x8xf32>
      %cst_90 = arith.constant dense<0xFF800000> : vector<8xf32>
      %318 = vector.multi_reduction <maximumf>, %317, %cst_90 [1] : vector<8x8xf32> to vector<8xf32>
      %319 = vector.shape_cast %318 : vector<8xf32> to vector<8x1xf32>
      %320 = vector.broadcast %319 : vector<8x1xf32> to vector<8x8xf32>
      %321 = arith.subf %317, %320 : vector<8x8xf32>
      %322 = math.exp %321 : vector<8x8xf32>
      %cst_91 = arith.constant dense<0.000000e+00> : vector<8xf32>
      %323 = vector.multi_reduction <add>, %322, %cst_91 [1] : vector<8x8xf32> to vector<8xf32>
      %324 = vector.shape_cast %323 : vector<8xf32> to vector<8x1xf32>
      %325 = tpu.reciprocal %324 : vector<8x1xf32> -> vector<8x1xf32>
      %326 = vector.broadcast %325 : vector<8x1xf32> to vector<8x8xf32>
      %327 = arith.mulf %322, %326 : vector<8x8xf32>
      %cst_92 = arith.constant dense<0.000000e+00> : vector<8x8xf32>
      %328 = tpu.matmul %327, %314, %cst_92 {dimension_numbers = #tpu.dot_dimension_numbers<[1], [0], [0], [1], [0, 0, 1, 1], [], []>} : vector<8x8xf32>, vector<8x8xf32>, vector<8x8xf32> -> vector<8x8xf32>
      %329 = vector.extract_strided_slice %290 {offsets = [0, 16], sizes = [8, 8], strides = [1, 1]} : vector<8x32xf32> to vector<8x8xf32>
      %330 = vector.extract_strided_slice %291 {offsets = [0, 16], sizes = [8, 8], strides = [1, 1]} : vector<8x32xf32> to vector<8x8xf32>
      %331 = vector.extract_strided_slice %292 {offsets = [0, 16], sizes = [8, 8], strides = [1, 1]} : vector<8x32xf32> to vector<8x8xf32>
      "tpu.trace_start"() <{level = 10 : i32, message = "qd,kd->qk"}> : () -> ()
      %cst_93 = arith.constant dense<0.000000e+00> : vector<8x8xf32>
      %332 = tpu.matmul %329, %330, %cst_93 {dimension_numbers = #tpu.dot_dimension_numbers<[1], [1], [0], [0], [0, 0, 1, 0], [], []>} : vector<8x8xf32>, vector<8x8xf32>, vector<8x8xf32> -> vector<8x8xf32>
      "tpu.trace_stop"() : () -> ()
      %333 = vector.broadcast %294 : vector<1x8xf32> to vector<8x8xf32>
      %334 = arith.addf %332, %333 : vector<8x8xf32>
      %cst_94 = arith.constant dense<0xFF800000> : vector<8xf32>
      %335 = vector.multi_reduction <maximumf>, %334, %cst_94 [1] : vector<8x8xf32> to vector<8xf32>
      %336 = vector.shape_cast %335 : vector<8xf32> to vector<8x1xf32>
      %337 = vector.broadcast %336 : vector<8x1xf32> to vector<8x8xf32>
      %338 = arith.subf %334, %337 : vector<8x8xf32>
      %339 = math.exp %338 : vector<8x8xf32>
      %cst_95 = arith.constant dense<0.000000e+00> : vector<8xf32>
      %340 = vector.multi_reduction <add>, %339, %cst_95 [1] : vector<8x8xf32> to vector<8xf32>
      %341 = vector.shape_cast %340 : vector<8xf32> to vector<8x1xf32>
      %342 = tpu.reciprocal %341 : vector<8x1xf32> -> vector<8x1xf32>
      %343 = vector.broadcast %342 : vector<8x1xf32> to vector<8x8xf32>
      %344 = arith.mulf %339, %343 : vector<8x8xf32>
      %cst_96 = arith.constant dense<0.000000e+00> : vector<8x8xf32>
      %345 = tpu.matmul %344, %331, %cst_96 {dimension_numbers = #tpu.dot_dimension_numbers<[1], [0], [0], [1], [0, 0, 1, 1], [], []>} : vector<8x8xf32>, vector<8x8xf32>, vector<8x8xf32> -> vector<8x8xf32>
      %346 = vector.extract_strided_slice %290 {offsets = [0, 24], sizes = [8, 8], strides = [1, 1]} : vector<8x32xf32> to vector<8x8xf32>
      %347 = vector.extract_strided_slice %291 {offsets = [0, 24], sizes = [8, 8], strides = [1, 1]} : vector<8x32xf32> to vector<8x8xf32>
      %348 = vector.extract_strided_slice %292 {offsets = [0, 24], sizes = [8, 8], strides = [1, 1]} : vector<8x32xf32> to vector<8x8xf32>
      "tpu.trace_start"() <{level = 10 : i32, message = "qd,kd->qk"}> : () -> ()
      %cst_97 = arith.constant dense<0.000000e+00> : vector<8x8xf32>
      %349 = tpu.matmul %346, %347, %cst_97 {dimension_numbers = #tpu.dot_dimension_numbers<[1], [1], [0], [0], [0, 0, 1, 0], [], []>} : vector<8x8xf32>, vector<8x8xf32>, vector<8x8xf32> -> vector<8x8xf32>
      "tpu.trace_stop"() : () -> ()
      %350 = vector.broadcast %294 : vector<1x8xf32> to vector<8x8xf32>
      %351 = arith.addf %349, %350 : vector<8x8xf32>
      %cst_98 = arith.constant dense<0xFF800000> : vector<8xf32>
      %352 = vector.multi_reduction <maximumf>, %351, %cst_98 [1] : vector<8x8xf32> to vector<8xf32>
      %353 = vector.shape_cast %352 : vector<8xf32> to vector<8x1xf32>
      %354 = vector.broadcast %353 : vector<8x1xf32> to vector<8x8xf32>
      %355 = arith.subf %351, %354 : vector<8x8xf32>
      %356 = math.exp %355 : vector<8x8xf32>
      %cst_99 = arith.constant dense<0.000000e+00> : vector<8xf32>
      %357 = vector.multi_reduction <add>, %356, %cst_99 [1] : vector<8x8xf32> to vector<8xf32>
      %358 = vector.shape_cast %357 : vector<8xf32> to vector<8x1xf32>
      %359 = tpu.reciprocal %358 : vector<8x1xf32> -> vector<8x1xf32>
      %360 = vector.broadcast %359 : vector<8x1xf32> to vector<8x8xf32>
      %361 = arith.mulf %356, %360 : vector<8x8xf32>
      %cst_100 = arith.constant dense<0.000000e+00> : vector<8x8xf32>
      %362 = tpu.matmul %361, %348, %cst_100 {dimension_numbers = #tpu.dot_dimension_numbers<[1], [0], [0], [1], [0, 0, 1, 1], [], []>} : vector<8x8xf32>, vector<8x8xf32>, vector<8x8xf32> -> vector<8x8xf32>
      %363 = tpu.concatenate %311, %328, %345, %362 in 1 : vector<8x8xf32>, vector<8x8xf32>, vector<8x8xf32>, vector<8x8xf32> -> vector<8x32xf32>
      %364 = tpu.concatenate %289, %363 in 0 : vector<8x32xf32>, vector<8x32xf32> -> vector<16x32xf32>
      %cst_101 = arith.constant dense<0.000000e+00> : vector<16x32xf32>
      %365 = tpu.matmul %364, %20, %cst_101 {dimension_numbers = #tpu.dot_dimension_numbers<[1], [0], [0], [1], [0, 0, 1, 1], [], []>} : vector<16x32xf32>, vector<32x32xf32>, vector<16x32xf32> -> vector<16x32xf32>
      %366 = vector.broadcast %28 : vector<1x32xf32> to vector<16x32xf32>
      %367 = arith.addf %365, %366 : vector<16x32xf32>
      %368 = arith.addf %207, %367 : vector<16x32xf32>
      %369 = vector.extract_strided_slice %15 {offsets = [9, 0], sizes = [1, 32], strides = [1, 1]} : vector<13x96xf32> to vector<1x32xf32>
      %370 = vector.extract_strided_slice %15 {offsets = [10, 0], sizes = [1, 32], strides = [1, 1]} : vector<13x96xf32> to vector<1x32xf32>
      %cst_102 = arith.constant dense<0.000000e+00> : vector<16xf32>
      %371 = vector.multi_reduction <add>, %368, %cst_102 [1] : vector<16x32xf32> to vector<16xf32>
      %372 = vector.shape_cast %371 : vector<16xf32> to vector<16x1xf32>
      %cst_103 = arith.constant 3.200000e+01 : f32
      %373 = vector.broadcast %cst_103 : f32 to vector<16x1xf32>
      %374 = arith.divf %372, %373 : vector<16x1xf32>
      %375 = arith.mulf %368, %368 : vector<16x32xf32>
      %cst_104 = arith.constant dense<0.000000e+00> : vector<16xf32>
      %376 = vector.multi_reduction <add>, %375, %cst_104 [1] : vector<16x32xf32> to vector<16xf32>
      %377 = vector.shape_cast %376 : vector<16xf32> to vector<16x1xf32>
      %cst_105 = arith.constant 3.200000e+01 : f32
      %378 = vector.broadcast %cst_105 : f32 to vector<16x1xf32>
      %379 = arith.divf %377, %378 : vector<16x1xf32>
      %380 = arith.mulf %374, %374 : vector<16x1xf32>
      %381 = arith.subf %379, %380 : vector<16x1xf32>
      %382 = vector.broadcast %374 : vector<16x1xf32> to vector<16x32xf32>
      %383 = arith.subf %368, %382 : vector<16x32xf32>
      %cst_106 = arith.constant 9.99999974E-6 : f32
      %384 = vector.broadcast %cst_106 : f32 to vector<16x1xf32>
      %385 = arith.addf %381, %384 : vector<16x1xf32>
      %386 = math.rsqrt %385 : vector<16x1xf32>
      %387 = vector.broadcast %386 : vector<16x1xf32> to vector<16x32xf32>
      %388 = arith.mulf %383, %387 : vector<16x32xf32>
      %389 = vector.broadcast %369 : vector<1x32xf32> to vector<16x32xf32>
      %390 = arith.mulf %388, %389 : vector<16x32xf32>
      %391 = vector.broadcast %370 : vector<1x32xf32> to vector<16x32xf32>
      %392 = arith.addf %390, %391 : vector<16x32xf32>
      %cst_107 = arith.constant dense<0.000000e+00> : vector<16x64xf32>
      %393 = tpu.matmul %392, %21, %cst_107 {dimension_numbers = #tpu.dot_dimension_numbers<[1], [0], [0], [1], [0, 0, 1, 1], [], []>} : vector<16x32xf32>, vector<32x64xf32>, vector<16x64xf32> -> vector<16x64xf32>
      %394 = vector.broadcast %29 : vector<1x64xf32> to vector<16x64xf32>
      %395 = arith.addf %393, %394 : vector<16x64xf32>
      %cst_108 = arith.constant 0.000000e+00 : f32
      %396 = vector.broadcast %cst_108 : f32 to vector<16x64xf32>
      %397 = arith.maximumf %395, %396 : vector<16x64xf32>
      %cst_109 = arith.constant dense<0.000000e+00> : vector<16x32xf32>
      %398 = tpu.matmul %397, %23, %cst_109 {dimension_numbers = #tpu.dot_dimension_numbers<[1], [0], [0], [1], [0, 0, 1, 1], [], []>} : vector<16x64xf32>, vector<64x32xf32>, vector<16x32xf32> -> vector<16x32xf32>
      %399 = vector.broadcast %30 : vector<1x32xf32> to vector<16x32xf32>
      %400 = arith.addf %398, %399 : vector<16x32xf32>
      %401 = arith.addf %392, %400 : vector<16x32xf32>
      %402 = vector.extract_strided_slice %15 {offsets = [11, 0], sizes = [1, 32], strides = [1, 1]} : vector<13x96xf32> to vector<1x32xf32>
      %403 = vector.extract_strided_slice %15 {offsets = [12, 0], sizes = [1, 32], strides = [1, 1]} : vector<13x96xf32> to vector<1x32xf32>
      %cst_110 = arith.constant dense<0.000000e+00> : vector<16xf32>
      %404 = vector.multi_reduction <add>, %401, %cst_110 [1] : vector<16x32xf32> to vector<16xf32>
      %405 = vector.shape_cast %404 : vector<16xf32> to vector<16x1xf32>
      %cst_111 = arith.constant 3.200000e+01 : f32
      %406 = vector.broadcast %cst_111 : f32 to vector<16x1xf32>
      %407 = arith.divf %405, %406 : vector<16x1xf32>
      %408 = arith.mulf %401, %401 : vector<16x32xf32>
      %cst_112 = arith.constant dense<0.000000e+00> : vector<16xf32>
      %409 = vector.multi_reduction <add>, %408, %cst_112 [1] : vector<16x32xf32> to vector<16xf32>
      %410 = vector.shape_cast %409 : vector<16xf32> to vector<16x1xf32>
      %cst_113 = arith.constant 3.200000e+01 : f32
      %411 = vector.broadcast %cst_113 : f32 to vector<16x1xf32>
      %412 = arith.divf %410, %411 : vector<16x1xf32>
      %413 = arith.mulf %407, %407 : vector<16x1xf32>
      %414 = arith.subf %412, %413 : vector<16x1xf32>
      %415 = vector.broadcast %407 : vector<16x1xf32> to vector<16x32xf32>
      %416 = arith.subf %401, %415 : vector<16x32xf32>
      %cst_114 = arith.constant 9.99999974E-6 : f32
      %417 = vector.broadcast %cst_114 : f32 to vector<16x1xf32>
      %418 = arith.addf %414, %417 : vector<16x1xf32>
      %419 = math.rsqrt %418 : vector<16x1xf32>
      %420 = vector.broadcast %419 : vector<16x1xf32> to vector<16x32xf32>
      %421 = arith.mulf %416, %420 : vector<16x32xf32>
      %422 = vector.broadcast %402 : vector<1x32xf32> to vector<16x32xf32>
      %423 = arith.mulf %421, %422 : vector<16x32xf32>
      %424 = vector.broadcast %403 : vector<1x32xf32> to vector<16x32xf32>
      %425 = arith.addf %423, %424 : vector<16x32xf32>
      %c0_115 = arith.constant 0 : index
      %c0_116 = arith.constant 0 : index
      %426 = vector.load %arg16[%c0_115, %c0_116] : memref<16x32xf32, #tpu.memory_space<vmem>>, vector<16x32xf32>
      tpu.vector_store %arg16[%c0_115, %c0_116], %425 {strides = array<i32>} : memref<16x32xf32, #tpu.memory_space<vmem>>, vector<16x32xf32>,
      %c3_i32 = arith.constant 3 : i32
      %427 = arith.cmpi eq, %arg0, %c3_i32 : i32
      %428 = arith.extui %427 : i1 to i32
      %c0_i32_117 = arith.constant 0 : i32
      %429 = arith.cmpi ne, %428, %c0_i32_117 : i32
      scf.if %429 {
        %c2 = arith.constant 2 : index
        %c0_118 = arith.constant 0 : index
        %430 = vector.load %arg6[%c2, %c0_118] : memref<4x32xf32, #tpu.memory_space<vmem>>, vector<1x32xf32>
        %c3 = arith.constant 3 : index
        %c0_119 = arith.constant 0 : index
        %431 = vector.load %arg6[%c3, %c0_119] : memref<4x32xf32, #tpu.memory_space<vmem>>, vector<1x32xf32>
        %cst_120 = arith.constant dense<0.000000e+00> : vector<16xf32>
        %432 = vector.multi_reduction <add>, %425, %cst_120 [1] : vector<16x32xf32> to vector<16xf32>
        %433 = vector.shape_cast %432 : vector<16xf32> to vector<16x1xf32>
        %cst_121 = arith.constant 3.200000e+01 : f32
        %434 = vector.broadcast %cst_121 : f32 to vector<16x1xf32>
        %435 = arith.divf %433, %434 : vector<16x1xf32>
        %436 = arith.mulf %425, %425 : vector<16x32xf32>
        %cst_122 = arith.constant dense<0.000000e+00> : vector<16xf32>
        %437 = vector.multi_reduction <add>, %436, %cst_122 [1] : vector<16x32xf32> to vector<16xf32>
        %438 = vector.shape_cast %437 : vector<16xf32> to vector<16x1xf32>
        %cst_123 = arith.constant 3.200000e+01 : f32
        %439 = vector.broadcast %cst_123 : f32 to vector<16x1xf32>
        %440 = arith.divf %438, %439 : vector<16x1xf32>
        %441 = arith.mulf %435, %435 : vector<16x1xf32>
        %442 = arith.subf %440, %441 : vector<16x1xf32>
        %443 = vector.broadcast %435 : vector<16x1xf32> to vector<16x32xf32>
        %444 = arith.subf %425, %443 : vector<16x32xf32>
        %cst_124 = arith.constant 9.99999974E-6 : f32
        %445 = vector.broadcast %cst_124 : f32 to vector<16x1xf32>
        %446 = arith.addf %442, %445 : vector<16x1xf32>
        %447 = math.rsqrt %446 : vector<16x1xf32>
        %448 = vector.broadcast %447 : vector<16x1xf32> to vector<16x32xf32>
        %449 = arith.mulf %444, %448 : vector<16x32xf32>
        %450 = vector.broadcast %430 : vector<1x32xf32> to vector<16x32xf32>
        %451 = arith.mulf %449, %450 : vector<16x32xf32>
        %452 = vector.broadcast %431 : vector<1x32xf32> to vector<16x32xf32>
        %453 = arith.addf %451, %452 : vector<16x32xf32>
        %c0_125 = arith.constant 0 : index
        %c0_126 = arith.constant 0 : index
        %454 = vector.load %arg7[%c0_125, %c0_126] : memref<33x128xf32, #tpu.memory_space<vmem>>, vector<33x128xf32>
        %455 = vector.extract_strided_slice %454 {offsets = [0, 0], sizes = [32, 128], strides = [1, 1]} : vector<33x128xf32> to vector<32x128xf32>
        %cst_127 = arith.constant dense<0.000000e+00> : vector<16x128xf32>
        %456 = tpu.matmul %453, %455, %cst_127 {dimension_numbers = #tpu.dot_dimension_numbers<[1], [0], [0], [1], [0, 0, 1, 1], [], []>} : vector<16x32xf32>, vector<32x128xf32>, vector<16x128xf32> -> vector<16x128xf32>
        %457 = vector.extract_strided_slice %454 {offsets = [32, 0], sizes = [1, 128], strides = [1, 1]} : vector<33x128xf32> to vector<1x128xf32>
        %458 = vector.broadcast %457 : vector<1x128xf32> to vector<16x128xf32>
        %459 = arith.addf %456, %458 : vector<16x128xf32>
        %c0_128 = arith.constant 0 : index
        %c0_129 = arith.constant 0 : index
        %460 = vector.load %arg14[%c0_128, %c0_129] : memref<16x128xf32, #tpu.memory_space<vmem>>, vector<16x128xf32>
        tpu.vector_store %arg14[%c0_128, %c0_129], %459 {strides = array<i32>} : memref<16x128xf32, #tpu.memory_space<vmem>>, vector<16x128xf32>,
      } else {
      }
    } else {
    }
    return
  }
  func.func @transform_0(%arg0: i32) -> (i32, i32) {
    %c0_i32 = arith.constant 0 : i32
    %c0_i32_0 = arith.constant 0 : i32
    %c0_i32_1 = arith.constant 0 : i32
    return %c0_i32, %c0_i32_0 : i32, i32
  }
  func.func @transform_1(%arg0: i32) -> (i32, i32) {
    %c0_i32 = arith.constant 0 : i32
    %c0_i32_0 = arith.constant 0 : i32
    %c0_i32_1 = arith.constant 0 : i32
    return %c0_i32, %c0_i32_0 : i32, i32
  }
  func.func @transform_2(%arg0: i32) -> (i32, i32, i32) {
    %c0_i32 = arith.constant 0 : i32
    %c0_i32_0 = arith.constant 0 : i32
    %c0_i32_1 = arith.constant 0 : i32
    %c0_i32_2 = arith.constant 0 : i32
    return %c0_i32, %c0_i32_0, %c0_i32_1 : i32, i32, i32
  }
  func.func @transform_3(%arg0: i32) -> (i32, i32, i32) {
    %c0_i32 = arith.constant 0 : i32
    %c0_i32_0 = arith.constant 0 : i32
    %c0_i32_1 = arith.constant 0 : i32
    %c0_i32_2 = arith.constant 0 : i32
    return %c0_i32, %c0_i32_0, %c0_i32_1 : i32, i32, i32
  }
  func.func @transform_4(%arg0: i32) -> (i32, i32, i32) {
    %c0_i32 = arith.constant 0 : i32
    %c0_i32_0 = arith.constant 0 : i32
    %c0_i32_1 = arith.constant 0 : i32
    %c0_i32_2 = arith.constant 0 : i32
    return %c0_i32, %c0_i32_0, %c0_i32_1 : i32, i32, i32
  }
  func.func @transform_5(%arg0: i32) -> (i32, i32) {
    %c0_i32 = arith.constant 0 : i32
    %c0_i32_0 = arith.constant 0 : i32
    %c0_i32_1 = arith.constant 0 : i32
    return %c0_i32, %c0_i32_0 : i32, i32
  }
  func.func @transform_6(%arg0: i32) -> (i32, i32) {
    %c0_i32 = arith.constant 0 : i32
    %c0_i32_0 = arith.constant 0 : i32
    %c0_i32_1 = arith.constant 0 : i32
    return %c0_i32, %c0_i32_0 : i32, i32
  }
  func.func @transform_7(%arg0: i32) -> (i32, i32, i32) {
    %c1_i32 = arith.constant 1 : i32
    %0 = arith.minsi %arg0, %c1_i32 : i32
    %c0_i32 = arith.constant 0 : i32
    %c0_i32_0 = arith.constant 0 : i32
    %c0_i32_1 = arith.constant 0 : i32
    return %0, %c0_i32, %c0_i32_0 : i32, i32, i32
  }
  func.func @transform_8(%arg0: i32) -> (i32, i32, i32) {
    %c1_i32 = arith.constant 1 : i32
    %0 = arith.minsi %arg0, %c1_i32 : i32
    %c0_i32 = arith.constant 0 : i32
    %c0_i32_0 = arith.constant 0 : i32
    %c0_i32_1 = arith.constant 0 : i32
    return %0, %c0_i32, %c0_i32_0 : i32, i32, i32
  }
  func.func @transform_9(%arg0: i32) -> (i32, i32, i32) {
    %c1_i32 = arith.constant 1 : i32
    %0 = arith.minsi %arg0, %c1_i32 : i32
    %c0_i32 = arith.constant 0 : i32
    %c0_i32_0 = arith.constant 0 : i32
    %c0_i32_1 = arith.constant 0 : i32
    return %0, %c0_i32, %c0_i32_0 : i32, i32, i32
  }
  func.func @transform_10(%arg0: i32) -> (i32, i32, i32) {
    %c2_i32 = arith.constant 2 : i32
    %0 = arith.subi %arg0, %c2_i32 : i32
    %c0_i32 = arith.constant 0 : i32
    %1 = arith.maxsi %0, %c0_i32 : i32
    %c0_i32_0 = arith.constant 0 : i32
    %c0_i32_1 = arith.constant 0 : i32
    %c0_i32_2 = arith.constant 0 : i32
    return %1, %c0_i32_0, %c0_i32_1 : i32, i32, i32
  }
  func.func @transform_11(%arg0: i32) -> (i32, i32, i32) {
    %c2_i32 = arith.constant 2 : i32
    %0 = arith.subi %arg0, %c2_i32 : i32
    %c0_i32 = arith.constant 0 : i32
    %1 = arith.maxsi %0, %c0_i32 : i32
    %c0_i32_0 = arith.constant 0 : i32
    %c0_i32_1 = arith.constant 0 : i32
    %c0_i32_2 = arith.constant 0 : i32
    return %1, %c0_i32_0, %c0_i32_1 : i32, i32, i32
  }
  func.func @transform_12(%arg0: i32) -> (i32, i32, i32) {
    %c2_i32 = arith.constant 2 : i32
    %0 = arith.subi %arg0, %c2_i32 : i32
    %c0_i32 = arith.constant 0 : i32
    %1 = arith.maxsi %0, %c0_i32 : i32
    %c0_i32_0 = arith.constant 0 : i32
    %c0_i32_1 = arith.constant 0 : i32
    %c0_i32_2 = arith.constant 0 : i32
    return %1, %c0_i32_0, %c0_i32_1 : i32, i32, i32
  }
  func.func @transform_13(%arg0: i32) -> (i32, i32) {
    %c0_i32 = arith.constant 0 : i32
    %c0_i32_0 = arith.constant 0 : i32
    %c0_i32_1 = arith.constant 0 : i32
    return %c0_i32, %c0_i32_0 : i32, i32
  }
}

</mosaic_0001>

<llo_original>
// kernel: seq2seq_forward.1
$region0: #{seq2seq_forward.1}
  #allocation0 [shape = 'u32[]', space=smem, size = 0x4, offset = 0x4, fixed_abs, tag = 'smem constant byte address 0x4 - core index']
  #allocation1 [shape = 'u32[72,128]{1,0:T(1,128)}', space=vmem, size = 0x9000, scoped, tag = 'internal scratch']
  #allocation2 [shape = 'f32[16,32]{1,0:T(8,128)}', space=vmem, size = 0x2000, scoped, tag = 'scratch operand']
  #allocation3 [shape = 'f32[16,32]{1,0:T(8,128)}', space=vmem, size = 0x2000, scoped, tag = 'scratch operand']
  %s0 = inlined_call_operand.vmem [shape: f32[16,32], index: 0, kind: input, shape index: {}]
  %s1 = inlined_call_operand.vmem [shape: f32[16,32], index: 1, kind: input, shape index: {}]
  %s2 = inlined_call_operand.vmem [shape: f32[2,8,8], index: 2, kind: input, shape index: {}]
  %s3 = inlined_call_operand.vmem [shape: f32[2,8,8], index: 3, kind: input, shape index: {}]
  %s4 = inlined_call_operand.vmem [shape: f32[2,1,8], index: 4, kind: input, shape index: {}]
  %s5 = inlined_call_operand.vmem [shape: f32[4,32], index: 5, kind: input, shape index: {}]
  %s6 = inlined_call_operand.vmem [shape: f32[33,128], index: 6, kind: input, shape index: {}]
  %s7 = inlined_call_operand.vmem [shape: f32[2,32,192], index: 7, kind: input, shape index: {}]
  %s8 = inlined_call_operand.vmem [shape: f32[2,64,32], index: 8, kind: input, shape index: {}]
  %s9 = inlined_call_operand.vmem [shape: f32[2,8,96], index: 9, kind: input, shape index: {}]
  %s10 = inlined_call_operand.vmem [shape: f32[2,32,320], index: 10, kind: input, shape index: {}]
  %s11 = inlined_call_operand.vmem [shape: f32[2,64,32], index: 11, kind: input, shape index: {}]
  %s12 = inlined_call_operand.vmem [shape: f32[2,13,96], index: 12, kind: input, shape index: {}]
  %s13 = inlined_call_operand.vmem [shape: f32[16,128], index: 13, kind: output, shape index: {}]
  %s14 = sld [smem:[#allocation0]]
  $region105: #{seq2seq_forward.1} parent=0
    _
  %s16 = ssub.s32 1, %s14
  %s17 = scalar_select 0, %s16, %s14
  loop: start=0, step=1, limit=6
  $region2: #{seq2seq_forward.1} parent=0 // loop_pre_header
    _
  $region3: #{seq2seq_forward.1} parent=0 // loop_header
    %s19 = sphi 0, %s23
    %p20 = scmp.ge.s32.totalorder %s19, 6
    %s27 = sphi 0, %s27
    %s29 = sphi 0, %s27
    %s30 = sphi 0, %s29
    %s44 = sphi 0, %s30
    %s48 = sphi 0, %s48
    %s50 = sphi 0, %s48
    %s51 = sphi 0, %s50
    %s65 = sphi 0, %s51
    %s69 = sphi 0, %s69
    %s71 = sphi 0, %s69
    %s72 = sphi 0, %s71
    %s86 = sphi 0, %s72
    %s90 = sphi 0, %s90
    %s92 = sphi 0, %s90
    %s93 = sphi 0, %s92
    %s107 = sphi 0, %s93
    %s111 = sphi 0, %s111
    %s113 = sphi 0, %s111
    %s114 = sphi 0, %s113
    %s128 = sphi 0, %s114
    %s132 = sphi 0, %s132
    %s134 = sphi 0, %s132
    %s135 = sphi 0, %s134
    %s149 = sphi 0, %s135
    %s153 = sphi 0, %s153
    %s155 = sphi 0, %s153
    %s156 = sphi 0, %s155
    %s170 = sphi 0, %s156
    %s180 = sphi 0, %s182
    %s183 = sphi 0, %s180
    %s184 = sphi 0, %s183
    %s200 = sphi 0, %s184
    %s210 = sphi 0, %s212
    %s213 = sphi 0, %s210
    %s214 = sphi 0, %s213
    %s230 = sphi 0, %s214
    %s240 = sphi 0, %s242
    %s243 = sphi 0, %s240
    %s244 = sphi 0, %s243
    %s260 = sphi 0, %s244
    %s272 = sphi 0, %s274
    %s275 = sphi 0, %s272
    %s276 = sphi 0, %s275
    %s292 = sphi 0, %s276
    %s304 = sphi 0, %s306
    %s307 = sphi 0, %s304
    %s308 = sphi 0, %s307
    %s324 = sphi 0, %s308
    %s336 = sphi 0, %s338
    %s339 = sphi 0, %s336
    %s340 = sphi 0, %s339
    %s356 = sphi 0, %s340
    %s360 = sphi 0, %s360
    %s362 = sphi 0, %s360
    %s363 = sphi 0, %s362
    %s377 = sphi 0, %s363
  $region4: #{seq2seq_forward.1} parent=0 // loop_header_branch
    %22 = sbr.rel (%p20) target = $region8
  $region5: #{seq2seq_forward.1} parent=0 // loop_body
    %s24 = ssub.s32 %s19, 1
    %s25 = ssub.s32 %s19, 2
    %s26 = sadd.s32 %s19, 1
    %s28 = sadd.s32 %s27, 1
    %p31 = scmp.eq.s32.totalorder %s19, 3
    %p32 = scmp.ne.s32.totalorder %s27, %s29
    %p33 = scmp.eq.s32.totalorder %s19, 0
    %p34 = por %p32, %p33
    %p35 = scmp.ne.s32.totalorder %s27, %s29
    %p36 = scmp.eq.s32.totalorder %s24, 3
    %p37 = por %p35, %p36
    %p38 = scmp.ne.s32.totalorder %s29, %s30
    %p39 = scmp.eq.s32.totalorder %s24, 0
    %p40 = por %p38, %p39
    %p41 = scmp.ne.s32.totalorder %s29, %s30
    %p42 = scmp.eq.s32.totalorder %s25, 3
    %p43 = por %p41, %p42
    %p45 = scmp.ne.s32.totalorder %s30, %s44
    %p46 = scmp.eq.s32.totalorder %s25, 0
    %p47 = por %p45, %p46
    %s49 = sadd.s32 %s48, 1
    %p52 = scmp.eq.s32.totalorder %s19, 3
    %p53 = scmp.ne.s32.totalorder %s48, %s50
    %p54 = scmp.eq.s32.totalorder %s19, 0
    %p55 = por %p53, %p54
    %p56 = scmp.ne.s32.totalorder %s48, %s50
    %p57 = scmp.eq.s32.totalorder %s24, 3
    %p58 = por %p56, %p57
    %p59 = scmp.ne.s32.totalorder %s50, %s51
    %p60 = scmp.eq.s32.totalorder %s24, 0
    %p61 = por %p59, %p60
    %p62 = scmp.ne.s32.totalorder %s50, %s51
    %p63 = scmp.eq.s32.totalorder %s25, 3
    %p64 = por %p62, %p63
    %p66 = scmp.ne.s32.totalorder %s51, %s65
    %p67 = scmp.eq.s32.totalorder %s25, 0
    %p68 = por %p66, %p67
    %s70 = sadd.s32 %s69, 1
    %p73 = scmp.eq.s32.totalorder %s19, 3
    %p74 = scmp.ne.s32.totalorder %s69, %s71
    %p75 = scmp.eq.s32.totalorder %s19, 0
    %p76 = por %p74, %p75
    %p77 = scmp.ne.s32.totalorder %s69, %s71
    %p78 = scmp.eq.s32.totalorder %s24, 3
    %p79 = por %p77, %p78
    %p80 = scmp.ne.s32.totalorder %s71, %s72
    %p81 = scmp.eq.s32.totalorder %s24, 0
    %p82 = por %p80, %p81
    %p83 = scmp.ne.s32.totalorder %s71, %s72
    %p84 = scmp.eq.s32.totalorder %s25, 3
    %p85 = por %p83, %p84
    %p87 = scmp.ne.s32.totalorder %s72, %s86
    %p88 = scmp.eq.s32.totalorder %s25, 0
    %p89 = por %p87, %p88
    %s91 = sadd.s32 %s90, 1
    %p94 = scmp.eq.s32.totalorder %s19, 3
    %p95 = scmp.ne.s32.totalorder %s90, %s92
    %p96 = scmp.eq.s32.totalorder %s19, 0
    %p97 = por %p95, %p96
    %p98 = scmp.ne.s32.totalorder %s90, %s92
    %p99 = scmp.eq.s32.totalorder %s24, 3
    %p100 = por %p98, %p99
    %p101 = scmp.ne.s32.totalorder %s92, %s93
    %p102 = scmp.eq.s32.totalorder %s24, 0
    %p103 = por %p101, %p102
    %p104 = scmp.ne.s32.totalorder %s92, %s93
    %p105 = scmp.eq.s32.totalorder %s25, 3
    %p106 = por %p104, %p105
    %p108 = scmp.ne.s32.totalorder %s93, %s107
    %p109 = scmp.eq.s32.totalorder %s25, 0
    %p110 = por %p108, %p109
    %s112 = sadd.s32 %s111, 1
    %p115 = scmp.eq.s32.totalorder %s19, 3
    %p116 = scmp.ne.s32.totalorder %s111, %s113
    %p117 = scmp.eq.s32.totalorder %s19, 0
    %p118 = por %p116, %p117
    %p119 = scmp.ne.s32.totalorder %s111, %s113
    %p120 = scmp.eq.s32.totalorder %s24, 3
    %p121 = por %p119, %p120
    %p122 = scmp.ne.s32.totalorder %s113, %s114
    %p123 = scmp.eq.s32.totalorder %s24, 0
    %p124 = por %p122, %p123
    %p125 = scmp.ne.s32.totalorder %s113, %s114
    %p126 = scmp.eq.s32.totalorder %s25, 3
    %p127 = por %p125, %p126
    %p129 = scmp.ne.s32.totalorder %s114, %s128
    %p130 = scmp.eq.s32.totalorder %s25, 0
    %p131 = por %p129, %p130
    %s133 = sadd.s32 %s132, 1
    %p136 = scmp.eq.s32.totalorder %s19, 3
    %p137 = scmp.ne.s32.totalorder %s132, %s134
    %p138 = scmp.eq.s32.totalorder %s19, 0
    %p139 = por %p137, %p138
    %p140 = scmp.ne.s32.totalorder %s132, %s134
    %p141 = scmp.eq.s32.totalorder %s24, 3
    %p142 = por %p140, %p141
    %p143 = scmp.ne.s32.totalorder %s134, %s135
    %p144 = scmp.eq.s32.totalorder %s24, 0
    %p145 = por %p143, %p144
    %p146 = scmp.ne.s32.totalorder %s134, %s135
    %p147 = scmp.eq.s32.totalorder %s25, 3
    %p148 = por %p146, %p147
    %p150 = scmp.ne.s32.totalorder %s135, %s149
    %p151 = scmp.eq.s32.totalorder %s25, 0
    %p152 = por %p150, %p151
    %s154 = sadd.s32 %s153, 1
    %p157 = scmp.eq.s32.totalorder %s19, 3
    %p158 = scmp.ne.s32.totalorder %s153, %s155
    %p159 = scmp.eq.s32.totalorder %s19, 0
    %p160 = por %p158, %p159
    %p161 = scmp.ne.s32.totalorder %s153, %s155
    %p162 = scmp.eq.s32.totalorder %s24, 3
    %p163 = por %p161, %p162
    %p164 = scmp.ne.s32.totalorder %s155, %s156
    %p165 = scmp.eq.s32.totalorder %s24, 0
    %p166 = por %p164, %p165
    %p167 = scmp.ne.s32.totalorder %s155, %s156
    %p168 = scmp.eq.s32.totalorder %s25, 3
    %p169 = por %p167, %p168
    %p171 = scmp.ne.s32.totalorder %s156, %s170
    %p172 = scmp.eq.s32.totalorder %s25, 0
    %p173 = por %p171, %p172
    %p174 = scmp.lt.s32.totalorder %s19, 1
    %s175 = scalar_select %p174, %s19, 1
    %p176 = scmp.lt.s32.totalorder %s26, 1
    %s177 = scalar_select %p176, %s26, 1
    %s178 = ssub.s32 %s175, %s177
    %p179 = scmp.eq.s32.totalorder %s178, 0
    %s181 = sadd.s32 %s180, 1
    %s182 = scalar_select %p179, %s180, %s181
    %p185 = pneg %p179
    %p186 = scmp.eq.s32.totalorder %s19, 3
    %p187 = por %p185, %p186
    %p188 = scmp.ne.s32.totalorder %s180, %s183
    %p189 = scmp.eq.s32.totalorder %s19, 0
    %p190 = por %p188, %p189
    %p191 = scmp.ne.s32.totalorder %s180, %s183
    %p192 = scmp.eq.s32.totalorder %s24, 3
    %p193 = por %p191, %p192
    %p194 = scmp.ne.s32.totalorder %s183, %s184
    %p195 = scmp.eq.s32.totalorder %s24, 0
    %p196 = por %p194, %p195
    %p197 = scmp.ne.s32.totalorder %s183, %s184
    %p198 = scmp.eq.s32.totalorder %s25, 3
    %p199 = por %p197, %p198
    %p201 = scmp.ne.s32.totalorder %s184, %s200
    %p202 = scmp.eq.s32.totalorder %s25, 0
    %p203 = por %p201, %p202
    %p204 = scmp.lt.s32.totalorder %s19, 1
    %s205 = scalar_select %p204, %s19, 1
    %p206 = scmp.lt.s32.totalorder %s26, 1
    %s207 = scalar_select %p206, %s26, 1
    %s208 = ssub.s32 %s205, %s207
    %p209 = scmp.eq.s32.totalorder %s208, 0
    %s211 = sadd.s32 %s210, 1
    %s212 = scalar_select %p209, %s210, %s211
    %p215 = pneg %p209
    %p216 = scmp.eq.s32.totalorder %s19, 3
    %p217 = por %p215, %p216
    %p218 = scmp.ne.s32.totalorder %s210, %s213
    %p219 = scmp.eq.s32.totalorder %s19, 0
    %p220 = por %p218, %p219
    %p221 = scmp.ne.s32.totalorder %s210, %s213
    %p222 = scmp.eq.s32.totalorder %s24, 3
    %p223 = por %p221, %p222
    %p224 = scmp.ne.s32.totalorder %s213, %s214
    %p225 = scmp.eq.s32.totalorder %s24, 0
    %p226 = por %p224, %p225
    %p227 = scmp.ne.s32.totalorder %s213, %s214
    %p228 = scmp.eq.s32.totalorder %s25, 3
    %p229 = por %p227, %p228
    %p231 = scmp.ne.s32.totalorder %s214, %s230
    %p232 = scmp.eq.s32.totalorder %s25, 0
    %p233 = por %p231, %p232
    %p234 = scmp.lt.s32.totalorder %s19, 1
    %s235 = scalar_select %p234, %s19, 1
    %p236 = scmp.lt.s32.totalorder %s26, 1
    %s237 = scalar_select %p236, %s26, 1
    %s238 = ssub.s32 %s235, %s237
    %p239 = scmp.eq.s32.totalorder %s238, 0
    %s241 = sadd.s32 %s240, 1
    %s242 = scalar_select %p239, %s240, %s241
    %p245 = pneg %p239
    %p246 = scmp.eq.s32.totalorder %s19, 3
    %p247 = por %p245, %p246
    %p248 = scmp.ne.s32.totalorder %s240, %s243
    %p249 = scmp.eq.s32.totalorder %s19, 0
    %p250 = por %p248, %p249
    %p251 = scmp.ne.s32.totalorder %s240, %s243
    %p252 = scmp.eq.s32.totalorder %s24, 3
    %p253 = por %p251, %p252
    %p254 = scmp.ne.s32.totalorder %s243, %s244
    %p255 = scmp.eq.s32.totalorder %s24, 0
    %p256 = por %p254, %p255
    %p257 = scmp.ne.s32.totalorder %s243, %s244
    %p258 = scmp.eq.s32.totalorder %s25, 3
    %p259 = por %p257, %p258
    %p261 = scmp.ne.s32.totalorder %s244, %s260
    %p262 = scmp.eq.s32.totalorder %s25, 0
    %p263 = por %p261, %p262
    %s264 = ssub.s32 %s19, 2
    %p265 = scmp.gt.s32.totalorder %s264, 0
    %s266 = scalar_select %p265, %s264, 0
    %s267 = ssub.s32 %s26, 2
    %p268 = scmp.gt.s32.totalorder %s267, 0
    %s269 = scalar_select %p268, %s267, 0
    %s270 = ssub.s32 %s266, %s269
    %p271 = scmp.eq.s32.totalorder %s270, 0
    %s273 = sadd.s32 %s272, 1
    %s274 = scalar_select %p271, %s272, %s273
    %p277 = pneg %p271
    %p278 = scmp.eq.s32.totalorder %s19, 3
    %p279 = por %p277, %p278
    %p280 = scmp.ne.s32.totalorder %s272, %s275
    %p281 = scmp.eq.s32.totalorder %s19, 0
    %p282 = por %p280, %p281
    %p283 = scmp.ne.s32.totalorder %s272, %s275
    %p284 = scmp.eq.s32.totalorder %s24, 3
    %p285 = por %p283, %p284
    %p286 = scmp.ne.s32.totalorder %s275, %s276
    %p287 = scmp.eq.s32.totalorder %s24, 0
    %p288 = por %p286, %p287
    %p289 = scmp.ne.s32.totalorder %s275, %s276
    %p290 = scmp.eq.s32.totalorder %s25, 3
    %p291 = por %p289, %p290
    %p293 = scmp.ne.s32.totalorder %s276, %s292
    %p294 = scmp.eq.s32.totalorder %s25, 0
    %p295 = por %p293, %p294
    %s296 = ssub.s32 %s19, 2
    %p297 = scmp.gt.s32.totalorder %s296, 0
    %s298 = scalar_select %p297, %s296, 0
    %s299 = ssub.s32 %s26, 2
    %p300 = scmp.gt.s32.totalorder %s299, 0
    %s301 = scalar_select %p300, %s299, 0
    %s302 = ssub.s32 %s298, %s301
    %p303 = scmp.eq.s32.totalorder %s302, 0
    %s305 = sadd.s32 %s304, 1
    %s306 = scalar_select %p303, %s304, %s305
    %p309 = pneg %p303
    %p310 = scmp.eq.s32.totalorder %s19, 3
    %p311 = por %p309, %p310
    %p312 = scmp.ne.s32.totalorder %s304, %s307
    %p313 = scmp.eq.s32.totalorder %s19, 0
    %p314 = por %p312, %p313
    %p315 = scmp.ne.s32.totalorder %s304, %s307
    %p316 = scmp.eq.s32.totalorder %s24, 3
    %p317 = por %p315, %p316
    %p318 = scmp.ne.s32.totalorder %s307, %s308
    %p319 = scmp.eq.s32.totalorder %s24, 0
    %p320 = por %p318, %p319
    %p321 = scmp.ne.s32.totalorder %s307, %s308
    %p322 = scmp.eq.s32.totalorder %s25, 3
    %p323 = por %p321, %p322
    %p325 = scmp.ne.s32.totalorder %s308, %s324
    %p326 = scmp.eq.s32.totalorder %s25, 0
    %p327 = por %p325, %p326
    %s328 = ssub.s32 %s19, 2
    %p329 = scmp.gt.s32.totalorder %s328, 0
    %s330 = scalar_select %p329, %s328, 0
    %s331 = ssub.s32 %s26, 2
    %p332 = scmp.gt.s32.totalorder %s331, 0
    %s333 = scalar_select %p332, %s331, 0
    %s334 = ssub.s32 %s330, %s333
    %p335 = scmp.eq.s32.totalorder %s334, 0
    %s337 = sadd.s32 %s336, 1
    %s338 = scalar_select %p335, %s336, %s337
    %p341 = pneg %p335
    %p342 = scmp.eq.s32.totalorder %s19, 3
    %p343 = por %p341, %p342
    %p344 = scmp.ne.s32.totalorder %s336, %s339
    %p345 = scmp.eq.s32.totalorder %s19, 0
    %p346 = por %p344, %p345
    %p347 = scmp.ne.s32.totalorder %s336, %s339
    %p348 = scmp.eq.s32.totalorder %s24, 3
    %p349 = por %p347, %p348
    %p350 = scmp.ne.s32.totalorder %s339, %s340
    %p351 = scmp.eq.s32.totalorder %s24, 0
    %p352 = por %p350, %p351
    %p353 = scmp.ne.s32.totalorder %s339, %s340
    %p354 = scmp.eq.s32.totalorder %s25, 3
    %p355 = por %p353, %p354
    %p357 = scmp.ne.s32.totalorder %s340, %s356
    %p358 = scmp.eq.s32.totalorder %s25, 0
    %p359 = por %p357, %p358
    %s361 = sadd.s32 %s360, 1
    %p364 = scmp.eq.s32.totalorder %s19, 3
    %p365 = scmp.ne.s32.totalorder %s360, %s362
    %p366 = scmp.eq.s32.totalorder %s19, 0
    %p367 = por %p365, %p366
    %p368 = scmp.ne.s32.totalorder %s360, %s362
    %p369 = scmp.eq.s32.totalorder %s24, 3
    %p370 = por %p368, %p369
    %p371 = scmp.ne.s32.totalorder %s362, %s363
    %p372 = scmp.eq.s32.totalorder %s24, 0
    %p373 = por %p371, %p372
    %p374 = scmp.ne.s32.totalorder %s362, %s363
    %p375 = scmp.eq.s32.totalorder %s25, 3
    %p376 = por %p374, %p375
    %p378 = scmp.ne.s32.totalorder %s363, %s377
    %p379 = scmp.eq.s32.totalorder %s25, 0
    %p380 = por %p378, %p379
    %p381 = scmp.le.s32.totalorder 1, %s19
    %p382 = scmp.lt.s32.totalorder %s19, 5
    %p383 = pnand %p381, %p382
    %p384 = pneg %p383
    // Predicated region
    $region9: #{seq2seq_forward.1} parent=5 // pred_check
      _
    $region10: #{seq2seq_forward.1} parent=5 // pred_check_branch
      %386 = sbr.rel (%p383) target = $region12
    $region11: #{seq2seq_forward.1} parent=5 // pred_region
      %s387 = ssub.s32 %s19, 1
      // Predicated region
      $region13: #{seq2seq_forward.1} parent=11 // pred_check
        %p388 = pneg %p40
      $region14: #{seq2seq_forward.1} parent=11 // pred_check_branch
        %390 = sbr.rel (%p388) target = $region16
      $region15: #{seq2seq_forward.1} parent=11 // pred_region
        _
      $region16: #{seq2seq_forward.1} parent=11 // pred_fallthru
        _
      // Predicated region
      $region17: #{seq2seq_forward.1} parent=11 // pred_check
        %p391 = pneg %p61
      $region18: #{seq2seq_forward.1} parent=11 // pred_check_branch
        %393 = sbr.rel (%p391) target = $region20
      $region19: #{seq2seq_forward.1} parent=11 // pred_region
        _
      $region20: #{seq2seq_forward.1} parent=11 // pred_fallthru
        _
      // Predicated region
      $region21: #{seq2seq_forward.1} parent=11 // pred_check
        %p394 = pneg %p82
      $region22: #{seq2seq_forward.1} parent=11 // pred_check_branch
        %396 = sbr.rel (%p394) target = $region24
      $region23: #{seq2seq_forward.1} parent=11 // pred_region
        _
      $region24: #{seq2seq_forward.1} parent=11 // pred_fallthru
        _
      // Predicated region
      $region25: #{seq2seq_forward.1} parent=11 // pred_check
        %p397 = pneg %p103
      $region26: #{seq2seq_forward.1} parent=11 // pred_check_branch
        %399 = sbr.rel (%p397) target = $region28
      $region27: #{seq2seq_forward.1} parent=11 // pred_region
        _
      $region28: #{seq2seq_forward.1} parent=11 // pred_fallthru
        _
      // Predicated region
      $region29: #{seq2seq_forward.1} parent=11 // pred_check
        %p400 = pneg %p124
      $region30: #{seq2seq_forward.1} parent=11 // pred_check_branch
        %402 = sbr.rel (%p400) target = $region32
      $region31: #{seq2seq_forward.1} parent=11 // pred_region
        _
      $region32: #{seq2seq_forward.1} parent=11 // pred_fallthru
        _
      // Predicated region
      $region33: #{seq2seq_forward.1} parent=11 // pred_check
        %p403 = pneg %p145
      $region34: #{seq2seq_forward.1} parent=11 // pred_check_branch
        %405 = sbr.rel (%p403) target = $region36
      $region35: #{seq2seq_forward.1} parent=11 // pred_region
        _
      $region36: #{seq2seq_forward.1} parent=11 // pred_fallthru
        _
      // Predicated region
      $region37: #{seq2seq_forward.1} parent=11 // pred_check
        %p406 = pneg %p166
      $region38: #{seq2seq_forward.1} parent=11 // pred_check_branch
        %408 = sbr.rel (%p406) target = $region40
      $region39: #{seq2seq_forward.1} parent=11 // pred_region
        _
      $region40: #{seq2seq_forward.1} parent=11 // pred_fallthru
        _
    $region12: #{seq2seq_forward.1} parent=5 // pred_fallthru
      _
    %p409 = scmp.lt.s32.totalorder %s19, 4
    // Predicated region
    $region41: #{seq2seq_forward.1} parent=5 // pred_check
      %p410 = pneg %p409
    $region42: #{seq2seq_forward.1} parent=5 // pred_check_branch
      %412 = sbr.rel (%p410) target = $region44
    $region43: #{seq2seq_forward.1} parent=5 // pred_region
      // Predicated region
      $region45: #{seq2seq_forward.1} parent=43 // pred_check
        %p413 = pneg %p190
      $region46: #{seq2seq_forward.1} parent=43 // pred_check_branch
        %415 = sbr.rel (%p413) target = $region48
      $region47: #{seq2seq_forward.1} parent=43 // pred_region
        %p416 = scmp.lt.s32.totalorder %s19, 1
        %s417 = scalar_select %p416, %s19, 1
        %p418 = scmp.lt.s32.totalorder %s417, 1
        %s419 = scalar_select %p418, %s417, 1
        %s420 = smul.addr %s419, 8
        %s421 = smul.addr %s420, 8
        %s422 = scalar_lea.vmem %s7, %s421
        %p423 = scmp.lt.s32.totalorder %s19, 1
        %s424 = scalar_select %p423, %s19, 1
      $region48: #{seq2seq_forward.1} parent=43 // pred_fallthru
        _
      // Predicated region
      $region49: #{seq2seq_forward.1} parent=43 // pred_check
        %p425 = pneg %p220
      $region50: #{seq2seq_forward.1} parent=43 // pred_check_branch
        %427 = sbr.rel (%p425) target = $region52
      $region51: #{seq2seq_forward.1} parent=43 // pred_region
        %p428 = scmp.lt.s32.totalorder %s19, 1
        %s429 = scalar_select %p428, %s19, 1
        %p430 = scmp.lt.s32.totalorder %s429, 1
        %s431 = scalar_select %p430, %s429, 1
        %s432 = smul.addr %s431, 8
        %s433 = smul.addr %s432, 8
        %s434 = scalar_lea.vmem %s8, %s433
        %p435 = scmp.lt.s32.totalorder %s19, 1
        %s436 = scalar_select %p435, %s19, 1
      $region52: #{seq2seq_forward.1} parent=43 // pred_fallthru
        _
      // Predicated region
      $region53: #{seq2seq_forward.1} parent=43 // pred_check
        %p437 = pneg %p250
      $region54: #{seq2seq_forward.1} parent=43 // pred_check_branch
        %439 = sbr.rel (%p437) target = $region56
      $region55: #{seq2seq_forward.1} parent=43 // pred_region
        %p440 = scmp.lt.s32.totalorder %s19, 1
        %s441 = scalar_select %p440, %s19, 1
        %p442 = scmp.lt.s32.totalorder %s441, 1
        %s443 = scalar_select %p442, %s441, 1
        %s444 = smul.addr %s443, 8
        %s445 = scalar_lea.vmem %s9, %s444
        %p446 = scmp.lt.s32.totalorder %s19, 1
        %s447 = scalar_select %p446, %s19, 1
      $region56: #{seq2seq_forward.1} parent=43 // pred_fallthru
        _
      // Predicated region
      $region57: #{seq2seq_forward.1} parent=43 // pred_check
        %p448 = pneg %p282
      $region58: #{seq2seq_forward.1} parent=43 // pred_check_branch
        %450 = sbr.rel (%p448) target = $region60
      $region59: #{seq2seq_forward.1} parent=43 // pred_region
        %s451 = ssub.s32 %s19, 2
        %p452 = scmp.gt.s32.totalorder %s451, 0
        %s453 = scalar_select %p452, %s451, 0
        %p454 = scmp.lt.s32.totalorder %s453, 1
        %s455 = scalar_select %p454, %s453, 1
        %s456 = smul.addr %s455, 12
        %s457 = smul.addr %s456, 8
        %s458 = scalar_lea.vmem %s10, %s457
        %s459 = ssub.s32 %s19, 2
        %p460 = scmp.gt.s32.totalorder %s459, 0
        %s461 = scalar_select %p460, %s459, 0
      $region60: #{seq2seq_forward.1} parent=43 // pred_fallthru
        _
      // Predicated region
      $region61: #{seq2seq_forward.1} parent=43 // pred_check
        %p462 = pneg %p314
      $region62: #{seq2seq_forward.1} parent=43 // pred_check_branch
        %464 = sbr.rel (%p462) target = $region64
      $region63: #{seq2seq_forward.1} parent=43 // pred_region
        %s465 = ssub.s32 %s19, 2
        %p466 = scmp.gt.s32.totalorder %s465, 0
        %s467 = scalar_select %p466, %s465, 0
        %p468 = scmp.lt.s32.totalorder %s467, 1
        %s469 = scalar_select %p468, %s467, 1
        %s470 = smul.addr %s469, 8
        %s471 = smul.addr %s470, 8
        %s472 = scalar_lea.vmem %s11, %s471
        %s473 = ssub.s32 %s19, 2
        %p474 = scmp.gt.s32.totalorder %s473, 0
        %s475 = scalar_select %p474, %s473, 0
      $region64: #{seq2seq_forward.1} parent=43 // pred_fallthru
        _
      // Predicated region
      $region65: #{seq2seq_forward.1} parent=43 // pred_check
        %p476 = pneg %p346
      $region66: #{seq2seq_forward.1} parent=43 // pred_check_branch
        %478 = sbr.rel (%p476) target = $region68
      $region67: #{seq2seq_forward.1} parent=43 // pred_region
        %s479 = ssub.s32 %s19, 2
        %p480 = scmp.gt.s32.totalorder %s479, 0
        %s481 = scalar_select %p480, %s479, 0
        %p482 = scmp.lt.s32.totalorder %s481, 1
        %s483 = scalar_select %p482, %s481, 1
        %s484 = smul.addr %s483, 2
        %s485 = smul.addr %s484, 8
        %s486 = scalar_lea.vmem %s12, %s485
        %s487 = ssub.s32 %s19, 2
        %p488 = scmp.gt.s32.totalorder %s487, 0
        %s489 = scalar_select %p488, %s487, 0
      $region68: #{seq2seq_forward.1} parent=43 // pred_fallthru
        _
    $region44: #{seq2seq_forward.1} parent=5 // pred_fallthru
      _
    %p490 = scmp.le.s32.totalorder 1, %s19
    %p491 = scmp.lt.s32.totalorder %s19, 5
    %p492 = pnand %p490, %p491
    %p493 = pneg %p492
    // Predicated region
    $region69: #{seq2seq_forward.1} parent=5 // pred_check
      _
    $region70: #{seq2seq_forward.1} parent=5 // pred_check_branch
      %495 = sbr.rel (%p492) target = $region72
    $region71: #{seq2seq_forward.1} parent=5 // pred_region
      %s496 = ssub.s32 %s19, 1
      %p497 = pneg %p40
      %p498 = pneg %p37
      %p499 = pneg %p61
      %p500 = pneg %p58
      %p501 = pneg %p82
      %p502 = pneg %p79
      %p503 = pneg %p103
      %p504 = pneg %p100
      %p505 = pneg %p124
      %p506 = pneg %p121
      %p507 = pneg %p145
      %p508 = pneg %p142
      %p509 = pneg %p166
      %p510 = pneg %p163
      %p511 = scmp.lt.s32.totalorder %s24, 1
      %s512 = scalar_select %p511, %s24, 1
      %p513 = scmp.lt.s32.totalorder %s512, 1
      %s514 = scalar_select %p513, %s512, 1
      %s515 = smul.addr %s514, 8
      %s516 = smul.addr %s515, 8
      %s517 = scalar_lea.vmem %s7, %s516
      %p518 = pneg %p196
      %p519 = pneg %p193
      %p520 = scmp.lt.s32.totalorder %s24, 1
      %s521 = scalar_select %p520, %s24, 1
      %p522 = scmp.lt.s32.totalorder %s521, 1
      %s523 = scalar_select %p522, %s521, 1
      %s524 = smul.addr %s523, 8
      %s525 = smul.addr %s524, 8
      %s526 = scalar_lea.vmem %s8, %s525
      %p527 = pneg %p226
      %p528 = pneg %p223
      %p529 = scmp.lt.s32.totalorder %s24, 1
      %s530 = scalar_select %p529, %s24, 1
      %p531 = scmp.lt.s32.totalorder %s530, 1
      %s532 = scalar_select %p531, %s530, 1
      %s533 = smul.addr %s532, 8
      %s534 = scalar_lea.vmem %s9, %s533
      %p535 = pneg %p256
      %p536 = pneg %p253
      %s537 = ssub.s32 %s24, 2
      %p538 = scmp.gt.s32.totalorder %s537, 0
      %s539 = scalar_select %p538, %s537, 0
      %p540 = scmp.lt.s32.totalorder %s539, 1
      %s541 = scalar_select %p540, %s539, 1
      %s542 = smul.addr %s541, 12
      %s543 = smul.addr %s542, 8
      %s544 = scalar_lea.vmem %s10, %s543
      %p545 = pneg %p288
      %p546 = pneg %p285
      %s547 = ssub.s32 %s24, 2
      %p548 = scmp.gt.s32.totalorder %s547, 0
      %s549 = scalar_select %p548, %s547, 0
      %p550 = scmp.lt.s32.totalorder %s549, 1
      %s551 = scalar_select %p550, %s549, 1
      %s552 = smul.addr %s551, 8
      %s553 = smul.addr %s552, 8
      %s554 = scalar_lea.vmem %s11, %s553
      %p555 = pneg %p320
      %p556 = pneg %p317
      %s557 = ssub.s32 %s24, 2
      %p558 = scmp.gt.s32.totalorder %s557, 0
      %s559 = scalar_select %p558, %s557, 0
      %p560 = scmp.lt.s32.totalorder %s559, 1
      %s561 = scalar_select %p560, %s559, 1
      %s562 = smul.addr %s561, 2
      %s563 = smul.addr %s562, 8
      %s564 = scalar_lea.vmem %s12, %s563
      %p565 = pneg %p352
      %p566 = pneg %p349
      %p567 = pneg %p373
      %p568 = pneg %p370
      %p569 = scmp.lt.s32.totalorder %s24, 1
      %s570 = scalar_select %p569, %s24, 1
      %p571 = scmp.lt.s32.totalorder %s570, 1
      %s572 = scalar_select %p571, %s570, 1
      %s573 = smul.addr %s572, 8
      %s574 = smul.addr %s573, 8
      %s575 = scalar_lea.vmem %s7, %s574
      %p576 = scmp.lt.s32.totalorder %s24, 1
      %s577 = scalar_select %p576, %s24, 1
      %p578 = scmp.lt.s32.totalorder %s24, 1
      %s579 = scalar_select %p578, %s24, 1
      %p580 = scmp.lt.s32.totalorder %s579, 1
      %s581 = scalar_select %p580, %s579, 1
      %s582 = smul.addr %s581, 8
      %s583 = smul.addr %s582, 8
      %s584 = scalar_lea.vmem %s8, %s583
      %p585 = scmp.lt.s32.totalorder %s24, 1
      %s586 = scalar_select %p585, %s24, 1
      %p587 = scmp.lt.s32.totalorder %s24, 1
      %s588 = scalar_select %p587, %s24, 1
      %p589 = scmp.lt.s32.totalorder %s588, 1
      %s590 = scalar_select %p589, %s588, 1
      %s591 = smul.addr %s590, 8
      %s592 = scalar_lea.vmem %s9, %s591
      %p593 = scmp.lt.s32.totalorder %s24, 1
      %s594 = scalar_select %p593, %s24, 1
      %s595 = ssub.s32 %s24, 2
      %p596 = scmp.gt.s32.totalorder %s595, 0
      %s597 = scalar_select %p596, %s595, 0
      %p598 = scmp.lt.s32.totalorder %s597, 1
      %s599 = scalar_select %p598, %s597, 1
      %s600 = smul.addr %s599, 12
      %s601 = smul.addr %s600, 8
      %s602 = scalar_lea.vmem %s10, %s601
      %s603 = ssub.s32 %s24, 2
      %p604 = scmp.gt.s32.totalorder %s603, 0
      %s605 = scalar_select %p604, %s603, 0
      %s606 = ssub.s32 %s24, 2
      %p607 = scmp.gt.s32.totalorder %s606, 0
      %s608 = scalar_select %p607, %s606, 0
      %p609 = scmp.lt.s32.totalorder %s608, 1
      %s610 = scalar_select %p609, %s608, 1
      %s611 = smul.addr %s610, 8
      %s612 = smul.addr %s611, 8
      %s613 = scalar_lea.vmem %s11, %s612
      %s614 = ssub.s32 %s24, 2
      %p615 = scmp.gt.s32.totalorder %s614, 0
      %s616 = scalar_select %p615, %s614, 0
      %s617 = ssub.s32 %s24, 2
      %p618 = scmp.gt.s32.totalorder %s617, 0
      %s619 = scalar_select %p618, %s617, 0
      %p620 = scmp.lt.s32.totalorder %s619, 1
      %s621 = scalar_select %p620, %s619, 1
      %s622 = smul.addr %s621, 2
      %s623 = smul.addr %s622, 8
      %s624 = scalar_lea.vmem %s12, %s623
      %s625 = ssub.s32 %s24, 2
      %p626 = scmp.gt.s32.totalorder %s625, 0
      %s627 = scalar_select %p626, %s625, 0
      %p628 = scmp.eq.s32.totalorder %s24, 0
      // Predicated region
      $region73: #{seq2seq_forward.1} parent=71 // pred_check
        %p629 = pneg %p628
      $region74: #{seq2seq_forward.1} parent=71 // pred_check_branch
        %631 = sbr.rel (%p629) target = $region76
      $region75: #{seq2seq_forward.1} parent=71 // pred_region
        %v632 = vld [vmem:[%s0] sm:$0xff]
        %v633 = vld [vmem:[%s0 + $0x8] sm:$0xff]
        %vm634 = vcmask 261120
        %635 = vst.msk [vmem:[#allocation2] sm:$0xff] %vm634, %v632
        %636 = vst.msk [vmem:[#allocation2 + $0x8] sm:$0xff] %vm634, %v633
      $region76: #{seq2seq_forward.1} parent=71 // pred_fallthru
        _
      %p637 = scmp.lt.s32.totalorder %s24, 2
      // Predicated region
      $region77: #{seq2seq_forward.1} parent=71 // pred_check
        %p638 = pneg %p637
      $region78: #{seq2seq_forward.1} parent=71 // pred_check_branch
        %640 = sbr.rel (%p638) target = $region80
      $region79: #{seq2seq_forward.1} parent=71 // pred_region
        %v641 = vld [vmem:[%s575] sm:$0xff]
        %v642 = vld [vmem:[%s575 + $0x8] sm:$0xff]
        %v643 = vld [vmem:[%s575 + $0x10] sm:$0xff]
        %v644 = vld [vmem:[%s575 + $0x18] sm:$0xff]
        %v645 = vld [vmem:[%s575 + $0x20] sm:$0xff]
        %v646 = vld [vmem:[%s575 + $0x28] sm:$0xff]
        %v647 = vld [vmem:[%s575 + $0x30] sm:$0xff]
        %v648 = vld [vmem:[%s575 + $0x38] sm:$0xff]
        %v649 = vld [vmem:[%s592] sm:$0xff]
        %v650 = vld [vmem:[%s584] sm:$0xff]
        %v651 = vld [vmem:[%s584 + $0x8] sm:$0xff]
        %v652 = vld [vmem:[%s584 + $0x10] sm:$0xff]
        %v653 = vld [vmem:[%s584 + $0x18] sm:$0xff]
        %v654 = vld [vmem:[%s584 + $0x20] sm:$0xff]
        %v655 = vld [vmem:[%s584 + $0x28] sm:$0xff]
        %v656 = vld [vmem:[%s584 + $0x30] sm:$0xff]
        %v657 = vld [vmem:[%s584 + $0x38] sm:$0xff]
        %v658 = vld [vmem:[#allocation2] sm:$0xff]
        %v659 = vld [vmem:[#allocation2 + $0x8] sm:$0xff]
        %v660 = vperm.slane %v649, 0
        %vm661 = vcmask 261120
        %v663 = vsel %vm661, %v658, 0
        %v666 = vsel %vm661, %v659, 0
        %668 = vmatpush.msra.mxu0 0.0
        %669 = vmatpush.msra.mxu0 0.0
        %670 = vmatpush.msra.mxu0 0.0
        %671 = vmatpush.msra.mxu0 0.0
        %672 = vmatpush.msra.mxu0 0.0
        %673 = vmatpush.msra.mxu0 0.0
        %674 = vmatpush.msra.mxu0 0.0
        %675 = vmatpush.msra.mxu0 0.0
        %676 = vmatpush.msra.mxu0 0.0
        %677 = vmatpush.msra.mxu0 0.0
        %678 = vmatpush.msra.mxu0 0.0
        %679 = vmatpush.msra.mxu0 0.0
        %680 = vmatpush.msra.mxu0 %v647
        %681 = vmatpush.msra.mxu0 %v645
        %682 = vmatpush.msra.mxu0 %v643
        %683 = vmatpush.msra.mxu0 %v641
        %684 = vmatmul.f32.gmra.mxu0 %v663
        %v685 = vpop.f32.mrf.mxu0
        %v686 = vadd.f32 %v660, %v685
        %687 = vmatmul.f32.gmra.mxu0 %v666
        %v688 = vpop.f32.mrf.mxu0
        %v689 = vadd.f32 %v660, %v688
        %690 = vdwg.mxu0
        %v691 = vld [vmem:[%s2] sm:$0xff]
        %693 = vrot.lane.b32.xlu0 %v686, 96
        %v694 = vpop.permute.xlu0 %693
        %vm695 = vcmask 64512
        %v696 = vsel %vm695, %v686, 0
        %v698 = vsel %vm695, %v694, 0
        %700 = vmatpush.xpose.msra.mxu0 0.0
        %701 = vmatpush.xpose.msra.mxu0 0.0
        %702 = vmatpush.xpose.msra.mxu0 0.0
        %703 = vmatpush.xpose.msra.mxu0 0.0
        %704 = vmatpush.xpose.msra.mxu0 0.0
        %705 = vmatpush.xpose.msra.mxu0 0.0
        %706 = vmatpush.xpose.msra.mxu0 0.0
        %707 = vmatpush.xpose.msra.mxu0 0.0
        %708 = vmatpush.xpose.msra.mxu0 0.0
        %709 = vmatpush.xpose.msra.mxu0 0.0
        %710 = vmatpush.xpose.msra.mxu0 0.0
        %711 = vmatpush.xpose.msra.mxu0 0.0
        %712 = vmatpush.xpose.msra.mxu0 0.0
        %713 = vmatpush.xpose.msra.mxu0 0.0
        %714 = vmatpush.xpose.msra.mxu0 0.0
        %715 = vmatpush.xpose.msra.mxu0 %v698
        %716 = vmatmul.f32.gmra.mxu0 %v696
        %v717 = vpop.f32.mrf.mxu0
        %v718 = vadd.f32 %v691, %v717
        %719 = vdwg.mxu0
        %v720 = vsel %vm695, %v718, -inf
        %721 = vmax.xlane.f32.xlu0 %v720
        %v722 = vpop.xlane.xlu0 %721
        %v723 = vsub.f32 %v718, %v722
        %v724 = vmul.f32 %v723, 1.442695
        %v725 = vpow.pop %v724
        %v726 = vsel %vm695, %v725, 0.0
        %727 = vadd.xlane.f32.xlu0 %v726
        %v728 = vpop.xlane.xlu0 %727
        %v729 = vrcp.pop %v728
        %v730 = vmul.f32 %v728, %v729
        %v731 = vsub.f32 1.0, %v730
        %v732 = vmul.f32 %v729, %v731
        %v733 = vadd.f32 %v729, %v732
        %vm734 = vweird.f32 %v728
        %vm735 = vweird.f32 %v729
        %vm736 = vmor %vm734, %vm735
        %v737 = vsel %vm736, %v729, %v733
        %v738 = vand.u32 2147483647, %v728
        %vm739 = vcmp.eq.f32.partialorder %v738, 8.507059e+37
        %v740 = vand.u32 %v728, 2147483648
        %v741 = vor.u32 1.1754944e-38, %v740
        %v742 = vsel %vm739, %v741, %v737
        %v743 = vmul.f32 %v725, %v742
        %744 = vrot.lane.b32.xlu0 %v686, 64
        %v745 = vpop.permute.xlu0 %744
        %v748 = vsel %vm695, %v743, 0
        %750 = vmatpush.msra.mxu0 0.0
        %751 = vmatpush.msra.mxu0 0.0
        %752 = vmatpush.msra.mxu0 0.0
        %753 = vmatpush.msra.mxu0 0.0
        %754 = vmatpush.msra.mxu0 0.0
        %755 = vmatpush.msra.mxu0 0.0
        %756 = vmatpush.msra.mxu0 0.0
        %757 = vmatpush.msra.mxu0 0.0
        %758 = vmatpush.msra.mxu0 0.0
        %759 = vmatpush.msra.mxu0 0.0
        %760 = vmatpush.msra.mxu0 0.0
        %761 = vmatpush.msra.mxu0 0.0
        %762 = vmatpush.msra.mxu0 0.0
        %763 = vmatpush.msra.mxu0 0.0
        %764 = vmatpush.msra.mxu0 0.0
        %765 = vmatpush.msra.mxu0 %v745
        %766 = vmatmul.f32.gmra.mxu0 %v748
        %v767 = vpop.f32.mrf.mxu0
        %v768 = vadd.f32 0.0, %v767
        %769 = vdwg.mxu0
        %770 = vrot.lane.b32.xlu0 %v686, 120
        %v771 = vpop.permute.xlu0 %770
        %772 = vrot.lane.b32.xlu0 %v686, 88
        %v773 = vpop.permute.xlu0 %772
        %v774 = vsel %vm695, %v771, 0
        %v776 = vsel %vm695, %v773, 0
        %778 = vmatpush.xpose.msra.mxu0 0.0
        %779 = vmatpush.xpose.msra.mxu0 0.0
        %780 = vmatpush.xpose.msra.mxu0 0.0
        %781 = vmatpush.xpose.msra.mxu0 0.0
        %782 = vmatpush.xpose.msra.mxu0 0.0
        %783 = vmatpush.xpose.msra.mxu0 0.0
        %784 = vmatpush.xpose.msra.mxu0 0.0
        %785 = vmatpush.xpose.msra.mxu0 0.0
        %786 = vmatpush.xpose.msra.mxu0 0.0
        %787 = vmatpush.xpose.msra.mxu0 0.0
        %788 = vmatpush.xpose.msra.mxu0 0.0
        %789 = vmatpush.xpose.msra.mxu0 0.0
        %790 = vmatpush.xpose.msra.mxu0 0.0
        %791 = vmatpush.xpose.msra.mxu0 0.0
        %792 = vmatpush.xpose.msra.mxu0 0.0
        %793 = vmatpush.xpose.msra.mxu0 %v776
        %794 = vmatmul.f32.gmra.mxu0 %v774
        %v795 = vpop.f32.mrf.mxu0
        %v796 = vadd.f32 %v691, %v795
        %797 = vdwg.mxu0
        %v798 = vsel %vm695, %v796, -inf
        %799 = vmax.xlane.f32.xlu0 %v798
        %v800 = vpop.xlane.xlu0 %799
        %v801 = vsub.f32 %v796, %v800
        %v802 = vmul.f32 %v801, 1.442695
        %v803 = vpow.pop %v802
        %v804 = vsel %vm695, %v803, 0.0
        %805 = vadd.xlane.f32.xlu0 %v804
        %v806 = vpop.xlane.xlu0 %805
        %v807 = vrcp.pop %v806
        %v808 = vmul.f32 %v806, %v807
        %v809 = vsub.f32 1.0, %v808
        %v810 = vmul.f32 %v807, %v809
        %v811 = vadd.f32 %v807, %v810
        %vm812 = vweird.f32 %v806
        %vm813 = vweird.f32 %v807
        %vm814 = vmor %vm812, %vm813
        %v815 = vsel %vm814, %v807, %v811
        %v816 = vand.u32 2147483647, %v806
        %vm817 = vcmp.eq.f32.partialorder %v816, 8.507059e+37
        %v818 = vand.u32 %v806, 2147483648
        %v819 = vor.u32 1.1754944e-38, %v818
        %v820 = vsel %vm817, %v819, %v815
        %v821 = vmul.f32 %v803, %v820
        %822 = vrot.lane.b32.xlu0 %v686, 56
        %v823 = vpop.permute.xlu0 %822
        %v826 = vsel %vm695, %v821, 0
        %828 = vmatpush.msra.mxu0 0.0
        %829 = vmatpush.msra.mxu0 0.0
        %830 = vmatpush.msra.mxu0 0.0
        %831 = vmatpush.msra.mxu0 0.0
        %832 = vmatpush.msra.mxu0 0.0
        %833 = vmatpush.msra.mxu0 0.0
        %834 = vmatpush.msra.mxu0 0.0
        %835 = vmatpush.msra.mxu0 0.0
        %836 = vmatpush.msra.mxu0 0.0
        %837 = vmatpush.msra.mxu0 0.0
        %838 = vmatpush.msra.mxu0 0.0
        %839 = vmatpush.msra.mxu0 0.0
        %840 = vmatpush.msra.mxu0 0.0
        %841 = vmatpush.msra.mxu0 0.0
        %842 = vmatpush.msra.mxu0 0.0
        %843 = vmatpush.msra.mxu0 %v823
        %844 = vmatmul.f32.gmra.mxu0 %v826
        %v845 = vpop.f32.mrf.mxu0
        %v846 = vadd.f32 0.0, %v845
        %847 = vdwg.mxu0
        %848 = vrot.lane.b32.xlu0 %v686, 112
        %v849 = vpop.permute.xlu0 %848
        %850 = vrot.lane.b32.xlu0 %v686, 80
        %v851 = vpop.permute.xlu0 %850
        %v852 = vsel %vm695, %v849, 0
        %v854 = vsel %vm695, %v851, 0
        %856 = vmatpush.xpose.msra.mxu0 0.0
        %857 = vmatpush.xpose.msra.mxu0 0.0
        %858 = vmatpush.xpose.msra.mxu0 0.0
        %859 = vmatpush.xpose.msra.mxu0 0.0
        %860 = vmatpush.xpose.msra.mxu0 0.0
        %861 = vmatpush.xpose.msra.mxu0 0.0
        %862 = vmatpush.xpose.msra.mxu0 0.0
        %863 = vmatpush.xpose.msra.mxu0 0.0
        %864 = vmatpush.xpose.msra.mxu0 0.0
        %865 = vmatpush.xpose.msra.mxu0 0.0
        %866 = vmatpush.xpose.msra.mxu0 0.0
        %867 = vmatpush.xpose.msra.mxu0 0.0
        %868 = vmatpush.xpose.msra.mxu0 0.0
        %869 = vmatpush.xpose.msra.mxu0 0.0
        %870 = vmatpush.xpose.msra.mxu0 0.0
        %871 = vmatpush.xpose.msra.mxu0 %v854
        %872 = vmatmul.f32.gmra.mxu0 %v852
        %v873 = vpop.f32.mrf.mxu0
        %v874 = vadd.f32 %v691, %v873
        %875 = vdwg.mxu0
        %v876 = vsel %vm695, %v874, -inf
        %877 = vmax.xlane.f32.xlu0 %v876
        %v878 = vpop.xlane.xlu0 %877
        %v879 = vsub.f32 %v874, %v878
        %v880 = vmul.f32 %v879, 1.442695
        %v881 = vpow.pop %v880
        %v882 = vsel %vm695, %v881, 0.0
        %883 = vadd.xlane.f32.xlu0 %v882
        %v884 = vpop.xlane.xlu0 %883
        %v885 = vrcp.pop %v884
        %v886 = vmul.f32 %v884, %v885
        %v887 = vsub.f32 1.0, %v886
        %v888 = vmul.f32 %v885, %v887
        %v889 = vadd.f32 %v885, %v888
        %vm890 = vweird.f32 %v884
        %vm891 = vweird.f32 %v885
        %vm892 = vmor %vm890, %vm891
        %v893 = vsel %vm892, %v885, %v889
        %v894 = vand.u32 2147483647, %v884
        %vm895 = vcmp.eq.f32.partialorder %v894, 8.507059e+37
        %v896 = vand.u32 %v884, 2147483648
        %v897 = vor.u32 1.1754944e-38, %v896
        %v898 = vsel %vm895, %v897, %v893
        %v899 = vmul.f32 %v881, %v898
        %900 = vrot.lane.b32.xlu0 %v686, 48
        %v901 = vpop.permute.xlu0 %900
        %v904 = vsel %vm695, %v899, 0
        %906 = vmatpush.msra.mxu0 0.0
        %907 = vmatpush.msra.mxu0 0.0
        %908 = vmatpush.msra.mxu0 0.0
        %909 = vmatpush.msra.mxu0 0.0
        %910 = vmatpush.msra.mxu0 0.0
        %911 = vmatpush.msra.mxu0 0.0
        %912 = vmatpush.msra.mxu0 0.0
        %913 = vmatpush.msra.mxu0 0.0
        %914 = vmatpush.msra.mxu0 0.0
        %915 = vmatpush.msra.mxu0 0.0
        %916 = vmatpush.msra.mxu0 0.0
        %917 = vmatpush.msra.mxu0 0.0
        %918 = vmatpush.msra.mxu0 0.0
        %919 = vmatpush.msra.mxu0 0.0
        %920 = vmatpush.msra.mxu0 0.0
        %921 = vmatpush.msra.mxu0 %v901
        %922 = vmatmul.f32.gmra.mxu0 %v904
        %v923 = vpop.f32.mrf.mxu0
        %v924 = vadd.f32 0.0, %v923
        %925 = vdwg.mxu0
        %926 = vrot.lane.b32.xlu0 %v686, 104
        %v927 = vpop.permute.xlu0 %926
        %928 = vrot.lane.b32.xlu0 %v686, 72
        %v929 = vpop.permute.xlu0 %928
        %v930 = vsel %vm695, %v927, 0
        %v932 = vsel %vm695, %v929, 0
        %934 = vmatpush.xpose.msra.mxu0 0.0
        %935 = vmatpush.xpose.msra.mxu0 0.0
        %936 = vmatpush.xpose.msra.mxu0 0.0
        %937 = vmatpush.xpose.msra.mxu0 0.0
        %938 = vmatpush.xpose.msra.mxu0 0.0
        %939 = vmatpush.xpose.msra.mxu0 0.0
        %940 = vmatpush.xpose.msra.mxu0 0.0
        %941 = vmatpush.xpose.msra.mxu0 0.0
        %942 = vmatpush.xpose.msra.mxu0 0.0
        %943 = vmatpush.xpose.msra.mxu0 0.0
        %944 = vmatpush.xpose.msra.mxu0 0.0
        %945 = vmatpush.xpose.msra.mxu0 0.0
        %946 = vmatpush.xpose.msra.mxu0 0.0
        %947 = vmatpush.xpose.msra.mxu0 0.0
        %948 = vmatpush.xpose.msra.mxu0 0.0
        %949 = vmatpush.xpose.msra.mxu0 %v932
        %950 = vmatmul.f32.gmra.mxu0 %v930
        %v951 = vpop.f32.mrf.mxu0
        %v952 = vadd.f32 %v691, %v951
        %953 = vdwg.mxu0
        %v954 = vsel %vm695, %v952, -inf
        %955 = vmax.xlane.f32.xlu0 %v954
        %v956 = vpop.xlane.xlu0 %955
        %v957 = vsub.f32 %v952, %v956
        %v958 = vmul.f32 %v957, 1.442695
        %v959 = vpow.pop %v958
        %v960 = vsel %vm695, %v959, 0.0
        %961 = vadd.xlane.f32.xlu0 %v960
        %v962 = vpop.xlane.xlu0 %961
        %v963 = vrcp.pop %v962
        %v964 = vmul.f32 %v962, %v963
        %v965 = vsub.f32 1.0, %v964
        %v966 = vmul.f32 %v963, %v965
        %v967 = vadd.f32 %v963, %v966
        %vm968 = vweird.f32 %v962
        %vm969 = vweird.f32 %v963
        %vm970 = vmor %vm968, %vm969
        %v971 = vsel %vm970, %v963, %v967
        %v972 = vand.u32 2147483647, %v962
        %vm973 = vcmp.eq.f32.partialorder %v972, 8.507059e+37
        %v974 = vand.u32 %v962, 2147483648
        %v975 = vor.u32 1.1754944e-38, %v974
        %v976 = vsel %vm973, %v975, %v971
        %v977 = vmul.f32 %v959, %v976
        %978 = vrot.lane.b32.xlu0 %v686, 40
        %v979 = vpop.permute.xlu0 %978
        %v982 = vsel %vm695, %v977, 0
        %984 = vmatpush.msra.mxu0 0.0
        %985 = vmatpush.msra.mxu0 0.0
        %986 = vmatpush.msra.mxu0 0.0
        %987 = vmatpush.msra.mxu0 0.0
        %988 = vmatpush.msra.mxu0 0.0
        %989 = vmatpush.msra.mxu0 0.0
        %990 = vmatpush.msra.mxu0 0.0
        %991 = vmatpush.msra.mxu0 0.0
        %992 = vmatpush.msra.mxu0 0.0
        %993 = vmatpush.msra.mxu0 0.0
        %994 = vmatpush.msra.mxu0 0.0
        %995 = vmatpush.msra.mxu0 0.0
        %996 = vmatpush.msra.mxu0 0.0
        %997 = vmatpush.msra.mxu0 0.0
        %998 = vmatpush.msra.mxu0 0.0
        %999 = vmatpush.msra.mxu0 %v979
        %1000 = vmatmul.f32.gmra.mxu0 %v982
        %v1001 = vpop.f32.mrf.mxu0
        %v1002 = vadd.f32 0.0, %v1001
        %1003 = vdwg.mxu0
        %1005 = vrot.lane.b32.xlu0 %v846, 8
        %v1006 = vpop.permute.xlu0 %1005
        %1009 = vrot.lane.b32.xlu0 %v924, 16
        %v1010 = vpop.permute.xlu0 %1009
        %1013 = vrot.lane.b32.xlu0 %v1002, 24
        %v1014 = vpop.permute.xlu0 %1013
        %v1016 = vsel %vm695, %v768, %v1006
        %vm1017 = vcmask 130048
        %v1018 = vsel %vm1017, %v1016, %v1010
        %vm1019 = vcmask 195584
        %v1020 = vsel %vm1019, %v1018, %v1014
        %s1021 = scalar_lea.vmem %s2, 8
        %v1022 = vld [vmem:[%s1021] sm:$0xff]
        %1024 = vrot.lane.b32.xlu0 %v689, 96
        %v1025 = vpop.permute.xlu0 %1024
        %v1026 = vsel %vm695, %v689, 0
        %v1028 = vsel %vm695, %v1025, 0
        %1030 = vmatpush.xpose.msra.mxu0 0.0
        %1031 = vmatpush.xpose.msra.mxu0 0.0
        %1032 = vmatpush.xpose.msra.mxu0 0.0
        %1033 = vmatpush.xpose.msra.mxu0 0.0
        %1034 = vmatpush.xpose.msra.mxu0 0.0
        %1035 = vmatpush.xpose.msra.mxu0 0.0
        %1036 = vmatpush.xpose.msra.mxu0 0.0
        %1037 = vmatpush.xpose.msra.mxu0 0.0
        %1038 = vmatpush.xpose.msra.mxu0 0.0
        %1039 = vmatpush.xpose.msra.mxu0 0.0
        %1040 = vmatpush.xpose.msra.mxu0 0.0
        %1041 = vmatpush.xpose.msra.mxu0 0.0
        %1042 = vmatpush.xpose.msra.mxu0 0.0
        %1043 = vmatpush.xpose.msra.mxu0 0.0
        %1044 = vmatpush.xpose.msra.mxu0 0.0
        %1045 = vmatpush.xpose.msra.mxu0 %v1028
        %1046 = vmatmul.f32.gmra.mxu0 %v1026
        %v1047 = vpop.f32.mrf.mxu0
        %v1048 = vadd.f32 %v1022, %v1047
        %1049 = vdwg.mxu0
        %v1050 = vsel %vm695, %v1048, -inf
        %1051 = vmax.xlane.f32.xlu0 %v1050
        %v1052 = vpop.xlane.xlu0 %1051
        %v1053 = vsub.f32 %v1048, %v1052
        %v1054 = vmul.f32 %v1053, 1.442695
        %v1055 = vpow.pop %v1054
        %v1056 = vsel %vm695, %v1055, 0.0
        %1057 = vadd.xlane.f32.xlu0 %v1056
        %v1058 = vpop.xlane.xlu0 %1057
        %v1059 = vrcp.pop %v1058
        %v1060 = vmul.f32 %v1058, %v1059
        %v1061 = vsub.f32 1.0, %v1060
        %v1062 = vmul.f32 %v1059, %v1061
        %v1063 = vadd.f32 %v1059, %v1062
        %vm1064 = vweird.f32 %v1058
        %vm1065 = vweird.f32 %v1059
        %vm1066 = vmor %vm1064, %vm1065
        %v1067 = vsel %vm1066, %v1059, %v1063
        %v1068 = vand.u32 2147483647, %v1058
        %vm1069 = vcmp.eq.f32.partialorder %v1068, 8.507059e+37
        %v1070 = vand.u32 %v1058, 2147483648
        %v1071 = vor.u32 1.1754944e-38, %v1070
        %v1072 = vsel %vm1069, %v1071, %v1067
        %v1073 = vmul.f32 %v1055, %v1072
        %1074 = vrot.lane.b32.xlu0 %v689, 64
        %v1075 = vpop.permute.xlu0 %1074
        %v1078 = vsel %vm695, %v1073, 0
        %1080 = vmatpush.msra.mxu0 0.0
        %1081 = vmatpush.msra.mxu0 0.0
        %1082 = vmatpush.msra.mxu0 0.0
        %1083 = vmatpush.msra.mxu0 0.0
        %1084 = vmatpush.msra.mxu0 0.0
        %1085 = vmatpush.msra.mxu0 0.0
        %1086 = vmatpush.msra.mxu0 0.0
        %1087 = vmatpush.msra.mxu0 0.0
        %1088 = vmatpush.msra.mxu0 0.0
        %1089 = vmatpush.msra.mxu0 0.0
        %1090 = vmatpush.msra.mxu0 0.0
        %1091 = vmatpush.msra.mxu0 0.0
        %1092 = vmatpush.msra.mxu0 0.0
        %1093 = vmatpush.msra.mxu0 0.0
        %1094 = vmatpush.msra.mxu0 0.0
        %1095 = vmatpush.msra.mxu0 %v1075
        %1096 = vmatmul.f32.gmra.mxu0 %v1078
        %v1097 = vpop.f32.mrf.mxu0
        %v1098 = vadd.f32 0.0, %v1097
        %1099 = vdwg.mxu0
        %1100 = vrot.lane.b32.xlu0 %v689, 120
        %v1101 = vpop.permute.xlu0 %1100
        %1102 = vrot.lane.b32.xlu0 %v689, 88
        %v1103 = vpop.permute.xlu0 %1102
        %v1104 = vsel %vm695, %v1101, 0
        %v1106 = vsel %vm695, %v1103, 0
        %1108 = vmatpush.xpose.msra.mxu0 0.0
        %1109 = vmatpush.xpose.msra.mxu0 0.0
        %1110 = vmatpush.xpose.msra.mxu0 0.0
        %1111 = vmatpush.xpose.msra.mxu0 0.0
        %1112 = vmatpush.xpose.msra.mxu0 0.0
        %1113 = vmatpush.xpose.msra.mxu0 0.0
        %1114 = vmatpush.xpose.msra.mxu0 0.0
        %1115 = vmatpush.xpose.msra.mxu0 0.0
        %1116 = vmatpush.xpose.msra.mxu0 0.0
        %1117 = vmatpush.xpose.msra.mxu0 0.0
        %1118 = vmatpush.xpose.msra.mxu0 0.0
        %1119 = vmatpush.xpose.msra.mxu0 0.0
        %1120 = vmatpush.xpose.msra.mxu0 0.0
        %1121 = vmatpush.xpose.msra.mxu0 0.0
        %1122 = vmatpush.xpose.msra.mxu0 0.0
        %1123 = vmatpush.xpose.msra.mxu0 %v1106
        %1124 = vmatmul.f32.gmra.mxu0 %v1104
        %v1125 = vpop.f32.mrf.mxu0
        %v1126 = vadd.f32 %v1022, %v1125
        %1127 = vdwg.mxu0
        %v1128 = vsel %vm695, %v1126, -inf
        %1129 = vmax.xlane.f32.xlu0 %v1128
        %v1130 = vpop.xlane.xlu0 %1129
        %v1131 = vsub.f32 %v1126, %v1130
        %v1132 = vmul.f32 %v1131, 1.442695
        %v1133 = vpow.pop %v1132
        %v1134 = vsel %vm695, %v1133, 0.0
        %1135 = vadd.xlane.f32.xlu0 %v1134
        %v1136 = vpop.xlane.xlu0 %1135
        %v1137 = vrcp.pop %v1136
        %v1138 = vmul.f32 %v1136, %v1137
        %v1139 = vsub.f32 1.0, %v1138
        %v1140 = vmul.f32 %v1137, %v1139
        %v1141 = vadd.f32 %v1137, %v1140
        %vm1142 = vweird.f32 %v1136
        %vm1143 = vweird.f32 %v1137
        %vm1144 = vmor %vm1142, %vm1143
        %v1145 = vsel %vm1144, %v1137, %v1141
        %v1146 = vand.u32 2147483647, %v1136
        %vm1147 = vcmp.eq.f32.partialorder %v1146, 8.507059e+37
        %v1148 = vand.u32 %v1136, 2147483648
        %v1149 = vor.u32 1.1754944e-38, %v1148
        %v1150 = vsel %vm1147, %v1149, %v1145
        %v1151 = vmul.f32 %v1133, %v1150
        %1152 = vrot.lane.b32.xlu0 %v689, 56
        %v1153 = vpop.permute.xlu0 %1152
        %v1156 = vsel %vm695, %v1151, 0
        %1158 = vmatpush.msra.mxu0 0.0
        %1159 = vmatpush.msra.mxu0 0.0
        %1160 = vmatpush.msra.mxu0 0.0
        %1161 = vmatpush.msra.mxu0 0.0
        %1162 = vmatpush.msra.mxu0 0.0
        %1163 = vmatpush.msra.mxu0 0.0
        %1164 = vmatpush.msra.mxu0 0.0
        %1165 = vmatpush.msra.mxu0 0.0
        %1166 = vmatpush.msra.mxu0 0.0
        %1167 = vmatpush.msra.mxu0 0.0
        %1168 = vmatpush.msra.mxu0 0.0
        %1169 = vmatpush.msra.mxu0 0.0
        %1170 = vmatpush.msra.mxu0 0.0
        %1171 = vmatpush.msra.mxu0 0.0
        %1172 = vmatpush.msra.mxu0 0.0
        %1173 = vmatpush.msra.mxu0 %v1153
        %1174 = vmatmul.f32.gmra.mxu0 %v1156
        %v1175 = vpop.f32.mrf.mxu0
        %v1176 = vadd.f32 0.0, %v1175
        %1177 = vdwg.mxu0
        %1178 = vrot.lane.b32.xlu0 %v689, 112
        %v1179 = vpop.permute.xlu0 %1178
        %1180 = vrot.lane.b32.xlu0 %v689, 80
        %v1181 = vpop.permute.xlu0 %1180
        %v1182 = vsel %vm695, %v1179, 0
        %v1184 = vsel %vm695, %v1181, 0
        %1186 = vmatpush.xpose.msra.mxu0 0.0
        %1187 = vmatpush.xpose.msra.mxu0 0.0
        %1188 = vmatpush.xpose.msra.mxu0 0.0
        %1189 = vmatpush.xpose.msra.mxu0 0.0
        %1190 = vmatpush.xpose.msra.mxu0 0.0
        %1191 = vmatpush.xpose.msra.mxu0 0.0
        %1192 = vmatpush.xpose.msra.mxu0 0.0
        %1193 = vmatpush.xpose.msra.mxu0 0.0
        %1194 = vmatpush.xpose.msra.mxu0 0.0
        %1195 = vmatpush.xpose.msra.mxu0 0.0
        %1196 = vmatpush.xpose.msra.mxu0 0.0
        %1197 = vmatpush.xpose.msra.mxu0 0.0
        %1198 = vmatpush.xpose.msra.mxu0 0.0
        %1199 = vmatpush.xpose.msra.mxu0 0.0
        %1200 = vmatpush.xpose.msra.mxu0 0.0
        %1201 = vmatpush.xpose.msra.mxu0 %v1184
        %1202 = vmatmul.f32.gmra.mxu0 %v1182
        %v1203 = vpop.f32.mrf.mxu0
        %v1204 = vadd.f32 %v1022, %v1203
        %1205 = vdwg.mxu0
        %v1206 = vsel %vm695, %v1204, -inf
        %1207 = vmax.xlane.f32.xlu0 %v1206
        %v1208 = vpop.xlane.xlu0 %1207
        %v1209 = vsub.f32 %v1204, %v1208
        %v1210 = vmul.f32 %v1209, 1.442695
        %v1211 = vpow.pop %v1210
        %v1212 = vsel %vm695, %v1211, 0.0
        %1213 = vadd.xlane.f32.xlu0 %v1212
        %v1214 = vpop.xlane.xlu0 %1213
        %v1215 = vrcp.pop %v1214
        %v1216 = vmul.f32 %v1214, %v1215
        %v1217 = vsub.f32 1.0, %v1216
        %v1218 = vmul.f32 %v1215, %v1217
        %v1219 = vadd.f32 %v1215, %v1218
        %vm1220 = vweird.f32 %v1214
        %vm1221 = vweird.f32 %v1215
        %vm1222 = vmor %vm1220, %vm1221
        %v1223 = vsel %vm1222, %v1215, %v1219
        %v1224 = vand.u32 2147483647, %v1214
        %vm1225 = vcmp.eq.f32.partialorder %v1224, 8.507059e+37
        %v1226 = vand.u32 %v1214, 2147483648
        %v1227 = vor.u32 1.1754944e-38, %v1226
        %v1228 = vsel %vm1225, %v1227, %v1223
        %v1229 = vmul.f32 %v1211, %v1228
        %1230 = vrot.lane.b32.xlu0 %v689, 48
        %v1231 = vpop.permute.xlu0 %1230
        %v1234 = vsel %vm695, %v1229, 0
        %1236 = vmatpush.msra.mxu0 0.0
        %1237 = vmatpush.msra.mxu0 0.0
        %1238 = vmatpush.msra.mxu0 0.0
        %1239 = vmatpush.msra.mxu0 0.0
        %1240 = vmatpush.msra.mxu0 0.0
        %1241 = vmatpush.msra.mxu0 0.0
        %1242 = vmatpush.msra.mxu0 0.0
        %1243 = vmatpush.msra.mxu0 0.0
        %1244 = vmatpush.msra.mxu0 0.0
        %1245 = vmatpush.msra.mxu0 0.0
        %1246 = vmatpush.msra.mxu0 0.0
        %1247 = vmatpush.msra.mxu0 0.0
        %1248 = vmatpush.msra.mxu0 0.0
        %1249 = vmatpush.msra.mxu0 0.0
        %1250 = vmatpush.msra.mxu0 0.0
        %1251 = vmatpush.msra.mxu0 %v1231
        %1252 = vmatmul.f32.gmra.mxu0 %v1234
        %v1253 = vpop.f32.mrf.mxu0
        %v1254 = vadd.f32 0.0, %v1253
        %1255 = vdwg.mxu0
        %1256 = vrot.lane.b32.xlu0 %v689, 104
        %v1257 = vpop.permute.xlu0 %1256
        %1258 = vrot.lane.b32.xlu0 %v689, 72
        %v1259 = vpop.permute.xlu0 %1258
        %v1260 = vsel %vm695, %v1257, 0
        %v1262 = vsel %vm695, %v1259, 0
        %1264 = vmatpush.xpose.msra.mxu0 0.0
        %1265 = vmatpush.xpose.msra.mxu0 0.0
        %1266 = vmatpush.xpose.msra.mxu0 0.0
        %1267 = vmatpush.xpose.msra.mxu0 0.0
        %1268 = vmatpush.xpose.msra.mxu0 0.0
        %1269 = vmatpush.xpose.msra.mxu0 0.0
        %1270 = vmatpush.xpose.msra.mxu0 0.0
        %1271 = vmatpush.xpose.msra.mxu0 0.0
        %1272 = vmatpush.xpose.msra.mxu0 0.0
        %1273 = vmatpush.xpose.msra.mxu0 0.0
        %1274 = vmatpush.xpose.msra.mxu0 0.0
        %1275 = vmatpush.xpose.msra.mxu0 0.0
        %1276 = vmatpush.xpose.msra.mxu0 0.0
        %1277 = vmatpush.xpose.msra.mxu0 0.0
        %1278 = vmatpush.xpose.msra.mxu0 0.0
        %1279 = vmatpush.xpose.msra.mxu0 %v1262
        %1280 = vmatmul.f32.gmra.mxu0 %v1260
        %v1281 = vpop.f32.mrf.mxu0
        %v1282 = vadd.f32 %v1022, %v1281
        %1283 = vdwg.mxu0
        %v1284 = vsel %vm695, %v1282, -inf
        %1285 = vmax.xlane.f32.xlu0 %v1284
        %v1286 = vpop.xlane.xlu0 %1285
        %v1287 = vsub.f32 %v1282, %v1286
        %v1288 = vmul.f32 %v1287, 1.442695
        %v1289 = vpow.pop %v1288
        %v1290 = vsel %vm695, %v1289, 0.0
        %1291 = vadd.xlane.f32.xlu0 %v1290
        %v1292 = vpop.xlane.xlu0 %1291
        %v1293 = vrcp.pop %v1292
        %v1294 = vmul.f32 %v1292, %v1293
        %v1295 = vsub.f32 1.0, %v1294
        %v1296 = vmul.f32 %v1293, %v1295
        %v1297 = vadd.f32 %v1293, %v1296
        %vm1298 = vweird.f32 %v1292
        %vm1299 = vweird.f32 %v1293
        %vm1300 = vmor %vm1298, %vm1299
        %v1301 = vsel %vm1300, %v1293, %v1297
        %v1302 = vand.u32 2147483647, %v1292
        %vm1303 = vcmp.eq.f32.partialorder %v1302, 8.507059e+37
        %v1304 = vand.u32 %v1292, 2147483648
        %v1305 = vor.u32 1.1754944e-38, %v1304
        %v1306 = vsel %vm1303, %v1305, %v1301
        %v1307 = vmul.f32 %v1289, %v1306
        %1308 = vrot.lane.b32.xlu0 %v689, 40
        %v1309 = vpop.permute.xlu0 %1308
        %v1312 = vsel %vm695, %v1307, 0
        %1314 = vmatpush.msra.mxu0 0.0
        %1315 = vmatpush.msra.mxu0 0.0
        %1316 = vmatpush.msra.mxu0 0.0
        %1317 = vmatpush.msra.mxu0 0.0
        %1318 = vmatpush.msra.mxu0 0.0
        %1319 = vmatpush.msra.mxu0 0.0
        %1320 = vmatpush.msra.mxu0 0.0
        %1321 = vmatpush.msra.mxu0 0.0
        %1322 = vmatpush.msra.mxu0 0.0
        %1323 = vmatpush.msra.mxu0 0.0
        %1324 = vmatpush.msra.mxu0 0.0
        %1325 = vmatpush.msra.mxu0 0.0
        %1326 = vmatpush.msra.mxu0 0.0
        %1327 = vmatpush.msra.mxu0 0.0
        %1328 = vmatpush.msra.mxu0 0.0
        %1329 = vmatpush.msra.mxu0 %v1309
        %1330 = vmatmul.f32.gmra.mxu0 %v1312
        %v1331 = vpop.f32.mrf.mxu0
        %v1332 = vadd.f32 0.0, %v1331
        %1333 = vdwg.mxu0
        %1335 = vrot.lane.b32.xlu0 %v1176, 8
        %v1336 = vpop.permute.xlu0 %1335
        %1339 = vrot.lane.b32.xlu0 %v1254, 16
        %v1340 = vpop.permute.xlu0 %1339
        %1343 = vrot.lane.b32.xlu0 %v1332, 24
        %v1344 = vpop.permute.xlu0 %1343
        %v1346 = vsel %vm695, %v1098, %v1336
        %v1347 = vsel %vm1017, %v1346, %v1340
        %v1348 = vsel %vm1019, %v1347, %v1344
        %v1349 = vperm.slane %v649, 1
        %1354 = vrot.lane.b32.xlu0 %v641, 32
        %v1355 = vpop.permute.xlu0 %1354
        %1356 = vrot.lane.b32.xlu0 %v643, 32
        %v1357 = vpop.permute.xlu0 %1356
        %1358 = vrot.lane.b32.xlu0 %v645, 32
        %v1359 = vpop.permute.xlu0 %1358
        %1360 = vrot.lane.b32.xlu0 %v647, 32
        %v1361 = vpop.permute.xlu0 %1360
        %v1367 = vsel %vm661, %v1020, 0
        %v1370 = vsel %vm661, %v1348, 0
        %1372 = vmatpush.msra.mxu0 0.0
        %1373 = vmatpush.msra.mxu0 0.0
        %1374 = vmatpush.msra.mxu0 0.0
        %1375 = vmatpush.msra.mxu0 0.0
        %1376 = vmatpush.msra.mxu0 0.0
        %1377 = vmatpush.msra.mxu0 0.0
        %1378 = vmatpush.msra.mxu0 0.0
        %1379 = vmatpush.msra.mxu0 0.0
        %1380 = vmatpush.msra.mxu0 0.0
        %1381 = vmatpush.msra.mxu0 0.0
        %1382 = vmatpush.msra.mxu0 0.0
        %1383 = vmatpush.msra.mxu0 0.0
        %1384 = vmatpush.msra.mxu0 %v1361
        %1385 = vmatpush.msra.mxu0 %v1359
        %1386 = vmatpush.msra.mxu0 %v1357
        %1387 = vmatpush.msra.mxu0 %v1355
        %1388 = vmatmul.f32.gmra.mxu0 %v1367
        %v1389 = vpop.f32.mrf.mxu0
        %v1390 = vadd.f32 %v1349, %v1389
        %1391 = vmatmul.f32.gmra.mxu0 %v1370
        %v1392 = vpop.f32.mrf.mxu0
        %v1393 = vadd.f32 %v1349, %v1392
        %1394 = vdwg.mxu0
        %v1395 = vadd.f32 %v658, %v1390
        %v1396 = vadd.f32 %v659, %v1393
        %v1397 = vsel %vm661, %v1395, 0.0
        %1398 = vadd.xlane.f32.xlu0 %v1397
        %v1399 = vpop.xlane.xlu0 %1398
        %v1400 = vsel %vm661, %v1396, 0.0
        %1401 = vadd.xlane.f32.xlu0 %v1400
        %v1402 = vpop.xlane.xlu0 %1401
        %v1403 = vrcp.pop 32.0
        %v1404 = vmul.f32 32.0, %v1403
        %v1405 = vsub.f32 1.0, %v1404
        %v1406 = vmul.f32 %v1403, %v1405
        %v1407 = vadd.f32 %v1403, %v1406
        %vm1408 = vweird.f32 %v1403
        %v1409 = vsel %vm1408, %v1403, %v1407
        %v1410 = vmul.f32 %v1399, %v1409
        %v1411 = vmul.f32 %v1402, %v1409
        %v1412 = vmul.f32 %v1395, %v1395
        %v1413 = vmul.f32 %v1396, %v1396
        %v1414 = vsel %vm661, %v1412, 0.0
        %1415 = vadd.xlane.f32.xlu0 %v1414
        %v1416 = vpop.xlane.xlu0 %1415
        %v1417 = vsel %vm661, %v1413, 0.0
        %1418 = vadd.xlane.f32.xlu0 %v1417
        %v1419 = vpop.xlane.xlu0 %1418
        %v1420 = vmul.f32 %v1416, %v1409
        %v1421 = vmul.f32 %v1419, %v1409
        %v1422 = vmul.f32 %v1410, %v1410
        %v1423 = vmul.f32 %v1411, %v1411
        %v1424 = vsub.f32 %v1420, %v1422
        %v1425 = vsub.f32 %v1421, %v1423
        %v1426 = vsub.f32 %v1395, %v1410
        %v1427 = vsub.f32 %v1396, %v1411
        %v1428 = vadd.f32 %v1424, 1e-05
        %v1429 = vadd.f32 %v1425, 1e-05
        %v1430 = vrsqrt.pop %v1428
        %v1431 = vmul.f32 %v1430, %v1428
        %v1432 = vmul.f32 %v1431, %v1430
        %v1433 = vmul.f32 0.5, %v1432
        %v1434 = vsub.f32 1.5, %v1433
        %v1435 = vmul.f32 %v1430, %v1434
        %vm1436 = vweird.f32 %v1428
        %vm1437 = vweird.f32 %v1430
        %vm1438 = vmor %vm1436, %vm1437
        %v1439 = vsel %vm1438, %v1430, %v1435
        %v1440 = vrsqrt.pop %v1429
        %v1441 = vmul.f32 %v1440, %v1429
        %v1442 = vmul.f32 %v1441, %v1440
        %v1443 = vmul.f32 0.5, %v1442
        %v1444 = vsub.f32 1.5, %v1443
        %v1445 = vmul.f32 %v1440, %v1444
        %vm1446 = vweird.f32 %v1429
        %vm1447 = vweird.f32 %v1440
        %vm1448 = vmor %vm1446, %vm1447
        %v1449 = vsel %vm1448, %v1440, %v1445
        %v1450 = vmul.f32 %v1426, %v1439
        %v1451 = vmul.f32 %v1427, %v1449
        %v1452 = vperm.slane %v649, 4
        %v1453 = vmul.f32 %v1450, %v1452
        %v1454 = vmul.f32 %v1451, %v1452
        %v1455 = vperm.slane %v649, 5
        %v1456 = vadd.f32 %v1453, %v1455
        %v1457 = vadd.f32 %v1454, %v1455
        %v1458 = vperm.slane %v649, 2
        %v1460 = vsel %vm661, %v1456, 0
        %v1463 = vsel %vm661, %v1457, 0
        %1465 = vmatpush.msra.mxu0 0.0
        %1466 = vmatpush.msra.mxu0 0.0
        %1467 = vmatpush.msra.mxu0 0.0
        %1468 = vmatpush.msra.mxu0 0.0
        %1469 = vmatpush.msra.mxu0 0.0
        %1470 = vmatpush.msra.mxu0 0.0
        %1471 = vmatpush.msra.mxu0 0.0
        %1472 = vmatpush.msra.mxu0 0.0
        %1473 = vmatpush.msra.mxu0 0.0
        %1474 = vmatpush.msra.mxu0 0.0
        %1475 = vmatpush.msra.mxu0 0.0
        %1476 = vmatpush.msra.mxu0 0.0
        %1477 = vmatpush.msra.mxu0 %v648
        %1478 = vmatpush.msra.mxu0 %v646
        %1479 = vmatpush.msra.mxu0 %v644
        %1480 = vmatpush.msra.mxu0 %v642
        %1481 = vmatmul.f32.gmra.mxu0 %v1460
        %v1482 = vpop.f32.mrf.mxu0
        %v1483 = vadd.f32 %v1458, %v1482
        %1484 = vmatmul.f32.gmra.mxu0 %v1463
        %v1485 = vpop.f32.mrf.mxu0
        %v1486 = vadd.f32 %v1458, %v1485
        %1487 = vdwg.mxu0
        %v1488 = vmax.f32 %v1483, 0.0
        %v1489 = vmax.f32 %v1486, 0.0
        %v1490 = vperm.slane %v649, 3
        %vm1491 = vcmask 523264
        %v1493 = vsel %vm1491, %v1488, 0
        %v1496 = vsel %vm1491, %v1489, 0
        %1498 = vmatpush.msra.mxu0 0.0
        %1499 = vmatpush.msra.mxu0 0.0
        %1500 = vmatpush.msra.mxu0 0.0
        %1501 = vmatpush.msra.mxu0 0.0
        %1502 = vmatpush.msra.mxu0 0.0
        %1503 = vmatpush.msra.mxu0 0.0
        %1504 = vmatpush.msra.mxu0 0.0
        %1505 = vmatpush.msra.mxu0 0.0
        %1506 = vmatpush.msra.mxu0 %v657
        %1507 = vmatpush.msra.mxu0 %v656
        %1508 = vmatpush.msra.mxu0 %v655
        %1509 = vmatpush.msra.mxu0 %v654
        %1510 = vmatpush.msra.mxu0 %v653
        %1511 = vmatpush.msra.mxu0 %v652
        %1512 = vmatpush.msra.mxu0 %v651
        %1513 = vmatpush.msra.mxu0 %v650
        %1514 = vmatmul.f32.gmra.mxu0 %v1493
        %v1515 = vpop.f32.mrf.mxu0
        %v1516 = vadd.f32 %v1490, %v1515
        %1517 = vmatmul.f32.gmra.mxu0 %v1496
        %v1518 = vpop.f32.mrf.mxu0
        %v1519 = vadd.f32 %v1490, %v1518
        %1520 = vdwg.mxu0
        %v1521 = vadd.f32 %v1456, %v1516
        %v1522 = vadd.f32 %v1457, %v1519
        %v1523 = vsel %vm661, %v1521, 0.0
        %1524 = vadd.xlane.f32.xlu0 %v1523
        %v1525 = vpop.xlane.xlu0 %1524
        %v1526 = vsel %vm661, %v1522, 0.0
        %1527 = vadd.xlane.f32.xlu0 %v1526
        %v1528 = vpop.xlane.xlu0 %1527
        %v1529 = vmul.f32 %v1525, %v1409
        %v1530 = vmul.f32 %v1528, %v1409
        %v1531 = vmul.f32 %v1521, %v1521
        %v1532 = vmul.f32 %v1522, %v1522
        %v1533 = vsel %vm661, %v1531, 0.0
        %1534 = vadd.xlane.f32.xlu0 %v1533
        %v1535 = vpop.xlane.xlu0 %1534
        %v1536 = vsel %vm661, %v1532, 0.0
        %1537 = vadd.xlane.f32.xlu0 %v1536
        %v1538 = vpop.xlane.xlu0 %1537
        %v1539 = vmul.f32 %v1535, %v1409
        %v1540 = vmul.f32 %v1538, %v1409
        %v1541 = vmul.f32 %v1529, %v1529
        %v1542 = vmul.f32 %v1530, %v1530
        %v1543 = vsub.f32 %v1539, %v1541
        %v1544 = vsub.f32 %v1540, %v1542
        %v1545 = vsub.f32 %v1521, %v1529
        %v1546 = vsub.f32 %v1522, %v1530
        %v1547 = vadd.f32 %v1543, 1e-05
        %v1548 = vadd.f32 %v1544, 1e-05
        %v1549 = vrsqrt.pop %v1547
        %v1550 = vmul.f32 %v1549, %v1547
        %v1551 = vmul.f32 %v1550, %v1549
        %v1552 = vmul.f32 0.5, %v1551
        %v1553 = vsub.f32 1.5, %v1552
        %v1554 = vmul.f32 %v1549, %v1553
        %vm1555 = vweird.f32 %v1547
        %vm1556 = vweird.f32 %v1549
        %vm1557 = vmor %vm1555, %vm1556
        %v1558 = vsel %vm1557, %v1549, %v1554
        %v1559 = vrsqrt.pop %v1548
        %v1560 = vmul.f32 %v1559, %v1548
        %v1561 = vmul.f32 %v1560, %v1559
        %v1562 = vmul.f32 0.5, %v1561
        %v1563 = vsub.f32 1.5, %v1562
        %v1564 = vmul.f32 %v1559, %v1563
        %vm1565 = vweird.f32 %v1548
        %vm1566 = vweird.f32 %v1559
        %vm1567 = vmor %vm1565, %vm1566
        %v1568 = vsel %vm1567, %v1559, %v1564
        %v1569 = vmul.f32 %v1545, %v1558
        %v1570 = vmul.f32 %v1546, %v1568
        %v1571 = vperm.slane %v649, 6
        %v1572 = vmul.f32 %v1569, %v1571
        %v1573 = vmul.f32 %v1570, %v1571
        %v1574 = vperm.slane %v649, 7
        %v1575 = vadd.f32 %v1572, %v1574
        %v1576 = vadd.f32 %v1573, %v1574
        %1577 = vst.msk [vmem:[#allocation2] sm:$0xff] %vm661, %v1575
        %1578 = vst.msk [vmem:[#allocation2 + $0x8] sm:$0xff] %vm661, %v1576
      $region80: #{seq2seq_forward.1} parent=71 // pred_fallthru
        _
      %p1579 = scmp.eq.s32.totalorder %s24, 2
      // Predicated region
      $region81: #{seq2seq_forward.1} parent=71 // pred_check
        %p1580 = pneg %p1579
      $region82: #{seq2seq_forward.1} parent=71 // pred_check_branch
        %1582 = sbr.rel (%p1580) target = $region84
      $region83: #{seq2seq_forward.1} parent=71 // pred_region
        %v1583 = vld [vmem:[#allocation2] sm:$0xff]
        %v1584 = vld [vmem:[#allocation2 + $0x8] sm:$0xff]
        %v1585 = vld [vmem:[%s5] sm:$0x1]
        %v1586 = vld [vmem:[%s5 + $0x1] sm:$0x1]
        %vm1587 = vcmask 261120
        %v1588 = vsel %vm1587, %v1583, 0.0
        %1589 = vadd.xlane.f32.xlu0 %v1588
        %v1590 = vpop.xlane.xlu0 %1589
        %v1591 = vsel %vm1587, %v1584, 0.0
        %1592 = vadd.xlane.f32.xlu0 %v1591
        %v1593 = vpop.xlane.xlu0 %1592
        %v1594 = vrcp.pop 32.0
        %v1595 = vmul.f32 32.0, %v1594
        %v1596 = vsub.f32 1.0, %v1595
        %v1597 = vmul.f32 %v1594, %v1596
        %v1598 = vadd.f32 %v1594, %v1597
        %vm1599 = vweird.f32 %v1594
        %v1600 = vsel %vm1599, %v1594, %v1598
        %v1601 = vmul.f32 %v1590, %v1600
        %v1602 = vmul.f32 %v1593, %v1600
        %v1603 = vmul.f32 %v1583, %v1583
        %v1604 = vmul.f32 %v1584, %v1584
        %v1605 = vsel %vm1587, %v1603, 0.0
        %1606 = vadd.xlane.f32.xlu0 %v1605
        %v1607 = vpop.xlane.xlu0 %1606
        %v1608 = vsel %vm1587, %v1604, 0.0
        %1609 = vadd.xlane.f32.xlu0 %v1608
        %v1610 = vpop.xlane.xlu0 %1609
        %v1611 = vmul.f32 %v1607, %v1600
        %v1612 = vmul.f32 %v1610, %v1600
        %v1613 = vmul.f32 %v1601, %v1601
        %v1614 = vmul.f32 %v1602, %v1602
        %v1615 = vsub.f32 %v1611, %v1613
        %v1616 = vsub.f32 %v1612, %v1614
        %v1617 = vsub.f32 %v1583, %v1601
        %v1618 = vsub.f32 %v1584, %v1602
        %v1619 = vadd.f32 %v1615, 1e-05
        %v1620 = vadd.f32 %v1616, 1e-05
        %v1621 = vrsqrt.pop %v1619
        %v1622 = vmul.f32 %v1621, %v1619
        %v1623 = vmul.f32 %v1622, %v1621
        %v1624 = vmul.f32 0.5, %v1623
        %v1625 = vsub.f32 1.5, %v1624
        %v1626 = vmul.f32 %v1621, %v1625
        %vm1627 = vweird.f32 %v1619
        %vm1628 = vweird.f32 %v1621
        %vm1629 = vmor %vm1627, %vm1628
        %v1630 = vsel %vm1629, %v1621, %v1626
        %v1631 = vrsqrt.pop %v1620
        %v1632 = vmul.f32 %v1631, %v1620
        %v1633 = vmul.f32 %v1632, %v1631
        %v1634 = vmul.f32 0.5, %v1633
        %v1635 = vsub.f32 1.5, %v1634
        %v1636 = vmul.f32 %v1631, %v1635
        %vm1637 = vweird.f32 %v1620
        %vm1638 = vweird.f32 %v1631
        %vm1639 = vmor %vm1637, %vm1638
        %v1640 = vsel %vm1639, %v1631, %v1636
        %v1641 = vmul.f32 %v1617, %v1630
        %v1642 = vmul.f32 %v1618, %v1640
        %v1643 = vperm.slane %v1585, 0
        %v1644 = vmul.f32 %v1641, %v1643
        %v1645 = vmul.f32 %v1642, %v1643
        %v1646 = vperm.slane %v1586, 0
        %v1647 = vadd.f32 %v1644, %v1646
        %v1648 = vadd.f32 %v1645, %v1646
        %1649 = vst.msk [vmem:[#allocation2] sm:$0xff] %vm1587, %v1647
        %1650 = vst.msk [vmem:[#allocation2 + $0x8] sm:$0xff] %vm1587, %v1648
        %v1651 = vld [vmem:[%s1] sm:$0xff]
        %v1652 = vld [vmem:[%s1 + $0x8] sm:$0xff]
        %1653 = vst.msk [vmem:[#allocation3] sm:$0xff] %vm1587, %v1651
        %1654 = vst.msk [vmem:[#allocation3 + $0x8] sm:$0xff] %vm1587, %v1652
      $region84: #{seq2seq_forward.1} parent=71 // pred_fallthru
        _
      %p1655 = scmp.ge.s32.totalorder %s24, 2
      // Predicated region
      $region85: #{seq2seq_forward.1} parent=71 // pred_check
        %p1656 = pneg %p1655
      $region86: #{seq2seq_forward.1} parent=71 // pred_check_branch
        %1658 = sbr.rel (%p1656) target = $region88
      $region87: #{seq2seq_forward.1} parent=71 // pred_region
        %v1659 = vld [vmem:[%s602] sm:$0xff]
        %v1660 = vld [vmem:[%s602 + $0x8] sm:$0xff]
        %v1661 = vld [vmem:[%s602 + $0x10] sm:$0xff]
        %v1662 = vld [vmem:[%s602 + $0x18] sm:$0xff]
        %v1663 = vld [vmem:[%s602 + $0x20] sm:$0xff]
        %v1664 = vld [vmem:[%s602 + $0x28] sm:$0xff]
        %v1665 = vld [vmem:[%s602 + $0x30] sm:$0xff]
        %v1666 = vld [vmem:[%s602 + $0x38] sm:$0xff]
        %v1667 = vld [vmem:[%s602 + $0x40] sm:$0xff]
        %v1668 = vld [vmem:[%s602 + $0x48] sm:$0xff]
        %v1669 = vld [vmem:[%s602 + $0x50] sm:$0xff]
        %v1670 = vld [vmem:[%s602 + $0x58] sm:$0xff]
        %v1671 = vld [vmem:[%s624] sm:$0xff]
        %v1672 = vld [vmem:[%s624 + $0x8] sm:$0x1f]
        %v1673 = vld [vmem:[%s613] sm:$0xff]
        %v1674 = vld [vmem:[%s613 + $0x8] sm:$0xff]
        %v1675 = vld [vmem:[%s613 + $0x10] sm:$0xff]
        %v1676 = vld [vmem:[%s613 + $0x18] sm:$0xff]
        %v1677 = vld [vmem:[%s613 + $0x20] sm:$0xff]
        %v1678 = vld [vmem:[%s613 + $0x28] sm:$0xff]
        %v1679 = vld [vmem:[%s613 + $0x30] sm:$0xff]
        %v1680 = vld [vmem:[%s613 + $0x38] sm:$0xff]
        %v1681 = vld [vmem:[#allocation3] sm:$0xff]
        %v1682 = vld [vmem:[#allocation3 + $0x8] sm:$0xff]
        %v1683 = vld [vmem:[#allocation2] sm:$0xff]
        %v1684 = vld [vmem:[#allocation2 + $0x8] sm:$0xff]
        %v1685 = vperm.slane %v1671, 0
        %vm1686 = vcmask 261120
        %v1688 = vsel %vm1686, %v1681, 0
        %v1691 = vsel %vm1686, %v1682, 0
        %1693 = vmatpush.msra.mxu0 0.0
        %1694 = vmatpush.msra.mxu0 0.0
        %1695 = vmatpush.msra.mxu0 0.0
        %1696 = vmatpush.msra.mxu0 0.0
        %1697 = vmatpush.msra.mxu0 0.0
        %1698 = vmatpush.msra.mxu0 0.0
        %1699 = vmatpush.msra.mxu0 0.0
        %1700 = vmatpush.msra.mxu0 0.0
        %1701 = vmatpush.msra.mxu0 0.0
        %1702 = vmatpush.msra.mxu0 0.0
        %1703 = vmatpush.msra.mxu0 0.0
        %1704 = vmatpush.msra.mxu0 0.0
        %1705 = vmatpush.msra.mxu0 %v1668
        %1706 = vmatpush.msra.mxu0 %v1665
        %1707 = vmatpush.msra.mxu0 %v1662
        %1708 = vmatpush.msra.mxu0 %v1659
        %1709 = vmatmul.f32.gmra.mxu0 %v1688
        %v1710 = vpop.f32.mrf.mxu0
        %v1711 = vadd.f32 %v1685, %v1710
        %1712 = vmatmul.f32.gmra.mxu0 %v1691
        %v1713 = vpop.f32.mrf.mxu0
        %v1714 = vadd.f32 %v1685, %v1713
        %1715 = vdwg.mxu0
        %v1716 = vld [vmem:[%s3] sm:$0xff]
        %1718 = vrot.lane.b32.xlu0 %v1711, 96
        %v1719 = vpop.permute.xlu0 %1718
        %vm1720 = vcmask 64512
        %v1721 = vsel %vm1720, %v1711, 0
        %v1723 = vsel %vm1720, %v1719, 0
        %1725 = vmatpush.xpose.msra.mxu0 0.0
        %1726 = vmatpush.xpose.msra.mxu0 0.0
        %1727 = vmatpush.xpose.msra.mxu0 0.0
        %1728 = vmatpush.xpose.msra.mxu0 0.0
        %1729 = vmatpush.xpose.msra.mxu0 0.0
        %1730 = vmatpush.xpose.msra.mxu0 0.0
        %1731 = vmatpush.xpose.msra.mxu0 0.0
        %1732 = vmatpush.xpose.msra.mxu0 0.0
        %1733 = vmatpush.xpose.msra.mxu0 0.0
        %1734 = vmatpush.xpose.msra.mxu0 0.0
        %1735 = vmatpush.xpose.msra.mxu0 0.0
        %1736 = vmatpush.xpose.msra.mxu0 0.0
        %1737 = vmatpush.xpose.msra.mxu0 0.0
        %1738 = vmatpush.xpose.msra.mxu0 0.0
        %1739 = vmatpush.xpose.msra.mxu0 0.0
        %1740 = vmatpush.xpose.msra.mxu0 %v1723
        %1741 = vmatmul.f32.gmra.mxu0 %v1721
        %v1742 = vpop.f32.mrf.mxu0
        %v1743 = vadd.f32 %v1716, %v1742
        %1744 = vdwg.mxu0
        %v1745 = vsel %vm1720, %v1743, -inf
        %1746 = vmax.xlane.f32.xlu0 %v1745
        %v1747 = vpop.xlane.xlu0 %1746
        %v1748 = vsub.f32 %v1743, %v1747
        %v1749 = vmul.f32 %v1748, 1.442695
        %v1750 = vpow.pop %v1749
        %v1751 = vsel %vm1720, %v1750, 0.0
        %1752 = vadd.xlane.f32.xlu0 %v1751
        %v1753 = vpop.xlane.xlu0 %1752
        %v1754 = vrcp.pop %v1753
        %v1755 = vmul.f32 %v1753, %v1754
        %v1756 = vsub.f32 1.0, %v1755
        %v1757 = vmul.f32 %v1754, %v1756
        %v1758 = vadd.f32 %v1754, %v1757
        %vm1759 = vweird.f32 %v1753
        %vm1760 = vweird.f32 %v1754
        %vm1761 = vmor %vm1759, %vm1760
        %v1762 = vsel %vm1761, %v1754, %v1758
        %v1763 = vand.u32 2147483647, %v1753
        %vm1764 = vcmp.eq.f32.partialorder %v1763, 8.507059e+37
        %v1765 = vand.u32 %v1753, 2147483648
        %v1766 = vor.u32 1.1754944e-38, %v1765
        %v1767 = vsel %vm1764, %v1766, %v1762
        %v1768 = vmul.f32 %v1750, %v1767
        %1769 = vrot.lane.b32.xlu0 %v1711, 64
        %v1770 = vpop.permute.xlu0 %1769
        %v1773 = vsel %vm1720, %v1768, 0
        %1775 = vmatpush.msra.mxu0 0.0
        %1776 = vmatpush.msra.mxu0 0.0
        %1777 = vmatpush.msra.mxu0 0.0
        %1778 = vmatpush.msra.mxu0 0.0
        %1779 = vmatpush.msra.mxu0 0.0
        %1780 = vmatpush.msra.mxu0 0.0
        %1781 = vmatpush.msra.mxu0 0.0
        %1782 = vmatpush.msra.mxu0 0.0
        %1783 = vmatpush.msra.mxu0 0.0
        %1784 = vmatpush.msra.mxu0 0.0
        %1785 = vmatpush.msra.mxu0 0.0
        %1786 = vmatpush.msra.mxu0 0.0
        %1787 = vmatpush.msra.mxu0 0.0
        %1788 = vmatpush.msra.mxu0 0.0
        %1789 = vmatpush.msra.mxu0 0.0
        %1790 = vmatpush.msra.mxu0 %v1770
        %1791 = vmatmul.f32.gmra.mxu0 %v1773
        %v1792 = vpop.f32.mrf.mxu0
        %v1793 = vadd.f32 0.0, %v1792
        %1794 = vdwg.mxu0
        %1795 = vrot.lane.b32.xlu0 %v1711, 120
        %v1796 = vpop.permute.xlu0 %1795
        %1797 = vrot.lane.b32.xlu0 %v1711, 88
        %v1798 = vpop.permute.xlu0 %1797
        %v1799 = vsel %vm1720, %v1796, 0
        %v1801 = vsel %vm1720, %v1798, 0
        %1803 = vmatpush.xpose.msra.mxu0 0.0
        %1804 = vmatpush.xpose.msra.mxu0 0.0
        %1805 = vmatpush.xpose.msra.mxu0 0.0
        %1806 = vmatpush.xpose.msra.mxu0 0.0
        %1807 = vmatpush.xpose.msra.mxu0 0.0
        %1808 = vmatpush.xpose.msra.mxu0 0.0
        %1809 = vmatpush.xpose.msra.mxu0 0.0
        %1810 = vmatpush.xpose.msra.mxu0 0.0
        %1811 = vmatpush.xpose.msra.mxu0 0.0
        %1812 = vmatpush.xpose.msra.mxu0 0.0
        %1813 = vmatpush.xpose.msra.mxu0 0.0
        %1814 = vmatpush.xpose.msra.mxu0 0.0
        %1815 = vmatpush.xpose.msra.mxu0 0.0
        %1816 = vmatpush.xpose.msra.mxu0 0.0
        %1817 = vmatpush.xpose.msra.mxu0 0.0
        %1818 = vmatpush.xpose.msra.mxu0 %v1801
        %1819 = vmatmul.f32.gmra.mxu0 %v1799
        %v1820 = vpop.f32.mrf.mxu0
        %v1821 = vadd.f32 %v1716, %v1820
        %1822 = vdwg.mxu0
        %v1823 = vsel %vm1720, %v1821, -inf
        %1824 = vmax.xlane.f32.xlu0 %v1823
        %v1825 = vpop.xlane.xlu0 %1824
        %v1826 = vsub.f32 %v1821, %v1825
        %v1827 = vmul.f32 %v1826, 1.442695
        %v1828 = vpow.pop %v1827
        %v1829 = vsel %vm1720, %v1828, 0.0
        %1830 = vadd.xlane.f32.xlu0 %v1829
        %v1831 = vpop.xlane.xlu0 %1830
        %v1832 = vrcp.pop %v1831
        %v1833 = vmul.f32 %v1831, %v1832
        %v1834 = vsub.f32 1.0, %v1833
        %v1835 = vmul.f32 %v1832, %v1834
        %v1836 = vadd.f32 %v1832, %v1835
        %vm1837 = vweird.f32 %v1831
        %vm1838 = vweird.f32 %v1832
        %vm1839 = vmor %vm1837, %vm1838
        %v1840 = vsel %vm1839, %v1832, %v1836
        %v1841 = vand.u32 2147483647, %v1831
        %vm1842 = vcmp.eq.f32.partialorder %v1841, 8.507059e+37
        %v1843 = vand.u32 %v1831, 2147483648
        %v1844 = vor.u32 1.1754944e-38, %v1843
        %v1845 = vsel %vm1842, %v1844, %v1840
        %v1846 = vmul.f32 %v1828, %v1845
        %1847 = vrot.lane.b32.xlu0 %v1711, 56
        %v1848 = vpop.permute.xlu0 %1847
        %v1851 = vsel %vm1720, %v1846, 0
        %1853 = vmatpush.msra.mxu0 0.0
        %1854 = vmatpush.msra.mxu0 0.0
        %1855 = vmatpush.msra.mxu0 0.0
        %1856 = vmatpush.msra.mxu0 0.0
        %1857 = vmatpush.msra.mxu0 0.0
        %1858 = vmatpush.msra.mxu0 0.0
        %1859 = vmatpush.msra.mxu0 0.0
        %1860 = vmatpush.msra.mxu0 0.0
        %1861 = vmatpush.msra.mxu0 0.0
        %1862 = vmatpush.msra.mxu0 0.0
        %1863 = vmatpush.msra.mxu0 0.0
        %1864 = vmatpush.msra.mxu0 0.0
        %1865 = vmatpush.msra.mxu0 0.0
        %1866 = vmatpush.msra.mxu0 0.0
        %1867 = vmatpush.msra.mxu0 0.0
        %1868 = vmatpush.msra.mxu0 %v1848
        %1869 = vmatmul.f32.gmra.mxu0 %v1851
        %v1870 = vpop.f32.mrf.mxu0
        %v1871 = vadd.f32 0.0, %v1870
        %1872 = vdwg.mxu0
        %1873 = vrot.lane.b32.xlu0 %v1711, 112
        %v1874 = vpop.permute.xlu0 %1873
        %1875 = vrot.lane.b32.xlu0 %v1711, 80
        %v1876 = vpop.permute.xlu0 %1875
        %v1877 = vsel %vm1720, %v1874, 0
        %v1879 = vsel %vm1720, %v1876, 0
        %1881 = vmatpush.xpose.msra.mxu0 0.0
        %1882 = vmatpush.xpose.msra.mxu0 0.0
        %1883 = vmatpush.xpose.msra.mxu0 0.0
        %1884 = vmatpush.xpose.msra.mxu0 0.0
        %1885 = vmatpush.xpose.msra.mxu0 0.0
        %1886 = vmatpush.xpose.msra.mxu0 0.0
        %1887 = vmatpush.xpose.msra.mxu0 0.0
        %1888 = vmatpush.xpose.msra.mxu0 0.0
        %1889 = vmatpush.xpose.msra.mxu0 0.0
        %1890 = vmatpush.xpose.msra.mxu0 0.0
        %1891 = vmatpush.xpose.msra.mxu0 0.0
        %1892 = vmatpush.xpose.msra.mxu0 0.0
        %1893 = vmatpush.xpose.msra.mxu0 0.0
        %1894 = vmatpush.xpose.msra.mxu0 0.0
        %1895 = vmatpush.xpose.msra.mxu0 0.0
        %1896 = vmatpush.xpose.msra.mxu0 %v1879
        %1897 = vmatmul.f32.gmra.mxu0 %v1877
        %v1898 = vpop.f32.mrf.mxu0
        %v1899 = vadd.f32 %v1716, %v1898
        %1900 = vdwg.mxu0
        %v1901 = vsel %vm1720, %v1899, -inf
        %1902 = vmax.xlane.f32.xlu0 %v1901
        %v1903 = vpop.xlane.xlu0 %1902
        %v1904 = vsub.f32 %v1899, %v1903
        %v1905 = vmul.f32 %v1904, 1.442695
        %v1906 = vpow.pop %v1905
        %v1907 = vsel %vm1720, %v1906, 0.0
        %1908 = vadd.xlane.f32.xlu0 %v1907
        %v1909 = vpop.xlane.xlu0 %1908
        %v1910 = vrcp.pop %v1909
        %v1911 = vmul.f32 %v1909, %v1910
        %v1912 = vsub.f32 1.0, %v1911
        %v1913 = vmul.f32 %v1910, %v1912
        %v1914 = vadd.f32 %v1910, %v1913
        %vm1915 = vweird.f32 %v1909
        %vm1916 = vweird.f32 %v1910
        %vm1917 = vmor %vm1915, %vm1916
        %v1918 = vsel %vm1917, %v1910, %v1914
        %v1919 = vand.u32 2147483647, %v1909
        %vm1920 = vcmp.eq.f32.partialorder %v1919, 8.507059e+37
        %v1921 = vand.u32 %v1909, 2147483648
        %v1922 = vor.u32 1.1754944e-38, %v1921
        %v1923 = vsel %vm1920, %v1922, %v1918
        %v1924 = vmul.f32 %v1906, %v1923
        %1925 = vrot.lane.b32.xlu0 %v1711, 48
        %v1926 = vpop.permute.xlu0 %1925
        %v1929 = vsel %vm1720, %v1924, 0
        %1931 = vmatpush.msra.mxu0 0.0
        %1932 = vmatpush.msra.mxu0 0.0
        %1933 = vmatpush.msra.mxu0 0.0
        %1934 = vmatpush.msra.mxu0 0.0
        %1935 = vmatpush.msra.mxu0 0.0
        %1936 = vmatpush.msra.mxu0 0.0
        %1937 = vmatpush.msra.mxu0 0.0
        %1938 = vmatpush.msra.mxu0 0.0
        %1939 = vmatpush.msra.mxu0 0.0
        %1940 = vmatpush.msra.mxu0 0.0
        %1941 = vmatpush.msra.mxu0 0.0
        %1942 = vmatpush.msra.mxu0 0.0
        %1943 = vmatpush.msra.mxu0 0.0
        %1944 = vmatpush.msra.mxu0 0.0
        %1945 = vmatpush.msra.mxu0 0.0
        %1946 = vmatpush.msra.mxu0 %v1926
        %1947 = vmatmul.f32.gmra.mxu0 %v1929
        %v1948 = vpop.f32.mrf.mxu0
        %v1949 = vadd.f32 0.0, %v1948
        %1950 = vdwg.mxu0
        %1951 = vrot.lane.b32.xlu0 %v1711, 104
        %v1952 = vpop.permute.xlu0 %1951
        %1953 = vrot.lane.b32.xlu0 %v1711, 72
        %v1954 = vpop.permute.xlu0 %1953
        %v1955 = vsel %vm1720, %v1952, 0
        %v1957 = vsel %vm1720, %v1954, 0
        %1959 = vmatpush.xpose.msra.mxu0 0.0
        %1960 = vmatpush.xpose.msra.mxu0 0.0
        %1961 = vmatpush.xpose.msra.mxu0 0.0
        %1962 = vmatpush.xpose.msra.mxu0 0.0
        %1963 = vmatpush.xpose.msra.mxu0 0.0
        %1964 = vmatpush.xpose.msra.mxu0 0.0
        %1965 = vmatpush.xpose.msra.mxu0 0.0
        %1966 = vmatpush.xpose.msra.mxu0 0.0
        %1967 = vmatpush.xpose.msra.mxu0 0.0
        %1968 = vmatpush.xpose.msra.mxu0 0.0
        %1969 = vmatpush.xpose.msra.mxu0 0.0
        %1970 = vmatpush.xpose.msra.mxu0 0.0
        %1971 = vmatpush.xpose.msra.mxu0 0.0
        %1972 = vmatpush.xpose.msra.mxu0 0.0
        %1973 = vmatpush.xpose.msra.mxu0 0.0
        %1974 = vmatpush.xpose.msra.mxu0 %v1957
        %1975 = vmatmul.f32.gmra.mxu0 %v1955
        %v1976 = vpop.f32.mrf.mxu0
        %v1977 = vadd.f32 %v1716, %v1976
        %1978 = vdwg.mxu0
        %v1979 = vsel %vm1720, %v1977, -inf
        %1980 = vmax.xlane.f32.xlu0 %v1979
        %v1981 = vpop.xlane.xlu0 %1980
        %v1982 = vsub.f32 %v1977, %v1981
        %v1983 = vmul.f32 %v1982, 1.442695
        %v1984 = vpow.pop %v1983
        %v1985 = vsel %vm1720, %v1984, 0.0
        %1986 = vadd.xlane.f32.xlu0 %v1985
        %v1987 = vpop.xlane.xlu0 %1986
        %v1988 = vrcp.pop %v1987
        %v1989 = vmul.f32 %v1987, %v1988
        %v1990 = vsub.f32 1.0, %v1989
        %v1991 = vmul.f32 %v1988, %v1990
        %v1992 = vadd.f32 %v1988, %v1991
        %vm1993 = vweird.f32 %v1987
        %vm1994 = vweird.f32 %v1988
        %vm1995 = vmor %vm1993, %vm1994
        %v1996 = vsel %vm1995, %v1988, %v1992
        %v1997 = vand.u32 2147483647, %v1987
        %vm1998 = vcmp.eq.f32.partialorder %v1997, 8.507059e+37
        %v1999 = vand.u32 %v1987, 2147483648
        %v2000 = vor.u32 1.1754944e-38, %v1999
        %v2001 = vsel %vm1998, %v2000, %v1996
        %v2002 = vmul.f32 %v1984, %v2001
        %2003 = vrot.lane.b32.xlu0 %v1711, 40
        %v2004 = vpop.permute.xlu0 %2003
        %v2007 = vsel %vm1720, %v2002, 0
        %2009 = vmatpush.msra.mxu0 0.0
        %2010 = vmatpush.msra.mxu0 0.0
        %2011 = vmatpush.msra.mxu0 0.0
        %2012 = vmatpush.msra.mxu0 0.0
        %2013 = vmatpush.msra.mxu0 0.0
        %2014 = vmatpush.msra.mxu0 0.0
        %2015 = vmatpush.msra.mxu0 0.0
        %2016 = vmatpush.msra.mxu0 0.0
        %2017 = vmatpush.msra.mxu0 0.0
        %2018 = vmatpush.msra.mxu0 0.0
        %2019 = vmatpush.msra.mxu0 0.0
        %2020 = vmatpush.msra.mxu0 0.0
        %2021 = vmatpush.msra.mxu0 0.0
        %2022 = vmatpush.msra.mxu0 0.0
        %2023 = vmatpush.msra.mxu0 0.0
        %2024 = vmatpush.msra.mxu0 %v2004
        %2025 = vmatmul.f32.gmra.mxu0 %v2007
        %v2026 = vpop.f32.mrf.mxu0
        %v2027 = vadd.f32 0.0, %v2026
        %2028 = vdwg.mxu0
        %2030 = vrot.lane.b32.xlu0 %v1871, 8
        %v2031 = vpop.permute.xlu0 %2030
        %2034 = vrot.lane.b32.xlu0 %v1949, 16
        %v2035 = vpop.permute.xlu0 %2034
        %2038 = vrot.lane.b32.xlu0 %v2027, 24
        %v2039 = vpop.permute.xlu0 %2038
        %v2041 = vsel %vm1720, %v1793, %v2031
        %vm2042 = vcmask 130048
        %v2043 = vsel %vm2042, %v2041, %v2035
        %vm2044 = vcmask 195584
        %v2045 = vsel %vm2044, %v2043, %v2039
        %s2046 = scalar_lea.vmem %s3, 8
        %v2047 = vld [vmem:[%s2046] sm:$0xff]
        %2049 = vrot.lane.b32.xlu0 %v1714, 96
        %v2050 = vpop.permute.xlu0 %2049
        %v2051 = vsel %vm1720, %v1714, 0
        %v2053 = vsel %vm1720, %v2050, 0
        %2055 = vmatpush.xpose.msra.mxu0 0.0
        %2056 = vmatpush.xpose.msra.mxu0 0.0
        %2057 = vmatpush.xpose.msra.mxu0 0.0
        %2058 = vmatpush.xpose.msra.mxu0 0.0
        %2059 = vmatpush.xpose.msra.mxu0 0.0
        %2060 = vmatpush.xpose.msra.mxu0 0.0
        %2061 = vmatpush.xpose.msra.mxu0 0.0
        %2062 = vmatpush.xpose.msra.mxu0 0.0
        %2063 = vmatpush.xpose.msra.mxu0 0.0
        %2064 = vmatpush.xpose.msra.mxu0 0.0
        %2065 = vmatpush.xpose.msra.mxu0 0.0
        %2066 = vmatpush.xpose.msra.mxu0 0.0
        %2067 = vmatpush.xpose.msra.mxu0 0.0
        %2068 = vmatpush.xpose.msra.mxu0 0.0
        %2069 = vmatpush.xpose.msra.mxu0 0.0
        %2070 = vmatpush.xpose.msra.mxu0 %v2053
        %2071 = vmatmul.f32.gmra.mxu0 %v2051
        %v2072 = vpop.f32.mrf.mxu0
        %v2073 = vadd.f32 %v2047, %v2072
        %2074 = vdwg.mxu0
        %v2075 = vsel %vm1720, %v2073, -inf
        %2076 = vmax.xlane.f32.xlu0 %v2075
        %v2077 = vpop.xlane.xlu0 %2076
        %v2078 = vsub.f32 %v2073, %v2077
        %v2079 = vmul.f32 %v2078, 1.442695
        %v2080 = vpow.pop %v2079
        %v2081 = vsel %vm1720, %v2080, 0.0
        %2082 = vadd.xlane.f32.xlu0 %v2081
        %v2083 = vpop.xlane.xlu0 %2082
        %v2084 = vrcp.pop %v2083
        %v2085 = vmul.f32 %v2083, %v2084
        %v2086 = vsub.f32 1.0, %v2085
        %v2087 = vmul.f32 %v2084, %v2086
        %v2088 = vadd.f32 %v2084, %v2087
        %vm2089 = vweird.f32 %v2083
        %vm2090 = vweird.f32 %v2084
        %vm2091 = vmor %vm2089, %vm2090
        %v2092 = vsel %vm2091, %v2084, %v2088
        %v2093 = vand.u32 2147483647, %v2083
        %vm2094 = vcmp.eq.f32.partialorder %v2093, 8.507059e+37
        %v2095 = vand.u32 %v2083, 2147483648
        %v2096 = vor.u32 1.1754944e-38, %v2095
        %v2097 = vsel %vm2094, %v2096, %v2092
        %v2098 = vmul.f32 %v2080, %v2097
        %2099 = vrot.lane.b32.xlu0 %v1714, 64
        %v2100 = vpop.permute.xlu0 %2099
        %v2103 = vsel %vm1720, %v2098, 0
        %2105 = vmatpush.msra.mxu0 0.0
        %2106 = vmatpush.msra.mxu0 0.0
        %2107 = vmatpush.msra.mxu0 0.0
        %2108 = vmatpush.msra.mxu0 0.0
        %2109 = vmatpush.msra.mxu0 0.0
        %2110 = vmatpush.msra.mxu0 0.0
        %2111 = vmatpush.msra.mxu0 0.0
        %2112 = vmatpush.msra.mxu0 0.0
        %2113 = vmatpush.msra.mxu0 0.0
        %2114 = vmatpush.msra.mxu0 0.0
        %2115 = vmatpush.msra.mxu0 0.0
        %2116 = vmatpush.msra.mxu0 0.0
        %2117 = vmatpush.msra.mxu0 0.0
        %2118 = vmatpush.msra.mxu0 0.0
        %2119 = vmatpush.msra.mxu0 0.0
        %2120 = vmatpush.msra.mxu0 %v2100
        %2121 = vmatmul.f32.gmra.mxu0 %v2103
        %v2122 = vpop.f32.mrf.mxu0
        %v2123 = vadd.f32 0.0, %v2122
        %2124 = vdwg.mxu0
        %2125 = vrot.lane.b32.xlu0 %v1714, 120
        %v2126 = vpop.permute.xlu0 %2125
        %2127 = vrot.lane.b32.xlu0 %v1714, 88
        %v2128 = vpop.permute.xlu0 %2127
        %v2129 = vsel %vm1720, %v2126, 0
        %v2131 = vsel %vm1720, %v2128, 0
        %2133 = vmatpush.xpose.msra.mxu0 0.0
        %2134 = vmatpush.xpose.msra.mxu0 0.0
        %2135 = vmatpush.xpose.msra.mxu0 0.0
        %2136 = vmatpush.xpose.msra.mxu0 0.0
        %2137 = vmatpush.xpose.msra.mxu0 0.0
        %2138 = vmatpush.xpose.msra.mxu0 0.0
        %2139 = vmatpush.xpose.msra.mxu0 0.0
        %2140 = vmatpush.xpose.msra.mxu0 0.0
        %2141 = vmatpush.xpose.msra.mxu0 0.0
        %2142 = vmatpush.xpose.msra.mxu0 0.0
        %2143 = vmatpush.xpose.msra.mxu0 0.0
        %2144 = vmatpush.xpose.msra.mxu0 0.0
        %2145 = vmatpush.xpose.msra.mxu0 0.0
        %2146 = vmatpush.xpose.msra.mxu0 0.0
        %2147 = vmatpush.xpose.msra.mxu0 0.0
        %2148 = vmatpush.xpose.msra.mxu0 %v2131
        %2149 = vmatmul.f32.gmra.mxu0 %v2129
        %v2150 = vpop.f32.mrf.mxu0
        %v2151 = vadd.f32 %v2047, %v2150
        %2152 = vdwg.mxu0
        %v2153 = vsel %vm1720, %v2151, -inf
        %2154 = vmax.xlane.f32.xlu0 %v2153
        %v2155 = vpop.xlane.xlu0 %2154
        %v2156 = vsub.f32 %v2151, %v2155
        %v2157 = vmul.f32 %v2156, 1.442695
        %v2158 = vpow.pop %v2157
        %v2159 = vsel %vm1720, %v2158, 0.0
        %2160 = vadd.xlane.f32.xlu0 %v2159
        %v2161 = vpop.xlane.xlu0 %2160
        %v2162 = vrcp.pop %v2161
        %v2163 = vmul.f32 %v2161, %v2162
        %v2164 = vsub.f32 1.0, %v2163
        %v2165 = vmul.f32 %v2162, %v2164
        %v2166 = vadd.f32 %v2162, %v2165
        %vm2167 = vweird.f32 %v2161
        %vm2168 = vweird.f32 %v2162
        %vm2169 = vmor %vm2167, %vm2168
        %v2170 = vsel %vm2169, %v2162, %v2166
        %v2171 = vand.u32 2147483647, %v2161
        %vm2172 = vcmp.eq.f32.partialorder %v2171, 8.507059e+37
        %v2173 = vand.u32 %v2161, 2147483648
        %v2174 = vor.u32 1.1754944e-38, %v2173
        %v2175 = vsel %vm2172, %v2174, %v2170
        %v2176 = vmul.f32 %v2158, %v2175
        %2177 = vrot.lane.b32.xlu0 %v1714, 56
        %v2178 = vpop.permute.xlu0 %2177
        %v2181 = vsel %vm1720, %v2176, 0
        %2183 = vmatpush.msra.mxu0 0.0
        %2184 = vmatpush.msra.mxu0 0.0
        %2185 = vmatpush.msra.mxu0 0.0
        %2186 = vmatpush.msra.mxu0 0.0
        %2187 = vmatpush.msra.mxu0 0.0
        %2188 = vmatpush.msra.mxu0 0.0
        %2189 = vmatpush.msra.mxu0 0.0
        %2190 = vmatpush.msra.mxu0 0.0
        %2191 = vmatpush.msra.mxu0 0.0
        %2192 = vmatpush.msra.mxu0 0.0
        %2193 = vmatpush.msra.mxu0 0.0
        %2194 = vmatpush.msra.mxu0 0.0
        %2195 = vmatpush.msra.mxu0 0.0
        %2196 = vmatpush.msra.mxu0 0.0
        %2197 = vmatpush.msra.mxu0 0.0
        %2198 = vmatpush.msra.mxu0 %v2178
        %2199 = vmatmul.f32.gmra.mxu0 %v2181
        %v2200 = vpop.f32.mrf.mxu0
        %v2201 = vadd.f32 0.0, %v2200
        %2202 = vdwg.mxu0
        %2203 = vrot.lane.b32.xlu0 %v1714, 112
        %v2204 = vpop.permute.xlu0 %2203
        %2205 = vrot.lane.b32.xlu0 %v1714, 80
        %v2206 = vpop.permute.xlu0 %2205
        %v2207 = vsel %vm1720, %v2204, 0
        %v2209 = vsel %vm1720, %v2206, 0
        %2211 = vmatpush.xpose.msra.mxu0 0.0
        %2212 = vmatpush.xpose.msra.mxu0 0.0
        %2213 = vmatpush.xpose.msra.mxu0 0.0
        %2214 = vmatpush.xpose.msra.mxu0 0.0
        %2215 = vmatpush.xpose.msra.mxu0 0.0
        %2216 = vmatpush.xpose.msra.mxu0 0.0
        %2217 = vmatpush.xpose.msra.mxu0 0.0
        %2218 = vmatpush.xpose.msra.mxu0 0.0
        %2219 = vmatpush.xpose.msra.mxu0 0.0
        %2220 = vmatpush.xpose.msra.mxu0 0.0
        %2221 = vmatpush.xpose.msra.mxu0 0.0
        %2222 = vmatpush.xpose.msra.mxu0 0.0
        %2223 = vmatpush.xpose.msra.mxu0 0.0
        %2224 = vmatpush.xpose.msra.mxu0 0.0
        %2225 = vmatpush.xpose.msra.mxu0 0.0
        %2226 = vmatpush.xpose.msra.mxu0 %v2209
        %2227 = vmatmul.f32.gmra.mxu0 %v2207
        %v2228 = vpop.f32.mrf.mxu0
        %v2229 = vadd.f32 %v2047, %v2228
        %2230 = vdwg.mxu0
        %v2231 = vsel %vm1720, %v2229, -inf
        %2232 = vmax.xlane.f32.xlu0 %v2231
        %v2233 = vpop.xlane.xlu0 %2232
        %v2234 = vsub.f32 %v2229, %v2233
        %v2235 = vmul.f32 %v2234, 1.442695
        %v2236 = vpow.pop %v2235
        %v2237 = vsel %vm1720, %v2236, 0.0
        %2238 = vadd.xlane.f32.xlu0 %v2237
        %v2239 = vpop.xlane.xlu0 %2238
        %v2240 = vrcp.pop %v2239
        %v2241 = vmul.f32 %v2239, %v2240
        %v2242 = vsub.f32 1.0, %v2241
        %v2243 = vmul.f32 %v2240, %v2242
        %v2244 = vadd.f32 %v2240, %v2243
        %vm2245 = vweird.f32 %v2239
        %vm2246 = vweird.f32 %v2240
        %vm2247 = vmor %vm2245, %vm2246
        %v2248 = vsel %vm2247, %v2240, %v2244
        %v2249 = vand.u32 2147483647, %v2239
        %vm2250 = vcmp.eq.f32.partialorder %v2249, 8.507059e+37
        %v2251 = vand.u32 %v2239, 2147483648
        %v2252 = vor.u32 1.1754944e-38, %v2251
        %v2253 = vsel %vm2250, %v2252, %v2248
        %v2254 = vmul.f32 %v2236, %v2253
        %2255 = vrot.lane.b32.xlu0 %v1714, 48
        %v2256 = vpop.permute.xlu0 %2255
        %v2259 = vsel %vm1720, %v2254, 0
        %2261 = vmatpush.msra.mxu0 0.0
        %2262 = vmatpush.msra.mxu0 0.0
        %2263 = vmatpush.msra.mxu0 0.0
        %2264 = vmatpush.msra.mxu0 0.0
        %2265 = vmatpush.msra.mxu0 0.0
        %2266 = vmatpush.msra.mxu0 0.0
        %2267 = vmatpush.msra.mxu0 0.0
        %2268 = vmatpush.msra.mxu0 0.0
        %2269 = vmatpush.msra.mxu0 0.0
        %2270 = vmatpush.msra.mxu0 0.0
        %2271 = vmatpush.msra.mxu0 0.0
        %2272 = vmatpush.msra.mxu0 0.0
        %2273 = vmatpush.msra.mxu0 0.0
        %2274 = vmatpush.msra.mxu0 0.0
        %2275 = vmatpush.msra.mxu0 0.0
        %2276 = vmatpush.msra.mxu0 %v2256
        %2277 = vmatmul.f32.gmra.mxu0 %v2259
        %v2278 = vpop.f32.mrf.mxu0
        %v2279 = vadd.f32 0.0, %v2278
        %2280 = vdwg.mxu0
        %2281 = vrot.lane.b32.xlu0 %v1714, 104
        %v2282 = vpop.permute.xlu0 %2281
        %2283 = vrot.lane.b32.xlu0 %v1714, 72
        %v2284 = vpop.permute.xlu0 %2283
        %v2285 = vsel %vm1720, %v2282, 0
        %v2287 = vsel %vm1720, %v2284, 0
        %2289 = vmatpush.xpose.msra.mxu0 0.0
        %2290 = vmatpush.xpose.msra.mxu0 0.0
        %2291 = vmatpush.xpose.msra.mxu0 0.0
        %2292 = vmatpush.xpose.msra.mxu0 0.0
        %2293 = vmatpush.xpose.msra.mxu0 0.0
        %2294 = vmatpush.xpose.msra.mxu0 0.0
        %2295 = vmatpush.xpose.msra.mxu0 0.0
        %2296 = vmatpush.xpose.msra.mxu0 0.0
        %2297 = vmatpush.xpose.msra.mxu0 0.0
        %2298 = vmatpush.xpose.msra.mxu0 0.0
        %2299 = vmatpush.xpose.msra.mxu0 0.0
        %2300 = vmatpush.xpose.msra.mxu0 0.0
        %2301 = vmatpush.xpose.msra.mxu0 0.0
        %2302 = vmatpush.xpose.msra.mxu0 0.0
        %2303 = vmatpush.xpose.msra.mxu0 0.0
        %2304 = vmatpush.xpose.msra.mxu0 %v2287
        %2305 = vmatmul.f32.gmra.mxu0 %v2285
        %v2306 = vpop.f32.mrf.mxu0
        %v2307 = vadd.f32 %v2047, %v2306
        %2308 = vdwg.mxu0
        %v2309 = vsel %vm1720, %v2307, -inf
        %2310 = vmax.xlane.f32.xlu0 %v2309
        %v2311 = vpop.xlane.xlu0 %2310
        %v2312 = vsub.f32 %v2307, %v2311
        %v2313 = vmul.f32 %v2312, 1.442695
        %v2314 = vpow.pop %v2313
        %v2315 = vsel %vm1720, %v2314, 0.0
        %2316 = vadd.xlane.f32.xlu0 %v2315
        %v2317 = vpop.xlane.xlu0 %2316
        %v2318 = vrcp.pop %v2317
        %v2319 = vmul.f32 %v2317, %v2318
        %v2320 = vsub.f32 1.0, %v2319
        %v2321 = vmul.f32 %v2318, %v2320
        %v2322 = vadd.f32 %v2318, %v2321
        %vm2323 = vweird.f32 %v2317
        %vm2324 = vweird.f32 %v2318
        %vm2325 = vmor %vm2323, %vm2324
        %v2326 = vsel %vm2325, %v2318, %v2322
        %v2327 = vand.u32 2147483647, %v2317
        %vm2328 = vcmp.eq.f32.partialorder %v2327, 8.507059e+37
        %v2329 = vand.u32 %v2317, 2147483648
        %v2330 = vor.u32 1.1754944e-38, %v2329
        %v2331 = vsel %vm2328, %v2330, %v2326
        %v2332 = vmul.f32 %v2314, %v2331
        %2333 = vrot.lane.b32.xlu0 %v1714, 40
        %v2334 = vpop.permute.xlu0 %2333
        %v2337 = vsel %vm1720, %v2332, 0
        %2339 = vmatpush.msra.mxu0 0.0
        %2340 = vmatpush.msra.mxu0 0.0
        %2341 = vmatpush.msra.mxu0 0.0
        %2342 = vmatpush.msra.mxu0 0.0
        %2343 = vmatpush.msra.mxu0 0.0
        %2344 = vmatpush.msra.mxu0 0.0
        %2345 = vmatpush.msra.mxu0 0.0
        %2346 = vmatpush.msra.mxu0 0.0
        %2347 = vmatpush.msra.mxu0 0.0
        %2348 = vmatpush.msra.mxu0 0.0
        %2349 = vmatpush.msra.mxu0 0.0
        %2350 = vmatpush.msra.mxu0 0.0
        %2351 = vmatpush.msra.mxu0 0.0
        %2352 = vmatpush.msra.mxu0 0.0
        %2353 = vmatpush.msra.mxu0 0.0
        %2354 = vmatpush.msra.mxu0 %v2334
        %2355 = vmatmul.f32.gmra.mxu0 %v2337
        %v2356 = vpop.f32.mrf.mxu0
        %v2357 = vadd.f32 0.0, %v2356
        %2358 = vdwg.mxu0
        %2360 = vrot.lane.b32.xlu0 %v2201, 8
        %v2361 = vpop.permute.xlu0 %2360
        %2364 = vrot.lane.b32.xlu0 %v2279, 16
        %v2365 = vpop.permute.xlu0 %2364
        %2368 = vrot.lane.b32.xlu0 %v2357, 24
        %v2369 = vpop.permute.xlu0 %2368
        %v2371 = vsel %vm1720, %v2123, %v2361
        %v2372 = vsel %vm2042, %v2371, %v2365
        %v2373 = vsel %vm2044, %v2372, %v2369
        %v2374 = vperm.slane %v1671, 1
        %2379 = vrot.lane.b32.xlu0 %v1659, 32
        %v2380 = vpop.permute.xlu0 %2379
        %2381 = vrot.lane.b32.xlu0 %v1662, 32
        %v2382 = vpop.permute.xlu0 %2381
        %2383 = vrot.lane.b32.xlu0 %v1665, 32
        %v2384 = vpop.permute.xlu0 %2383
        %2385 = vrot.lane.b32.xlu0 %v1668, 32
        %v2386 = vpop.permute.xlu0 %2385
        %v2392 = vsel %vm1686, %v2045, 0
        %v2395 = vsel %vm1686, %v2373, 0
        %2397 = vmatpush.msra.mxu0 0.0
        %2398 = vmatpush.msra.mxu0 0.0
        %2399 = vmatpush.msra.mxu0 0.0
        %2400 = vmatpush.msra.mxu0 0.0
        %2401 = vmatpush.msra.mxu0 0.0
        %2402 = vmatpush.msra.mxu0 0.0
        %2403 = vmatpush.msra.mxu0 0.0
        %2404 = vmatpush.msra.mxu0 0.0
        %2405 = vmatpush.msra.mxu0 0.0
        %2406 = vmatpush.msra.mxu0 0.0
        %2407 = vmatpush.msra.mxu0 0.0
        %2408 = vmatpush.msra.mxu0 0.0
        %2409 = vmatpush.msra.mxu0 %v2386
        %2410 = vmatpush.msra.mxu0 %v2384
        %2411 = vmatpush.msra.mxu0 %v2382
        %2412 = vmatpush.msra.mxu0 %v2380
        %2413 = vmatmul.f32.gmra.mxu0 %v2392
        %v2414 = vpop.f32.mrf.mxu0
        %v2415 = vadd.f32 %v2374, %v2414
        %2416 = vmatmul.f32.gmra.mxu0 %v2395
        %v2417 = vpop.f32.mrf.mxu0
        %v2418 = vadd.f32 %v2374, %v2417
        %2419 = vdwg.mxu0
        %v2420 = vadd.f32 %v1681, %v2415
        %v2421 = vadd.f32 %v1682, %v2418
        %v2422 = vsel %vm1686, %v2420, 0.0
        %2423 = vadd.xlane.f32.xlu0 %v2422
        %v2424 = vpop.xlane.xlu0 %2423
        %v2425 = vsel %vm1686, %v2421, 0.0
        %2426 = vadd.xlane.f32.xlu0 %v2425
        %v2427 = vpop.xlane.xlu0 %2426
        %v2428 = vrcp.pop 32.0
        %v2429 = vmul.f32 32.0, %v2428
        %v2430 = vsub.f32 1.0, %v2429
        %v2431 = vmul.f32 %v2428, %v2430
        %v2432 = vadd.f32 %v2428, %v2431
        %vm2433 = vweird.f32 %v2428
        %v2434 = vsel %vm2433, %v2428, %v2432
        %v2435 = vmul.f32 %v2424, %v2434
        %v2436 = vmul.f32 %v2427, %v2434
        %v2437 = vmul.f32 %v2420, %v2420
        %v2438 = vmul.f32 %v2421, %v2421
        %v2439 = vsel %vm1686, %v2437, 0.0
        %2440 = vadd.xlane.f32.xlu0 %v2439
        %v2441 = vpop.xlane.xlu0 %2440
        %v2442 = vsel %vm1686, %v2438, 0.0
        %2443 = vadd.xlane.f32.xlu0 %v2442
        %v2444 = vpop.xlane.xlu0 %2443
        %v2445 = vmul.f32 %v2441, %v2434
        %v2446 = vmul.f32 %v2444, %v2434
        %v2447 = vmul.f32 %v2435, %v2435
        %v2448 = vmul.f32 %v2436, %v2436
        %v2449 = vsub.f32 %v2445, %v2447
        %v2450 = vsub.f32 %v2446, %v2448
        %v2451 = vsub.f32 %v2420, %v2435
        %v2452 = vsub.f32 %v2421, %v2436
        %v2453 = vadd.f32 %v2449, 1e-05
        %v2454 = vadd.f32 %v2450, 1e-05
        %v2455 = vrsqrt.pop %v2453
        %v2456 = vmul.f32 %v2455, %v2453
        %v2457 = vmul.f32 %v2456, %v2455
        %v2458 = vmul.f32 0.5, %v2457
        %v2459 = vsub.f32 1.5, %v2458
        %v2460 = vmul.f32 %v2455, %v2459
        %vm2461 = vweird.f32 %v2453
        %vm2462 = vweird.f32 %v2455
        %vm2463 = vmor %vm2461, %vm2462
        %v2464 = vsel %vm2463, %v2455, %v2460
        %v2465 = vrsqrt.pop %v2454
        %v2466 = vmul.f32 %v2465, %v2454
        %v2467 = vmul.f32 %v2466, %v2465
        %v2468 = vmul.f32 0.5, %v2467
        %v2469 = vsub.f32 1.5, %v2468
        %v2470 = vmul.f32 %v2465, %v2469
        %vm2471 = vweird.f32 %v2454
        %vm2472 = vweird.f32 %v2465
        %vm2473 = vmor %vm2471, %vm2472
        %v2474 = vsel %vm2473, %v2465, %v2470
        %v2475 = vmul.f32 %v2451, %v2464
        %v2476 = vmul.f32 %v2452, %v2474
        %v2477 = vperm.slane %v1671, 7
        %v2478 = vmul.f32 %v2475, %v2477
        %v2479 = vmul.f32 %v2476, %v2477
        %v2480 = vperm.slane %v1672, 0
        %v2481 = vadd.f32 %v2478, %v2480
        %v2482 = vadd.f32 %v2479, %v2480
        %v2483 = vperm.slane %v1671, 2
        %v2485 = vsel %vm1686, %v2481, 0
        %v2488 = vsel %vm1686, %v2482, 0
        %2490 = vmatpush.msra.mxu0 0.0
        %2491 = vmatpush.msra.mxu0 0.0
        %2492 = vmatpush.msra.mxu0 0.0
        %2493 = vmatpush.msra.mxu0 0.0
        %2494 = vmatpush.msra.mxu0 0.0
        %2495 = vmatpush.msra.mxu0 0.0
        %2496 = vmatpush.msra.mxu0 0.0
        %2497 = vmatpush.msra.mxu0 0.0
        %2498 = vmatpush.msra.mxu0 0.0
        %2499 = vmatpush.msra.mxu0 0.0
        %2500 = vmatpush.msra.mxu0 0.0
        %2501 = vmatpush.msra.mxu0 0.0
        %2502 = vmatpush.msra.mxu0 %v1669
        %2503 = vmatpush.msra.mxu0 %v1666
        %2504 = vmatpush.msra.mxu0 %v1663
        %2505 = vmatpush.msra.mxu0 %v1660
        %2506 = vmatmul.f32.gmra.mxu0 %v2485
        %v2507 = vpop.f32.mrf.mxu0
        %v2508 = vadd.f32 %v2483, %v2507
        %2509 = vmatmul.f32.gmra.mxu0 %v2488
        %v2510 = vpop.f32.mrf.mxu0
        %v2511 = vadd.f32 %v2483, %v2510
        %2512 = vdwg.mxu0
        %v2513 = vperm.slane %v1671, 3
        %2518 = vrot.lane.b32.xlu0 %v1660, 96
        %v2519 = vpop.permute.xlu0 %2518
        %2520 = vrot.lane.b32.xlu0 %v1663, 96
        %v2521 = vpop.permute.xlu0 %2520
        %2522 = vrot.lane.b32.xlu0 %v1666, 96
        %v2523 = vpop.permute.xlu0 %2522
        %2524 = vrot.lane.b32.xlu0 %v1669, 96
        %v2525 = vpop.permute.xlu0 %2524
        %v2531 = vsel %vm1686, %v1683, 0
        %v2534 = vsel %vm1686, %v1684, 0
        %2536 = vmatpush.msra.mxu0 0.0
        %2537 = vmatpush.msra.mxu0 0.0
        %2538 = vmatpush.msra.mxu0 0.0
        %2539 = vmatpush.msra.mxu0 0.0
        %2540 = vmatpush.msra.mxu0 0.0
        %2541 = vmatpush.msra.mxu0 0.0
        %2542 = vmatpush.msra.mxu0 0.0
        %2543 = vmatpush.msra.mxu0 0.0
        %2544 = vmatpush.msra.mxu0 0.0
        %2545 = vmatpush.msra.mxu0 0.0
        %2546 = vmatpush.msra.mxu0 0.0
        %2547 = vmatpush.msra.mxu0 0.0
        %2548 = vmatpush.msra.mxu0 %v2525
        %2549 = vmatpush.msra.mxu0 %v2523
        %2550 = vmatpush.msra.mxu0 %v2521
        %2551 = vmatpush.msra.mxu0 %v2519
        %2552 = vmatmul.f32.gmra.mxu0 %v2531
        %v2553 = vpop.f32.mrf.mxu0
        %v2554 = vadd.f32 %v2513, %v2553
        %2555 = vmatmul.f32.gmra.mxu0 %v2534
        %v2556 = vpop.f32.mrf.mxu0
        %v2557 = vadd.f32 %v2513, %v2556
        %2558 = vdwg.mxu0
        %v2559 = vld [vmem:[%s4] sm:$0x1]
        %v2561 = vperm.slane %v2559, 0
        %v2564 = vsel %vm1720, %v2508, 0
        %v2567 = vsel %vm1720, %v2554, 0
        %2569 = vmatpush.xpose.msra.mxu0 0.0
        %2570 = vmatpush.xpose.msra.mxu0 0.0
        %2571 = vmatpush.xpose.msra.mxu0 0.0
        %2572 = vmatpush.xpose.msra.mxu0 0.0
        %2573 = vmatpush.xpose.msra.mxu0 0.0
        %2574 = vmatpush.xpose.msra.mxu0 0.0
        %2575 = vmatpush.xpose.msra.mxu0 0.0
        %2576 = vmatpush.xpose.msra.mxu0 0.0
        %2577 = vmatpush.xpose.msra.mxu0 0.0
        %2578 = vmatpush.xpose.msra.mxu0 0.0
        %2579 = vmatpush.xpose.msra.mxu0 0.0
        %2580 = vmatpush.xpose.msra.mxu0 0.0
        %2581 = vmatpush.xpose.msra.mxu0 0.0
        %2582 = vmatpush.xpose.msra.mxu0 0.0
        %2583 = vmatpush.xpose.msra.mxu0 0.0
        %2584 = vmatpush.xpose.msra.mxu0 %v2567
        %2585 = vmatmul.f32.gmra.mxu0 %v2564
        %v2586 = vpop.f32.mrf.mxu0
        %v2587 = vadd.f32 %v2561, %v2586
        %2588 = vdwg.mxu0
        %v2589 = vsel %vm1720, %v2587, -inf
        %2590 = vmax.xlane.f32.xlu0 %v2589
        %v2591 = vpop.xlane.xlu0 %2590
        %v2592 = vsub.f32 %v2587, %v2591
        %v2593 = vmul.f32 %v2592, 1.442695
        %v2594 = vpow.pop %v2593
        %v2595 = vsel %vm1720, %v2594, 0.0
        %2596 = vadd.xlane.f32.xlu0 %v2595
        %v2597 = vpop.xlane.xlu0 %2596
        %v2598 = vrcp.pop %v2597
        %v2599 = vmul.f32 %v2597, %v2598
        %v2600 = vsub.f32 1.0, %v2599
        %v2601 = vmul.f32 %v2598, %v2600
        %v2602 = vadd.f32 %v2598, %v2601
        %vm2603 = vweird.f32 %v2597
        %vm2604 = vweird.f32 %v2598
        %vm2605 = vmor %vm2603, %vm2604
        %v2606 = vsel %vm2605, %v2598, %v2602
        %v2607 = vand.u32 2147483647, %v2597
        %vm2608 = vcmp.eq.f32.partialorder %v2607, 8.507059e+37
        %v2609 = vand.u32 %v2597, 2147483648
        %v2610 = vor.u32 1.1754944e-38, %v2609
        %v2611 = vsel %vm2608, %v2610, %v2606
        %v2612 = vmul.f32 %v2594, %v2611
        %2613 = vrot.lane.b32.xlu0 %v2554, 96
        %v2614 = vpop.permute.xlu0 %2613
        %v2617 = vsel %vm1720, %v2612, 0
        %2619 = vmatpush.msra.mxu0 0.0
        %2620 = vmatpush.msra.mxu0 0.0
        %2621 = vmatpush.msra.mxu0 0.0
        %2622 = vmatpush.msra.mxu0 0.0
        %2623 = vmatpush.msra.mxu0 0.0
        %2624 = vmatpush.msra.mxu0 0.0
        %2625 = vmatpush.msra.mxu0 0.0
        %2626 = vmatpush.msra.mxu0 0.0
        %2627 = vmatpush.msra.mxu0 0.0
        %2628 = vmatpush.msra.mxu0 0.0
        %2629 = vmatpush.msra.mxu0 0.0
        %2630 = vmatpush.msra.mxu0 0.0
        %2631 = vmatpush.msra.mxu0 0.0
        %2632 = vmatpush.msra.mxu0 0.0
        %2633 = vmatpush.msra.mxu0 0.0
        %2634 = vmatpush.msra.mxu0 %v2614
        %2635 = vmatmul.f32.gmra.mxu0 %v2617
        %v2636 = vpop.f32.mrf.mxu0
        %v2637 = vadd.f32 0.0, %v2636
        %2638 = vdwg.mxu0
        %2639 = vrot.lane.b32.xlu0 %v2508, 120
        %v2640 = vpop.permute.xlu0 %2639
        %2641 = vrot.lane.b32.xlu0 %v2554, 120
        %v2642 = vpop.permute.xlu0 %2641
        %v2643 = vsel %vm1720, %v2640, 0
        %v2645 = vsel %vm1720, %v2642, 0
        %2647 = vmatpush.xpose.msra.mxu0 0.0
        %2648 = vmatpush.xpose.msra.mxu0 0.0
        %2649 = vmatpush.xpose.msra.mxu0 0.0
        %2650 = vmatpush.xpose.msra.mxu0 0.0
        %2651 = vmatpush.xpose.msra.mxu0 0.0
        %2652 = vmatpush.xpose.msra.mxu0 0.0
        %2653 = vmatpush.xpose.msra.mxu0 0.0
        %2654 = vmatpush.xpose.msra.mxu0 0.0
        %2655 = vmatpush.xpose.msra.mxu0 0.0
        %2656 = vmatpush.xpose.msra.mxu0 0.0
        %2657 = vmatpush.xpose.msra.mxu0 0.0
        %2658 = vmatpush.xpose.msra.mxu0 0.0
        %2659 = vmatpush.xpose.msra.mxu0 0.0
        %2660 = vmatpush.xpose.msra.mxu0 0.0
        %2661 = vmatpush.xpose.msra.mxu0 0.0
        %2662 = vmatpush.xpose.msra.mxu0 %v2645
        %2663 = vmatmul.f32.gmra.mxu0 %v2643
        %v2664 = vpop.f32.mrf.mxu0
        %v2665 = vadd.f32 %v2561, %v2664
        %2666 = vdwg.mxu0
        %v2667 = vsel %vm1720, %v2665, -inf
        %2668 = vmax.xlane.f32.xlu0 %v2667
        %v2669 = vpop.xlane.xlu0 %2668
        %v2670 = vsub.f32 %v2665, %v2669
        %v2671 = vmul.f32 %v2670, 1.442695
        %v2672 = vpow.pop %v2671
        %v2673 = vsel %vm1720, %v2672, 0.0
        %2674 = vadd.xlane.f32.xlu0 %v2673
        %v2675 = vpop.xlane.xlu0 %2674
        %v2676 = vrcp.pop %v2675
        %v2677 = vmul.f32 %v2675, %v2676
        %v2678 = vsub.f32 1.0, %v2677
        %v2679 = vmul.f32 %v2676, %v2678
        %v2680 = vadd.f32 %v2676, %v2679
        %vm2681 = vweird.f32 %v2675
        %vm2682 = vweird.f32 %v2676
        %vm2683 = vmor %vm2681, %vm2682
        %v2684 = vsel %vm2683, %v2676, %v2680
        %v2685 = vand.u32 2147483647, %v2675
        %vm2686 = vcmp.eq.f32.partialorder %v2685, 8.507059e+37
        %v2687 = vand.u32 %v2675, 2147483648
        %v2688 = vor.u32 1.1754944e-38, %v2687
        %v2689 = vsel %vm2686, %v2688, %v2684
        %v2690 = vmul.f32 %v2672, %v2689
        %2691 = vrot.lane.b32.xlu0 %v2554, 88
        %v2692 = vpop.permute.xlu0 %2691
        %v2695 = vsel %vm1720, %v2690, 0
        %2697 = vmatpush.msra.mxu0 0.0
        %2698 = vmatpush.msra.mxu0 0.0
        %2699 = vmatpush.msra.mxu0 0.0
        %2700 = vmatpush.msra.mxu0 0.0
        %2701 = vmatpush.msra.mxu0 0.0
        %2702 = vmatpush.msra.mxu0 0.0
        %2703 = vmatpush.msra.mxu0 0.0
        %2704 = vmatpush.msra.mxu0 0.0
        %2705 = vmatpush.msra.mxu0 0.0
        %2706 = vmatpush.msra.mxu0 0.0
        %2707 = vmatpush.msra.mxu0 0.0
        %2708 = vmatpush.msra.mxu0 0.0
        %2709 = vmatpush.msra.mxu0 0.0
        %2710 = vmatpush.msra.mxu0 0.0
        %2711 = vmatpush.msra.mxu0 0.0
        %2712 = vmatpush.msra.mxu0 %v2692
        %2713 = vmatmul.f32.gmra.mxu0 %v2695
        %v2714 = vpop.f32.mrf.mxu0
        %v2715 = vadd.f32 0.0, %v2714
        %2716 = vdwg.mxu0
        %2717 = vrot.lane.b32.xlu0 %v2508, 112
        %v2718 = vpop.permute.xlu0 %2717
        %2719 = vrot.lane.b32.xlu0 %v2554, 112
        %v2720 = vpop.permute.xlu0 %2719
        %v2721 = vsel %vm1720, %v2718, 0
        %v2723 = vsel %vm1720, %v2720, 0
        %2725 = vmatpush.xpose.msra.mxu0 0.0
        %2726 = vmatpush.xpose.msra.mxu0 0.0
        %2727 = vmatpush.xpose.msra.mxu0 0.0
        %2728 = vmatpush.xpose.msra.mxu0 0.0
        %2729 = vmatpush.xpose.msra.mxu0 0.0
        %2730 = vmatpush.xpose.msra.mxu0 0.0
        %2731 = vmatpush.xpose.msra.mxu0 0.0
        %2732 = vmatpush.xpose.msra.mxu0 0.0
        %2733 = vmatpush.xpose.msra.mxu0 0.0
        %2734 = vmatpush.xpose.msra.mxu0 0.0
        %2735 = vmatpush.xpose.msra.mxu0 0.0
        %2736 = vmatpush.xpose.msra.mxu0 0.0
        %2737 = vmatpush.xpose.msra.mxu0 0.0
        %2738 = vmatpush.xpose.msra.mxu0 0.0
        %2739 = vmatpush.xpose.msra.mxu0 0.0
        %2740 = vmatpush.xpose.msra.mxu0 %v2723
        %2741 = vmatmul.f32.gmra.mxu0 %v2721
        %v2742 = vpop.f32.mrf.mxu0
        %v2743 = vadd.f32 %v2561, %v2742
        %2744 = vdwg.mxu0
        %v2745 = vsel %vm1720, %v2743, -inf
        %2746 = vmax.xlane.f32.xlu0 %v2745
        %v2747 = vpop.xlane.xlu0 %2746
        %v2748 = vsub.f32 %v2743, %v2747
        %v2749 = vmul.f32 %v2748, 1.442695
        %v2750 = vpow.pop %v2749
        %v2751 = vsel %vm1720, %v2750, 0.0
        %2752 = vadd.xlane.f32.xlu0 %v2751
        %v2753 = vpop.xlane.xlu0 %2752
        %v2754 = vrcp.pop %v2753
        %v2755 = vmul.f32 %v2753, %v2754
        %v2756 = vsub.f32 1.0, %v2755
        %v2757 = vmul.f32 %v2754, %v2756
        %v2758 = vadd.f32 %v2754, %v2757
        %vm2759 = vweird.f32 %v2753
        %vm2760 = vweird.f32 %v2754
        %vm2761 = vmor %vm2759, %vm2760
        %v2762 = vsel %vm2761, %v2754, %v2758
        %v2763 = vand.u32 2147483647, %v2753
        %vm2764 = vcmp.eq.f32.partialorder %v2763, 8.507059e+37
        %v2765 = vand.u32 %v2753, 2147483648
        %v2766 = vor.u32 1.1754944e-38, %v2765
        %v2767 = vsel %vm2764, %v2766, %v2762
        %v2768 = vmul.f32 %v2750, %v2767
        %2769 = vrot.lane.b32.xlu0 %v2554, 80
        %v2770 = vpop.permute.xlu0 %2769
        %v2773 = vsel %vm1720, %v2768, 0
        %2775 = vmatpush.msra.mxu0 0.0
        %2776 = vmatpush.msra.mxu0 0.0
        %2777 = vmatpush.msra.mxu0 0.0
        %2778 = vmatpush.msra.mxu0 0.0
        %2779 = vmatpush.msra.mxu0 0.0
        %2780 = vmatpush.msra.mxu0 0.0
        %2781 = vmatpush.msra.mxu0 0.0
        %2782 = vmatpush.msra.mxu0 0.0
        %2783 = vmatpush.msra.mxu0 0.0
        %2784 = vmatpush.msra.mxu0 0.0
        %2785 = vmatpush.msra.mxu0 0.0
        %2786 = vmatpush.msra.mxu0 0.0
        %2787 = vmatpush.msra.mxu0 0.0
        %2788 = vmatpush.msra.mxu0 0.0
        %2789 = vmatpush.msra.mxu0 0.0
        %2790 = vmatpush.msra.mxu0 %v2770
        %2791 = vmatmul.f32.gmra.mxu0 %v2773
        %v2792 = vpop.f32.mrf.mxu0
        %v2793 = vadd.f32 0.0, %v2792
        %2794 = vdwg.mxu0
        %2795 = vrot.lane.b32.xlu0 %v2508, 104
        %v2796 = vpop.permute.xlu0 %2795
        %2797 = vrot.lane.b32.xlu0 %v2554, 104
        %v2798 = vpop.permute.xlu0 %2797
        %v2799 = vsel %vm1720, %v2796, 0
        %v2801 = vsel %vm1720, %v2798, 0
        %2803 = vmatpush.xpose.msra.mxu0 0.0
        %2804 = vmatpush.xpose.msra.mxu0 0.0
        %2805 = vmatpush.xpose.msra.mxu0 0.0
        %2806 = vmatpush.xpose.msra.mxu0 0.0
        %2807 = vmatpush.xpose.msra.mxu0 0.0
        %2808 = vmatpush.xpose.msra.mxu0 0.0
        %2809 = vmatpush.xpose.msra.mxu0 0.0
        %2810 = vmatpush.xpose.msra.mxu0 0.0
        %2811 = vmatpush.xpose.msra.mxu0 0.0
        %2812 = vmatpush.xpose.msra.mxu0 0.0
        %2813 = vmatpush.xpose.msra.mxu0 0.0
        %2814 = vmatpush.xpose.msra.mxu0 0.0
        %2815 = vmatpush.xpose.msra.mxu0 0.0
        %2816 = vmatpush.xpose.msra.mxu0 0.0
        %2817 = vmatpush.xpose.msra.mxu0 0.0
        %2818 = vmatpush.xpose.msra.mxu0 %v2801
        %2819 = vmatmul.f32.gmra.mxu0 %v2799
        %v2820 = vpop.f32.mrf.mxu0
        %v2821 = vadd.f32 %v2561, %v2820
        %2822 = vdwg.mxu0
        %v2823 = vsel %vm1720, %v2821, -inf
        %2824 = vmax.xlane.f32.xlu0 %v2823
        %v2825 = vpop.xlane.xlu0 %2824
        %v2826 = vsub.f32 %v2821, %v2825
        %v2827 = vmul.f32 %v2826, 1.442695
        %v2828 = vpow.pop %v2827
        %v2829 = vsel %vm1720, %v2828, 0.0
        %2830 = vadd.xlane.f32.xlu0 %v2829
        %v2831 = vpop.xlane.xlu0 %2830
        %v2832 = vrcp.pop %v2831
        %v2833 = vmul.f32 %v2831, %v2832
        %v2834 = vsub.f32 1.0, %v2833
        %v2835 = vmul.f32 %v2832, %v2834
        %v2836 = vadd.f32 %v2832, %v2835
        %vm2837 = vweird.f32 %v2831
        %vm2838 = vweird.f32 %v2832
        %vm2839 = vmor %vm2837, %vm2838
        %v2840 = vsel %vm2839, %v2832, %v2836
        %v2841 = vand.u32 2147483647, %v2831
        %vm2842 = vcmp.eq.f32.partialorder %v2841, 8.507059e+37
        %v2843 = vand.u32 %v2831, 2147483648
        %v2844 = vor.u32 1.1754944e-38, %v2843
        %v2845 = vsel %vm2842, %v2844, %v2840
        %v2846 = vmul.f32 %v2828, %v2845
        %2847 = vrot.lane.b32.xlu0 %v2554, 72
        %v2848 = vpop.permute.xlu0 %2847
        %v2851 = vsel %vm1720, %v2846, 0
        %2853 = vmatpush.msra.mxu0 0.0
        %2854 = vmatpush.msra.mxu0 0.0
        %2855 = vmatpush.msra.mxu0 0.0
        %2856 = vmatpush.msra.mxu0 0.0
        %2857 = vmatpush.msra.mxu0 0.0
        %2858 = vmatpush.msra.mxu0 0.0
        %2859 = vmatpush.msra.mxu0 0.0
        %2860 = vmatpush.msra.mxu0 0.0
        %2861 = vmatpush.msra.mxu0 0.0
        %2862 = vmatpush.msra.mxu0 0.0
        %2863 = vmatpush.msra.mxu0 0.0
        %2864 = vmatpush.msra.mxu0 0.0
        %2865 = vmatpush.msra.mxu0 0.0
        %2866 = vmatpush.msra.mxu0 0.0
        %2867 = vmatpush.msra.mxu0 0.0
        %2868 = vmatpush.msra.mxu0 %v2848
        %2869 = vmatmul.f32.gmra.mxu0 %v2851
        %v2870 = vpop.f32.mrf.mxu0
        %v2871 = vadd.f32 0.0, %v2870
        %2872 = vdwg.mxu0
        %2874 = vrot.lane.b32.xlu0 %v2715, 8
        %v2875 = vpop.permute.xlu0 %2874
        %2878 = vrot.lane.b32.xlu0 %v2793, 16
        %v2879 = vpop.permute.xlu0 %2878
        %2882 = vrot.lane.b32.xlu0 %v2871, 24
        %v2883 = vpop.permute.xlu0 %2882
        %v2885 = vsel %vm1720, %v2637, %v2875
        %v2886 = vsel %vm2042, %v2885, %v2879
        %v2887 = vsel %vm2044, %v2886, %v2883
        %s2888 = scalar_lea.vmem %s4, 1
        %v2889 = vld [vmem:[%s2888] sm:$0x1]
        %v2891 = vperm.slane %v2889, 0
        %v2894 = vsel %vm1720, %v2511, 0
        %v2897 = vsel %vm1720, %v2557, 0
        %2899 = vmatpush.xpose.msra.mxu0 0.0
        %2900 = vmatpush.xpose.msra.mxu0 0.0
        %2901 = vmatpush.xpose.msra.mxu0 0.0
        %2902 = vmatpush.xpose.msra.mxu0 0.0
        %2903 = vmatpush.xpose.msra.mxu0 0.0
        %2904 = vmatpush.xpose.msra.mxu0 0.0
        %2905 = vmatpush.xpose.msra.mxu0 0.0
        %2906 = vmatpush.xpose.msra.mxu0 0.0
        %2907 = vmatpush.xpose.msra.mxu0 0.0
        %2908 = vmatpush.xpose.msra.mxu0 0.0
        %2909 = vmatpush.xpose.msra.mxu0 0.0
        %2910 = vmatpush.xpose.msra.mxu0 0.0
        %2911 = vmatpush.xpose.msra.mxu0 0.0
        %2912 = vmatpush.xpose.msra.mxu0 0.0
        %2913 = vmatpush.xpose.msra.mxu0 0.0
        %2914 = vmatpush.xpose.msra.mxu0 %v2897
        %2915 = vmatmul.f32.gmra.mxu0 %v2894
        %v2916 = vpop.f32.mrf.mxu0
        %v2917 = vadd.f32 %v2891, %v2916
        %2918 = vdwg.mxu0
        %v2919 = vsel %vm1720, %v2917, -inf
        %2920 = vmax.xlane.f32.xlu0 %v2919
        %v2921 = vpop.xlane.xlu0 %2920
        %v2922 = vsub.f32 %v2917, %v2921
        %v2923 = vmul.f32 %v2922, 1.442695
        %v2924 = vpow.pop %v2923
        %v2925 = vsel %vm1720, %v2924, 0.0
        %2926 = vadd.xlane.f32.xlu0 %v2925
        %v2927 = vpop.xlane.xlu0 %2926
        %v2928 = vrcp.pop %v2927
        %v2929 = vmul.f32 %v2927, %v2928
        %v2930 = vsub.f32 1.0, %v2929
        %v2931 = vmul.f32 %v2928, %v2930
        %v2932 = vadd.f32 %v2928, %v2931
        %vm2933 = vweird.f32 %v2927
        %vm2934 = vweird.f32 %v2928
        %vm2935 = vmor %vm2933, %vm2934
        %v2936 = vsel %vm2935, %v2928, %v2932
        %v2937 = vand.u32 2147483647, %v2927
        %vm2938 = vcmp.eq.f32.partialorder %v2937, 8.507059e+37
        %v2939 = vand.u32 %v2927, 2147483648
        %v2940 = vor.u32 1.1754944e-38, %v2939
        %v2941 = vsel %vm2938, %v2940, %v2936
        %v2942 = vmul.f32 %v2924, %v2941
        %2943 = vrot.lane.b32.xlu0 %v2557, 96
        %v2944 = vpop.permute.xlu0 %2943
        %v2947 = vsel %vm1720, %v2942, 0
        %2949 = vmatpush.msra.mxu0 0.0
        %2950 = vmatpush.msra.mxu0 0.0
        %2951 = vmatpush.msra.mxu0 0.0
        %2952 = vmatpush.msra.mxu0 0.0
        %2953 = vmatpush.msra.mxu0 0.0
        %2954 = vmatpush.msra.mxu0 0.0
        %2955 = vmatpush.msra.mxu0 0.0
        %2956 = vmatpush.msra.mxu0 0.0
        %2957 = vmatpush.msra.mxu0 0.0
        %2958 = vmatpush.msra.mxu0 0.0
        %2959 = vmatpush.msra.mxu0 0.0
        %2960 = vmatpush.msra.mxu0 0.0
        %2961 = vmatpush.msra.mxu0 0.0
        %2962 = vmatpush.msra.mxu0 0.0
        %2963 = vmatpush.msra.mxu0 0.0
        %2964 = vmatpush.msra.mxu0 %v2944
        %2965 = vmatmul.f32.gmra.mxu0 %v2947
        %v2966 = vpop.f32.mrf.mxu0
        %v2967 = vadd.f32 0.0, %v2966
        %2968 = vdwg.mxu0
        %2969 = vrot.lane.b32.xlu0 %v2511, 120
        %v2970 = vpop.permute.xlu0 %2969
        %2971 = vrot.lane.b32.xlu0 %v2557, 120
        %v2972 = vpop.permute.xlu0 %2971
        %v2973 = vsel %vm1720, %v2970, 0
        %v2975 = vsel %vm1720, %v2972, 0
        %2977 = vmatpush.xpose.msra.mxu0 0.0
        %2978 = vmatpush.xpose.msra.mxu0 0.0
        %2979 = vmatpush.xpose.msra.mxu0 0.0
        %2980 = vmatpush.xpose.msra.mxu0 0.0
        %2981 = vmatpush.xpose.msra.mxu0 0.0
        %2982 = vmatpush.xpose.msra.mxu0 0.0
        %2983 = vmatpush.xpose.msra.mxu0 0.0
        %2984 = vmatpush.xpose.msra.mxu0 0.0
        %2985 = vmatpush.xpose.msra.mxu0 0.0
        %2986 = vmatpush.xpose.msra.mxu0 0.0
        %2987 = vmatpush.xpose.msra.mxu0 0.0
        %2988 = vmatpush.xpose.msra.mxu0 0.0
        %2989 = vmatpush.xpose.msra.mxu0 0.0
        %2990 = vmatpush.xpose.msra.mxu0 0.0
        %2991 = vmatpush.xpose.msra.mxu0 0.0
        %2992 = vmatpush.xpose.msra.mxu0 %v2975
        %2993 = vmatmul.f32.gmra.mxu0 %v2973
        %v2994 = vpop.f32.mrf.mxu0
        %v2995 = vadd.f32 %v2891, %v2994
        %2996 = vdwg.mxu0
        %v2997 = vsel %vm1720, %v2995, -inf
        %2998 = vmax.xlane.f32.xlu0 %v2997
        %v2999 = vpop.xlane.xlu0 %2998
        %v3000 = vsub.f32 %v2995, %v2999
        %v3001 = vmul.f32 %v3000, 1.442695
        %v3002 = vpow.pop %v3001
        %v3003 = vsel %vm1720, %v3002, 0.0
        %3004 = vadd.xlane.f32.xlu0 %v3003
        %v3005 = vpop.xlane.xlu0 %3004
        %v3006 = vrcp.pop %v3005
        %v3007 = vmul.f32 %v3005, %v3006
        %v3008 = vsub.f32 1.0, %v3007
        %v3009 = vmul.f32 %v3006, %v3008
        %v3010 = vadd.f32 %v3006, %v3009
        %vm3011 = vweird.f32 %v3005
        %vm3012 = vweird.f32 %v3006
        %vm3013 = vmor %vm3011, %vm3012
        %v3014 = vsel %vm3013, %v3006, %v3010
        %v3015 = vand.u32 2147483647, %v3005
        %vm3016 = vcmp.eq.f32.partialorder %v3015, 8.507059e+37
        %v3017 = vand.u32 %v3005, 2147483648
        %v3018 = vor.u32 1.1754944e-38, %v3017
        %v3019 = vsel %vm3016, %v3018, %v3014
        %v3020 = vmul.f32 %v3002, %v3019
        %3021 = vrot.lane.b32.xlu0 %v2557, 88
        %v3022 = vpop.permute.xlu0 %3021
        %v3025 = vsel %vm1720, %v3020, 0
        %3027 = vmatpush.msra.mxu0 0.0
        %3028 = vmatpush.msra.mxu0 0.0
        %3029 = vmatpush.msra.mxu0 0.0
        %3030 = vmatpush.msra.mxu0 0.0
        %3031 = vmatpush.msra.mxu0 0.0
        %3032 = vmatpush.msra.mxu0 0.0
        %3033 = vmatpush.msra.mxu0 0.0
        %3034 = vmatpush.msra.mxu0 0.0
        %3035 = vmatpush.msra.mxu0 0.0
        %3036 = vmatpush.msra.mxu0 0.0
        %3037 = vmatpush.msra.mxu0 0.0
        %3038 = vmatpush.msra.mxu0 0.0
        %3039 = vmatpush.msra.mxu0 0.0
        %3040 = vmatpush.msra.mxu0 0.0
        %3041 = vmatpush.msra.mxu0 0.0
        %3042 = vmatpush.msra.mxu0 %v3022
        %3043 = vmatmul.f32.gmra.mxu0 %v3025
        %v3044 = vpop.f32.mrf.mxu0
        %v3045 = vadd.f32 0.0, %v3044
        %3046 = vdwg.mxu0
        %3047 = vrot.lane.b32.xlu0 %v2511, 112
        %v3048 = vpop.permute.xlu0 %3047
        %3049 = vrot.lane.b32.xlu0 %v2557, 112
        %v3050 = vpop.permute.xlu0 %3049
        %v3051 = vsel %vm1720, %v3048, 0
        %v3053 = vsel %vm1720, %v3050, 0
        %3055 = vmatpush.xpose.msra.mxu0 0.0
        %3056 = vmatpush.xpose.msra.mxu0 0.0
        %3057 = vmatpush.xpose.msra.mxu0 0.0
        %3058 = vmatpush.xpose.msra.mxu0 0.0
        %3059 = vmatpush.xpose.msra.mxu0 0.0
        %3060 = vmatpush.xpose.msra.mxu0 0.0
        %3061 = vmatpush.xpose.msra.mxu0 0.0
        %3062 = vmatpush.xpose.msra.mxu0 0.0
        %3063 = vmatpush.xpose.msra.mxu0 0.0
        %3064 = vmatpush.xpose.msra.mxu0 0.0
        %3065 = vmatpush.xpose.msra.mxu0 0.0
        %3066 = vmatpush.xpose.msra.mxu0 0.0
        %3067 = vmatpush.xpose.msra.mxu0 0.0
        %3068 = vmatpush.xpose.msra.mxu0 0.0
        %3069 = vmatpush.xpose.msra.mxu0 0.0
        %3070 = vmatpush.xpose.msra.mxu0 %v3053
        %3071 = vmatmul.f32.gmra.mxu0 %v3051
        %v3072 = vpop.f32.mrf.mxu0
        %v3073 = vadd.f32 %v2891, %v3072
        %3074 = vdwg.mxu0
        %v3075 = vsel %vm1720, %v3073, -inf
        %3076 = vmax.xlane.f32.xlu0 %v3075
        %v3077 = vpop.xlane.xlu0 %3076
        %v3078 = vsub.f32 %v3073, %v3077
        %v3079 = vmul.f32 %v3078, 1.442695
        %v3080 = vpow.pop %v3079
        %v3081 = vsel %vm1720, %v3080, 0.0
        %3082 = vadd.xlane.f32.xlu0 %v3081
        %v3083 = vpop.xlane.xlu0 %3082
        %v3084 = vrcp.pop %v3083
        %v3085 = vmul.f32 %v3083, %v3084
        %v3086 = vsub.f32 1.0, %v3085
        %v3087 = vmul.f32 %v3084, %v3086
        %v3088 = vadd.f32 %v3084, %v3087
        %vm3089 = vweird.f32 %v3083
        %vm3090 = vweird.f32 %v3084
        %vm3091 = vmor %vm3089, %vm3090
        %v3092 = vsel %vm3091, %v3084, %v3088
        %v3093 = vand.u32 2147483647, %v3083
        %vm3094 = vcmp.eq.f32.partialorder %v3093, 8.507059e+37
        %v3095 = vand.u32 %v3083, 2147483648
        %v3096 = vor.u32 1.1754944e-38, %v3095
        %v3097 = vsel %vm3094, %v3096, %v3092
        %v3098 = vmul.f32 %v3080, %v3097
        %3099 = vrot.lane.b32.xlu0 %v2557, 80
        %v3100 = vpop.permute.xlu0 %3099
        %v3103 = vsel %vm1720, %v3098, 0
        %3105 = vmatpush.msra.mxu0 0.0
        %3106 = vmatpush.msra.mxu0 0.0
        %3107 = vmatpush.msra.mxu0 0.0
        %3108 = vmatpush.msra.mxu0 0.0
        %3109 = vmatpush.msra.mxu0 0.0
        %3110 = vmatpush.msra.mxu0 0.0
        %3111 = vmatpush.msra.mxu0 0.0
        %3112 = vmatpush.msra.mxu0 0.0
        %3113 = vmatpush.msra.mxu0 0.0
        %3114 = vmatpush.msra.mxu0 0.0
        %3115 = vmatpush.msra.mxu0 0.0
        %3116 = vmatpush.msra.mxu0 0.0
        %3117 = vmatpush.msra.mxu0 0.0
        %3118 = vmatpush.msra.mxu0 0.0
        %3119 = vmatpush.msra.mxu0 0.0
        %3120 = vmatpush.msra.mxu0 %v3100
        %3121 = vmatmul.f32.gmra.mxu0 %v3103
        %v3122 = vpop.f32.mrf.mxu0
        %v3123 = vadd.f32 0.0, %v3122
        %3124 = vdwg.mxu0
        %3125 = vrot.lane.b32.xlu0 %v2511, 104
        %v3126 = vpop.permute.xlu0 %3125
        %3127 = vrot.lane.b32.xlu0 %v2557, 104
        %v3128 = vpop.permute.xlu0 %3127
        %v3129 = vsel %vm1720, %v3126, 0
        %v3131 = vsel %vm1720, %v3128, 0
        %3133 = vmatpush.xpose.msra.mxu0 0.0
        %3134 = vmatpush.xpose.msra.mxu0 0.0
        %3135 = vmatpush.xpose.msra.mxu0 0.0
        %3136 = vmatpush.xpose.msra.mxu0 0.0
        %3137 = vmatpush.xpose.msra.mxu0 0.0
        %3138 = vmatpush.xpose.msra.mxu0 0.0
        %3139 = vmatpush.xpose.msra.mxu0 0.0
        %3140 = vmatpush.xpose.msra.mxu0 0.0
        %3141 = vmatpush.xpose.msra.mxu0 0.0
        %3142 = vmatpush.xpose.msra.mxu0 0.0
        %3143 = vmatpush.xpose.msra.mxu0 0.0
        %3144 = vmatpush.xpose.msra.mxu0 0.0
        %3145 = vmatpush.xpose.msra.mxu0 0.0
        %3146 = vmatpush.xpose.msra.mxu0 0.0
        %3147 = vmatpush.xpose.msra.mxu0 0.0
        %3148 = vmatpush.xpose.msra.mxu0 %v3131
        %3149 = vmatmul.f32.gmra.mxu0 %v3129
        %v3150 = vpop.f32.mrf.mxu0
        %v3151 = vadd.f32 %v2891, %v3150
        %3152 = vdwg.mxu0
        %v3153 = vsel %vm1720, %v3151, -inf
        %3154 = vmax.xlane.f32.xlu0 %v3153
        %v3155 = vpop.xlane.xlu0 %3154
        %v3156 = vsub.f32 %v3151, %v3155
        %v3157 = vmul.f32 %v3156, 1.442695
        %v3158 = vpow.pop %v3157
        %v3159 = vsel %vm1720, %v3158, 0.0
        %3160 = vadd.xlane.f32.xlu0 %v3159
        %v3161 = vpop.xlane.xlu0 %3160
        %v3162 = vrcp.pop %v3161
        %v3163 = vmul.f32 %v3161, %v3162
        %v3164 = vsub.f32 1.0, %v3163
        %v3165 = vmul.f32 %v3162, %v3164
        %v3166 = vadd.f32 %v3162, %v3165
        %vm3167 = vweird.f32 %v3161
        %vm3168 = vweird.f32 %v3162
        %vm3169 = vmor %vm3167, %vm3168
        %v3170 = vsel %vm3169, %v3162, %v3166
        %v3171 = vand.u32 2147483647, %v3161
        %vm3172 = vcmp.eq.f32.partialorder %v3171, 8.507059e+37
        %v3173 = vand.u32 %v3161, 2147483648
        %v3174 = vor.u32 1.1754944e-38, %v3173
        %v3175 = vsel %vm3172, %v3174, %v3170
        %v3176 = vmul.f32 %v3158, %v3175
        %3177 = vrot.lane.b32.xlu0 %v2557, 72
        %v3178 = vpop.permute.xlu0 %3177
        %v3181 = vsel %vm1720, %v3176, 0
        %3183 = vmatpush.msra.mxu0 0.0
        %3184 = vmatpush.msra.mxu0 0.0
        %3185 = vmatpush.msra.mxu0 0.0
        %3186 = vmatpush.msra.mxu0 0.0
        %3187 = vmatpush.msra.mxu0 0.0
        %3188 = vmatpush.msra.mxu0 0.0
        %3189 = vmatpush.msra.mxu0 0.0
        %3190 = vmatpush.msra.mxu0 0.0
        %3191 = vmatpush.msra.mxu0 0.0
        %3192 = vmatpush.msra.mxu0 0.0
        %3193 = vmatpush.msra.mxu0 0.0
        %3194 = vmatpush.msra.mxu0 0.0
        %3195 = vmatpush.msra.mxu0 0.0
        %3196 = vmatpush.msra.mxu0 0.0
        %3197 = vmatpush.msra.mxu0 0.0
        %3198 = vmatpush.msra.mxu0 %v3178
        %3199 = vmatmul.f32.gmra.mxu0 %v3181
        %v3200 = vpop.f32.mrf.mxu0
        %v3201 = vadd.f32 0.0, %v3200
        %3202 = vdwg.mxu0
        %3204 = vrot.lane.b32.xlu0 %v3045, 8
        %v3205 = vpop.permute.xlu0 %3204
        %3208 = vrot.lane.b32.xlu0 %v3123, 16
        %v3209 = vpop.permute.xlu0 %3208
        %3212 = vrot.lane.b32.xlu0 %v3201, 24
        %v3213 = vpop.permute.xlu0 %3212
        %v3215 = vsel %vm1720, %v2967, %v3205
        %v3216 = vsel %vm2042, %v3215, %v3209
        %v3217 = vsel %vm2044, %v3216, %v3213
        %v3218 = vperm.slane %v1671, 4
        %3219 = vrot.lane.b32.xlu0 %v1660, 32
        %v3220 = vpop.permute.xlu0 %3219
        %3221 = vrot.lane.b32.xlu0 %v1663, 32
        %v3222 = vpop.permute.xlu0 %3221
        %3223 = vrot.lane.b32.xlu0 %v1666, 32
        %v3224 = vpop.permute.xlu0 %3223
        %3225 = vrot.lane.b32.xlu0 %v1669, 32
        %v3226 = vpop.permute.xlu0 %3225
        %v3232 = vsel %vm1686, %v2887, 0
        %v3235 = vsel %vm1686, %v3217, 0
        %3237 = vmatpush.msra.mxu0 0.0
        %3238 = vmatpush.msra.mxu0 0.0
        %3239 = vmatpush.msra.mxu0 0.0
        %3240 = vmatpush.msra.mxu0 0.0
        %3241 = vmatpush.msra.mxu0 0.0
        %3242 = vmatpush.msra.mxu0 0.0
        %3243 = vmatpush.msra.mxu0 0.0
        %3244 = vmatpush.msra.mxu0 0.0
        %3245 = vmatpush.msra.mxu0 0.0
        %3246 = vmatpush.msra.mxu0 0.0
        %3247 = vmatpush.msra.mxu0 0.0
        %3248 = vmatpush.msra.mxu0 0.0
        %3249 = vmatpush.msra.mxu0 %v3226
        %3250 = vmatpush.msra.mxu0 %v3224
        %3251 = vmatpush.msra.mxu0 %v3222
        %3252 = vmatpush.msra.mxu0 %v3220
        %3253 = vmatmul.f32.gmra.mxu0 %v3232
        %v3254 = vpop.f32.mrf.mxu0
        %v3255 = vadd.f32 %v3218, %v3254
        %3256 = vmatmul.f32.gmra.mxu0 %v3235
        %v3257 = vpop.f32.mrf.mxu0
        %v3258 = vadd.f32 %v3218, %v3257
        %3259 = vdwg.mxu0
        %v3260 = vadd.f32 %v2481, %v3255
        %v3261 = vadd.f32 %v2482, %v3258
        %v3262 = vsel %vm1686, %v3260, 0.0
        %3263 = vadd.xlane.f32.xlu0 %v3262
        %v3264 = vpop.xlane.xlu0 %3263
        %v3265 = vsel %vm1686, %v3261, 0.0
        %3266 = vadd.xlane.f32.xlu0 %v3265
        %v3267 = vpop.xlane.xlu0 %3266
        %v3268 = vmul.f32 %v3264, %v2434
        %v3269 = vmul.f32 %v3267, %v2434
        %v3270 = vmul.f32 %v3260, %v3260
        %v3271 = vmul.f32 %v3261, %v3261
        %v3272 = vsel %vm1686, %v3270, 0.0
        %3273 = vadd.xlane.f32.xlu0 %v3272
        %v3274 = vpop.xlane.xlu0 %3273
        %v3275 = vsel %vm1686, %v3271, 0.0
        %3276 = vadd.xlane.f32.xlu0 %v3275
        %v3277 = vpop.xlane.xlu0 %3276
        %v3278 = vmul.f32 %v3274, %v2434
        %v3279 = vmul.f32 %v3277, %v2434
        %v3280 = vmul.f32 %v3268, %v3268
        %v3281 = vmul.f32 %v3269, %v3269
        %v3282 = vsub.f32 %v3278, %v3280
        %v3283 = vsub.f32 %v3279, %v3281
        %v3284 = vsub.f32 %v3260, %v3268
        %v3285 = vsub.f32 %v3261, %v3269
        %v3286 = vadd.f32 %v3282, 1e-05
        %v3287 = vadd.f32 %v3283, 1e-05
        %v3288 = vrsqrt.pop %v3286
        %v3289 = vmul.f32 %v3288, %v3286
        %v3290 = vmul.f32 %v3289, %v3288
        %v3291 = vmul.f32 0.5, %v3290
        %v3292 = vsub.f32 1.5, %v3291
        %v3293 = vmul.f32 %v3288, %v3292
        %vm3294 = vweird.f32 %v3286
        %vm3295 = vweird.f32 %v3288
        %vm3296 = vmor %vm3294, %vm3295
        %v3297 = vsel %vm3296, %v3288, %v3293
        %v3298 = vrsqrt.pop %v3287
        %v3299 = vmul.f32 %v3298, %v3287
        %v3300 = vmul.f32 %v3299, %v3298
        %v3301 = vmul.f32 0.5, %v3300
        %v3302 = vsub.f32 1.5, %v3301
        %v3303 = vmul.f32 %v3298, %v3302
        %vm3304 = vweird.f32 %v3287
        %vm3305 = vweird.f32 %v3298
        %vm3306 = vmor %vm3304, %vm3305
        %v3307 = vsel %vm3306, %v3298, %v3303
        %v3308 = vmul.f32 %v3284, %v3297
        %v3309 = vmul.f32 %v3285, %v3307
        %v3310 = vperm.slane %v1672, 1
        %v3311 = vmul.f32 %v3308, %v3310
        %v3312 = vmul.f32 %v3309, %v3310
        %v3313 = vperm.slane %v1672, 2
        %v3314 = vadd.f32 %v3311, %v3313
        %v3315 = vadd.f32 %v3312, %v3313
        %v3316 = vperm.slane %v1671, 5
        %v3318 = vsel %vm1686, %v3314, 0
        %v3321 = vsel %vm1686, %v3315, 0
        %3323 = vmatpush.msra.mxu0 0.0
        %3324 = vmatpush.msra.mxu0 0.0
        %3325 = vmatpush.msra.mxu0 0.0
        %3326 = vmatpush.msra.mxu0 0.0
        %3327 = vmatpush.msra.mxu0 0.0
        %3328 = vmatpush.msra.mxu0 0.0
        %3329 = vmatpush.msra.mxu0 0.0
        %3330 = vmatpush.msra.mxu0 0.0
        %3331 = vmatpush.msra.mxu0 0.0
        %3332 = vmatpush.msra.mxu0 0.0
        %3333 = vmatpush.msra.mxu0 0.0
        %3334 = vmatpush.msra.mxu0 0.0
        %3335 = vmatpush.msra.mxu0 %v1670
        %3336 = vmatpush.msra.mxu0 %v1667
        %3337 = vmatpush.msra.mxu0 %v1664
        %3338 = vmatpush.msra.mxu0 %v1661
        %3339 = vmatmul.f32.gmra.mxu0 %v3318
        %v3340 = vpop.f32.mrf.mxu0
        %v3341 = vadd.f32 %v3316, %v3340
        %3342 = vmatmul.f32.gmra.mxu0 %v3321
        %v3343 = vpop.f32.mrf.mxu0
        %v3344 = vadd.f32 %v3316, %v3343
        %3345 = vdwg.mxu0
        %v3346 = vmax.f32 %v3341, 0.0
        %v3347 = vmax.f32 %v3344, 0.0
        %v3348 = vperm.slane %v1671, 6
        %vm3349 = vcmask 523264
        %v3351 = vsel %vm3349, %v3346, 0
        %v3354 = vsel %vm3349, %v3347, 0
        %3356 = vmatpush.msra.mxu0 0.0
        %3357 = vmatpush.msra.mxu0 0.0
        %3358 = vmatpush.msra.mxu0 0.0
        %3359 = vmatpush.msra.mxu0 0.0
        %3360 = vmatpush.msra.mxu0 0.0
        %3361 = vmatpush.msra.mxu0 0.0
        %3362 = vmatpush.msra.mxu0 0.0
        %3363 = vmatpush.msra.mxu0 0.0
        %3364 = vmatpush.msra.mxu0 %v1680
        %3365 = vmatpush.msra.mxu0 %v1679
        %3366 = vmatpush.msra.mxu0 %v1678
        %3367 = vmatpush.msra.mxu0 %v1677
        %3368 = vmatpush.msra.mxu0 %v1676
        %3369 = vmatpush.msra.mxu0 %v1675
        %3370 = vmatpush.msra.mxu0 %v1674
        %3371 = vmatpush.msra.mxu0 %v1673
        %3372 = vmatmul.f32.gmra.mxu0 %v3351
        %v3373 = vpop.f32.mrf.mxu0
        %v3374 = vadd.f32 %v3348, %v3373
        %3375 = vmatmul.f32.gmra.mxu0 %v3354
        %v3376 = vpop.f32.mrf.mxu0
        %v3377 = vadd.f32 %v3348, %v3376
        %3378 = vdwg.mxu0
        %v3379 = vadd.f32 %v3314, %v3374
        %v3380 = vadd.f32 %v3315, %v3377
        %v3381 = vsel %vm1686, %v3379, 0.0
        %3382 = vadd.xlane.f32.xlu0 %v3381
        %v3383 = vpop.xlane.xlu0 %3382
        %v3384 = vsel %vm1686, %v3380, 0.0
        %3385 = vadd.xlane.f32.xlu0 %v3384
        %v3386 = vpop.xlane.xlu0 %3385
        %v3387 = vmul.f32 %v3383, %v2434
        %v3388 = vmul.f32 %v3386, %v2434
        %v3389 = vmul.f32 %v3379, %v3379
        %v3390 = vmul.f32 %v3380, %v3380
        %v3391 = vsel %vm1686, %v3389, 0.0
        %3392 = vadd.xlane.f32.xlu0 %v3391
        %v3393 = vpop.xlane.xlu0 %3392
        %v3394 = vsel %vm1686, %v3390, 0.0
        %3395 = vadd.xlane.f32.xlu0 %v3394
        %v3396 = vpop.xlane.xlu0 %3395
        %v3397 = vmul.f32 %v3393, %v2434
        %v3398 = vmul.f32 %v3396, %v2434
        %v3399 = vmul.f32 %v3387, %v3387
        %v3400 = vmul.f32 %v3388, %v3388
        %v3401 = vsub.f32 %v3397, %v3399
        %v3402 = vsub.f32 %v3398, %v3400
        %v3403 = vsub.f32 %v3379, %v3387
        %v3404 = vsub.f32 %v3380, %v3388
        %v3405 = vadd.f32 %v3401, 1e-05
        %v3406 = vadd.f32 %v3402, 1e-05
        %v3407 = vrsqrt.pop %v3405
        %v3408 = vmul.f32 %v3407, %v3405
        %v3409 = vmul.f32 %v3408, %v3407
        %v3410 = vmul.f32 0.5, %v3409
        %v3411 = vsub.f32 1.5, %v3410
        %v3412 = vmul.f32 %v3407, %v3411
        %vm3413 = vweird.f32 %v3405
        %vm3414 = vweird.f32 %v3407
        %vm3415 = vmor %vm3413, %vm3414
        %v3416 = vsel %vm3415, %v3407, %v3412
        %v3417 = vrsqrt.pop %v3406
        %v3418 = vmul.f32 %v3417, %v3406
        %v3419 = vmul.f32 %v3418, %v3417
        %v3420 = vmul.f32 0.5, %v3419
        %v3421 = vsub.f32 1.5, %v3420
        %v3422 = vmul.f32 %v3417, %v3421
        %vm3423 = vweird.f32 %v3406
        %vm3424 = vweird.f32 %v3417
        %vm3425 = vmor %vm3423, %vm3424
        %v3426 = vsel %vm3425, %v3417, %v3422
        %v3427 = vmul.f32 %v3403, %v3416
        %v3428 = vmul.f32 %v3404, %v3426
        %v3429 = vperm.slane %v1672, 3
        %v3430 = vmul.f32 %v3427, %v3429
        %v3431 = vmul.f32 %v3428, %v3429
        %v3432 = vperm.slane %v1672, 4
        %v3433 = vadd.f32 %v3430, %v3432
        %v3434 = vadd.f32 %v3431, %v3432
        %3435 = vst.msk [vmem:[#allocation3] sm:$0xff] %vm1686, %v3433
        %3436 = vst.msk [vmem:[#allocation3 + $0x8] sm:$0xff] %vm1686, %v3434
        %p3437 = scmp.eq.s32.totalorder %s24, 3
        // Predicated region
        $region89: #{seq2seq_forward.1} parent=87 // pred_check
          %p3438 = pneg %p3437
        $region90: #{seq2seq_forward.1} parent=87 // pred_check_branch
          %3440 = sbr.rel (%p3438) target = $region92
        $region91: #{seq2seq_forward.1} parent=87 // pred_region
          %v3441 = vld [vmem:[%s5 + $0x2] sm:$0x1]
          %v3442 = vld [vmem:[%s5 + $0x3] sm:$0x1]
          %v3443 = vsel %vm1686, %v3433, 0.0
          %3444 = vadd.xlane.f32.xlu0 %v3443
          %v3445 = vpop.xlane.xlu0 %3444
          %v3446 = vsel %vm1686, %v3434, 0.0
          %3447 = vadd.xlane.f32.xlu0 %v3446
          %v3448 = vpop.xlane.xlu0 %3447
          %v3449 = vmul.f32 %v3445, %v2434
          %v3450 = vmul.f32 %v3448, %v2434
          %v3451 = vmul.f32 %v3433, %v3433
          %v3452 = vmul.f32 %v3434, %v3434
          %v3453 = vsel %vm1686, %v3451, 0.0
          %3454 = vadd.xlane.f32.xlu0 %v3453
          %v3455 = vpop.xlane.xlu0 %3454
          %v3456 = vsel %vm1686, %v3452, 0.0
          %3457 = vadd.xlane.f32.xlu0 %v3456
          %v3458 = vpop.xlane.xlu0 %3457
          %v3459 = vmul.f32 %v3455, %v2434
          %v3460 = vmul.f32 %v3458, %v2434
          %v3461 = vmul.f32 %v3449, %v3449
          %v3462 = vmul.f32 %v3450, %v3450
          %v3463 = vsub.f32 %v3459, %v3461
          %v3464 = vsub.f32 %v3460, %v3462
          %v3465 = vsub.f32 %v3433, %v3449
          %v3466 = vsub.f32 %v3434, %v3450
          %v3467 = vadd.f32 %v3463, 1e-05
          %v3468 = vadd.f32 %v3464, 1e-05
          %v3469 = vrsqrt.pop %v3467
          %v3470 = vmul.f32 %v3469, %v3467
          %v3471 = vmul.f32 %v3470, %v3469
          %v3472 = vmul.f32 0.5, %v3471
          %v3473 = vsub.f32 1.5, %v3472
          %v3474 = vmul.f32 %v3469, %v3473
          %vm3475 = vweird.f32 %v3467
          %vm3476 = vweird.f32 %v3469
          %vm3477 = vmor %vm3475, %vm3476
          %v3478 = vsel %vm3477, %v3469, %v3474
          %v3479 = vrsqrt.pop %v3468
          %v3480 = vmul.f32 %v3479, %v3468
          %v3481 = vmul.f32 %v3480, %v3479
          %v3482 = vmul.f32 0.5, %v3481
          %v3483 = vsub.f32 1.5, %v3482
          %v3484 = vmul.f32 %v3479, %v3483
          %vm3485 = vweird.f32 %v3468
          %vm3486 = vweird.f32 %v3479
          %vm3487 = vmor %vm3485, %vm3486
          %v3488 = vsel %vm3487, %v3479, %v3484
          %v3489 = vmul.f32 %v3465, %v3478
          %v3490 = vmul.f32 %v3466, %v3488
          %v3491 = vperm.slane %v3441, 0
          %v3492 = vmul.f32 %v3489, %v3491
          %v3493 = vmul.f32 %v3490, %v3491
          %v3494 = vperm.slane %v3442, 0
          %v3495 = vadd.f32 %v3492, %v3494
          %v3496 = vadd.f32 %v3493, %v3494
          %v3497 = vld [vmem:[%s6] sm:$0xff]
          %v3498 = vld [vmem:[%s6 + $0x8] sm:$0xff]
          %v3499 = vld [vmem:[%s6 + $0x10] sm:$0xff]
          %v3500 = vld [vmem:[%s6 + $0x18] sm:$0xff]
          %v3501 = vld [vmem:[%s6 + $0x20] sm:$0x1]
          %v3502 = vperm.slane %v3501, 0
          %v3504 = vsel %vm1686, %v3495, 0
          %v3507 = vsel %vm1686, %v3496, 0
          %3509 = vmatpush.msra.mxu0 0.0
          %3510 = vmatpush.msra.mxu0 0.0
          %3511 = vmatpush.msra.mxu0 0.0
          %3512 = vmatpush.msra.mxu0 0.0
          %3513 = vmatpush.msra.mxu0 0.0
          %3514 = vmatpush.msra.mxu0 0.0
          %3515 = vmatpush.msra.mxu0 0.0
          %3516 = vmatpush.msra.mxu0 0.0
          %3517 = vmatpush.msra.mxu0 0.0
          %3518 = vmatpush.msra.mxu0 0.0
          %3519 = vmatpush.msra.mxu0 0.0
          %3520 = vmatpush.msra.mxu0 0.0
          %3521 = vmatpush.msra.mxu0 %v3500
          %3522 = vmatpush.msra.mxu0 %v3499
          %3523 = vmatpush.msra.mxu0 %v3498
          %3524 = vmatpush.msra.mxu0 %v3497
          %3525 = vmatmul.f32.gmra.mxu0 %v3504
          %v3526 = vpop.f32.mrf.mxu0
          %v3527 = vadd.f32 %v3502, %v3526
          %3528 = vmatmul.f32.gmra.mxu0 %v3507
          %v3529 = vpop.f32.mrf.mxu0
          %v3530 = vadd.f32 %v3502, %v3529
          %3531 = vdwg.mxu0
          %3532 = vst [vmem:[%s13] sm:$0xff] %v3527
          %3533 = vst [vmem:[%s13 + $0x8] sm:$0xff] %v3530
        $region92: #{seq2seq_forward.1} parent=87 // pred_fallthru
          _
      $region88: #{seq2seq_forward.1} parent=71 // pred_fallthru
        _
      // Predicated region
      $region93: #{seq2seq_forward.1} parent=71 // pred_check
        %p3534 = pneg %p370
      $region94: #{seq2seq_forward.1} parent=71 // pred_check_branch
        %3536 = sbr.rel (%p3534) target = $region96
      $region95: #{seq2seq_forward.1} parent=71 // pred_region
        _
      $region96: #{seq2seq_forward.1} parent=71 // pred_fallthru
        _
      // Predicated region
      $region97: #{seq2seq_forward.1} parent=71 // pred_check
        %p3537 = pneg %p370
      $region98: #{seq2seq_forward.1} parent=71 // pred_check_branch
        %3539 = sbr.rel (%p3537) target = $region100
      $region99: #{seq2seq_forward.1} parent=71 // pred_region
        _
      $region100: #{seq2seq_forward.1} parent=71 // pred_fallthru
        _
    $region72: #{seq2seq_forward.1} parent=5 // pred_fallthru
      _
    %p3540 = scmp.le.s32.totalorder 2, %s19
    // Predicated region
    $region101: #{seq2seq_forward.1} parent=5 // pred_check
      %p3541 = pneg %p3540
    $region102: #{seq2seq_forward.1} parent=5 // pred_check_branch
      %3543 = sbr.rel (%p3541) target = $region104
    $region103: #{seq2seq_forward.1} parent=5 // pred_region
      %s3544 = ssub.s32 %s19, 2
    $region104: #{seq2seq_forward.1} parent=5 // pred_fallthru
      _
  $region6: #{seq2seq_forward.1} parent=0 // loop_footer
    %s23 = sadd.s32 1, %s19
  $region7: #{seq2seq_forward.1} parent=0 // loop_footer_branch
    %18 = sbr.rel target = $region3
  $region8: #{seq2seq_forward.1} parent=0 // loop_exit
    _

</llo_original>
